<compile_context>
chip_gen: v6e
topology: v6e:2x2x1
jax: 0.10.0
libtpu: 0.0.40
codegen_flags: <defaults>
</compile_context>

<pallas_src>
import functools

import jax
import jax.numpy as jnp
from jax import lax
from jax.experimental import pallas as pl
from jax.experimental.pallas import tpu as pltpu


KSIZE = 3

# (name, query branch index, key/value branch index) -- mirrors the PyTorch forward.
CAB_SPECS = [
    ("topview_up0", 1, 0), ("topview_up1", 2, 0),
    ("topview_up2", 3, 0), ("topview_up3", 4, 0),
    ("topview_down0", 0, 1), ("topview_down1", 0, 2),
    ("topview_down2", 0, 3), ("topview_down3", 0, 4),
    ("cross_conv21", 1, 2), ("cross_conv41", 1, 4),
    ("cross_conv12", 2, 1), ("cross_conv32", 2, 3),
    ("cross_conv23", 3, 2), ("cross_conv43", 3, 4),
    ("cross_conv14", 4, 1), ("cross_conv34", 4, 3),
]
_NAME2IDX = {s[0]: i for i, s in enumerate(CAB_SPECS)}

# Per output branch: (mixing coefficient, names of the CAB outputs mixed in) --
# mirrors the out0..out4 residual sums in the PyTorch forward.
BRANCH_MIX = (
    (0.25, ("topview_down0", "topview_down1", "topview_down2", "topview_down3")),
    (1.0 / 3.0, ("topview_up0", "cross_conv21", "cross_conv41")),
    (1.0 / 3.0, ("topview_up1", "cross_conv12", "cross_conv32")),
    (1.0 / 3.0, ("topview_up2", "cross_conv23", "cross_conv43")),
    (1.0 / 3.0, ("topview_up3", "cross_conv14", "cross_conv34")),
)
N_SLOTS = 5  # 1 "self" conv + up to 4 attention convs (zero-weight filler otherwise)


def _src_indices():
    """(5, N_SLOTS) indices into concat([y0..y4, cab_out0..15]) for stage 3."""
    rows = []
    for g, (_, names) in enumerate(BRANCH_MIX):
        row = [g] + [5 + _NAME2IDX[n] for n in names]
        row += [g] * (N_SLOTS - len(row))          # filler sources (weights are zero)
        rows.append(row)
    return jnp.array(rows, jnp.int32)


# -----------------------------------------------------------------------------
# XLA glue: replicate-padded im2col in channel-major layout.
#   x: (..., C, B, H, W) -> (..., ksize*ksize*C, B, H, W); K order = (ky, kx, ci).
# -----------------------------------------------------------------------------
def im2col_cm(x, ksize):
    pad = ksize // 2
    H, W = x.shape[-2], x.shape[-1]
    pad_width = [(0, 0)] * (x.ndim - 2) + [(pad, pad), (pad, pad)]
    xp = jnp.pad(x, pad_width, mode="edge")
    taps = [xp[..., i:i + H, j:j + W] for i in range(ksize) for j in range(ksize)]
    return jnp.concatenate(taps, axis=-4)


# -----------------------------------------------------------------------------
# Kernel 1: the 5 conv_scale*_0 convs (+ReLU) as one batched matmul, grid=(5,).
#   w: (E, K1), cols: (K1, M) -> out (E, M), M = B*H*W = 128 on lanes (dense vst).
# -----------------------------------------------------------------------------
def _conv0_kernel(cols_ref, w_ref, b_ref, o_ref):
    acc = jnp.dot(w_ref[...], cols_ref[...], preferred_element_type=jnp.float32)
    o_ref[...] = jnp.maximum(acc + b_ref[...], 0.0)


def conv0_batched(cols, w, b):
    """cols: (5, K1, M), w: (5, E, K1), b: (5, E, 1) -> (5, E, M)."""
    G, K1, M = cols.shape
    E = w.shape[1]
    return pl.pallas_call(
        _conv0_kernel,
        grid=(G,),
        in_specs=[
            pl.BlockSpec((None, K1, M), lambda g: (g, 0, 0)),
            pl.BlockSpec((None, E, K1), lambda g: (g, 0, 0)),
            pl.BlockSpec((None, E, 1), lambda g: (g, 0, 0)),
        ],
        out_specs=pl.BlockSpec((None, E, M), lambda g: (g, 0, 0)),
        out_shape=jax.ShapeDtypeStruct((G, E, M), jnp.float32),
        compiler_params=pltpu.CompilerParams(dimension_semantics=("parallel",)),
    )(cols, w, b)


# -----------------------------------------------------------------------------
# Kernel 2: all 16 CrossAttentionBlock attention stages, grid=(16,), batch folded
# into the step.  Scalar-prefetched (q_idx, k_idx) select the query / key branch.
# Fused: Q/K/V proj -> softmax -> out proj (transposed) -> ReLU -> LayerNorm.
# Output is channel-major (E, B*N) = (32, 128): lane-dense store, and it feeds the
# stage-3 channel-major im2col with no XLA transpose.
# -----------------------------------------------------------------------------
def _cross_attn_kernel(q_idx_ref, k_idx_ref, xq_ref, xk_ref,
                       wq_ref, bq_ref, wk_ref, bk_ref, wv_ref, bv_ref,
                       woT_ref, bo_ref, lng_ref, lnb_ref, o_ref, *, batch, seq):
    del q_idx_ref, k_idx_ref                    # consumed by the index_maps
    E = wq_ref.shape[0]

    # channel-major inputs (E, B*N) -> token-major (B*N, E): cheap 32x128 XLU transpose
    xq = jnp.transpose(xq_ref[...])
    xk = jnp.transpose(xk_ref[...])

    # Separate Q/K/V dots (128 MXU rows each); weight slicing avoided entirely.
    q = jnp.dot(xq, wq_ref[...], preferred_element_type=jnp.float32) + bq_ref[...]
    k = jnp.dot(xk, wk_ref[...], preferred_element_type=jnp.float32) + bk_ref[...]
    v = jnp.dot(xk, wv_ref[...], preferred_element_type=jnp.float32) + bv_ref[...]

    scale = 1.0 / (float(E) ** 0.5)             # num_heads = 1 => head_dim = E
    q3 = q.reshape(batch, seq, E) * scale       # sublane-dim split: layout-preserving
    k3 = k.reshape(batch, seq, E)
    v3 = v.reshape(batch, seq, E)

    s = jnp.einsum("bqd,bkd->bqk", q3, k3, preferred_element_type=jnp.float32)
    s = s - jnp.max(s, axis=-1, keepdims=True)
    p = jnp.exp(s)
    p = p * pl.reciprocal(jnp.sum(p, axis=-1, keepdims=True), approx=True)
    o = jnp.einsum("bqk,bkd->bqd", p, v3, preferred_element_type=jnp.float32)
    o_flat = o.reshape(batch * seq, E)

    # Transposed out-projection: (E_out, E_in) x (B*N, E_in)^T -> (E_out, B*N).
    o_T = lax.dot_general(woT_ref[...], o_flat, (((1,), (1,)), ((), ())),
                          preferred_element_type=jnp.float32) + bo_ref[...]

    # CrossAttentionBlock: norm(act(out)), act = ReLU, norm = LayerNorm over E (axis 0).
    o_T = jnp.maximum(o_T, 0.0)
    mean = jnp.mean(o_T, axis=0, keepdims=True)
    var = jnp.mean((o_T - mean) ** 2, axis=0, keepdims=True)
    o_T = (o_T - mean) * lax.rsqrt(var + 1e-5)
    o_ref[...] = o_T * lng_ref[...] + lnb_ref[...]


def cross_attention_batched(ys_T, q_idx, k_idx, p, *, batch, seq):
    """ys_T: (5, E, B*N); q_idx/k_idx: (16,) int32 -> (16, E, B*N)."""
    _, E, M = ys_T.shape
    nblk = q_idx.shape[0]
    act_q = pl.BlockSpec((None, E, M), lambda blk, qi, ki: (qi[blk], 0, 0))
    act_k = pl.BlockSpec((None, E, M), lambda blk, qi, ki: (ki[blk], 0, 0))
    mat = pl.BlockSpec((None, E, E), lambda blk, qi, ki: (blk, 0, 0))
    row = pl.BlockSpec((None, 1, E), lambda blk, qi, ki: (blk, 0, 0))
    col = pl.BlockSpec((None, E, 1), lambda blk, qi, ki: (blk, 0, 0))
    out = pl.BlockSpec((None, E, M), lambda blk, qi, ki: (blk, 0, 0))
    kern = functools.partial(_cross_attn_kernel, batch=batch, seq=seq)
    return pl.pallas_call(
        kern,
        grid_spec=pltpu.PrefetchScalarGridSpec(
            num_scalar_prefetch=2,
            grid=(nblk,),
            in_specs=[act_q, act_k, mat, row, mat, row, mat, row, mat, col, col, col],
            out_specs=out,
        ),
        out_shape=jax.ShapeDtypeStruct((nblk, E, M), jnp.float32),
        compiler_params=pltpu.CompilerParams(dimension_semantics=("parallel",)),
    )(q_idx, k_idx, ys_T, ys_T,
      p["cab_wq"], p["cab_bq"], p["cab_wk"], p["cab_bk"], p["cab_wv"], p["cab_bv"],
      p["cab_woT"], p["cab_bo"], p["cab_lng"], p["cab_lnb"])


# -----------------------------------------------------------------------------
# Kernel 3: the 21 trailing 3x3 convs collapsed into 5 wide-K matmuls, grid=(5,).
#   w: (C, K=1440) with mixing coeffs + gamma pre-folded, cols: (K, M) -> (C, M).
# -----------------------------------------------------------------------------
def _grouped_conv_kernel(cols_ref, w_ref, b_ref, o_ref):
    o_ref[...] = jnp.dot(w_ref[...], cols_ref[...],
                         preferred_element_type=jnp.float32) + b_ref[...]


def grouped_conv_batched(cols, w, b):
    """cols: (5, K, M), w: (5, C, K), b: (5, C, 1) -> (5, C, M)."""
    G, K, M = cols.shape
    C = w.shape[1]
    return pl.pallas_call(
        _grouped_conv_kernel,
        grid=(G,),
        in_specs=[
            pl.BlockSpec((None, K, M), lambda g: (g, 0, 0)),
            pl.BlockSpec((None, C, K), lambda g: (g, 0, 0)),
            pl.BlockSpec((None, C, 1), lambda g: (g, 0, 0)),
        ],
        out_specs=pl.BlockSpec((None, C, M), lambda g: (g, 0, 0)),
        out_shape=jax.ShapeDtypeStruct((G, C, M), jnp.float32),
        compiler_params=pltpu.CompilerParams(dimension_semantics=("parallel",)),
    )(cols, w, b)


# -----------------------------------------------------------------------------
# Parameters (deterministic, synthetic) -- stored pre-stacked / pre-folded so no
# per-call weight shuffling happens at runtime.
# -----------------------------------------------------------------------------
def init_params(key, in_channels, channels, channels_hidden, ksize):
    E = channels_hidden
    C = channels
    K2 = ksize * ksize * E
    nblk = len(CAB_SPECS)
    keys = iter(jax.random.split(key, 512))

    def nrm(shape, scale=0.05):
        return scale * jax.random.normal(next(keys), shape, dtype=jnp.float32)

    def conv_w_T(cout, cin):
        # torch (Cout, Cin, kh, kw) -> (Cout, kh*kw*Cin); K order = (ky, kx, ci)
        w = nrm((cout, cin, ksize, ksize))
        return jnp.transpose(w, (0, 2, 3, 1)).reshape(cout, ksize * ksize * cin)

    p = {}
    # stage 1: conv_scale*_0
    p["conv0_wT"] = jnp.stack([conv_w_T(E, in_channels) for _ in range(5)])  # (5,E,K1)
    p["conv0_b"] = jnp.stack([nrm((E, 1), 0.01) for _ in range(5)])          # (5,E,1)

    # stage 2: per-CAB MultiheadAttention (num_heads=1) + LayerNorm
    p["cab_wq"] = jnp.stack([nrm((E, E)) for _ in range(nblk)])   # (E_in, E_out)
    p["cab_wk"] = jnp.stack([nrm((E, E)) for _ in range(nblk)])
    p["cab_wv"] = jnp.stack([nrm((E, E)) for _ in range(nblk)])
    p["cab_bq"] = jnp.stack([nrm((1, E), 0.01) for _ in range(nblk)])
    p["cab_bk"] = jnp.stack([nrm((1, E), 0.01) for _ in range(nblk)])
    p["cab_bv"] = jnp.stack([nrm((1, E), 0.01) for _ in range(nblk)])
    p["cab_woT"] = jnp.stack([nrm((E, E)) for _ in range(nblk)])  # (E_out, E_in)
    p["cab_bo"] = jnp.stack([nrm((E, 1), 0.01) for _ in range(nblk)])
    p["cab_lng"] = jnp.ones((nblk, E, 1), jnp.float32)
    p["cab_lnb"] = jnp.zeros((nblk, E, 1), jnp.float32)

    # stage 3: conv_scale*_1 + 16 CAB convs; fold 0.25 / (1/3) mix weights and gamma
    # into the per-branch stacked weights AND biases (review correctness note).
    conv1_wT = [conv_w_T(C, E) for _ in range(5)]
    conv1_b = [nrm((C,), 0.01) for _ in range(5)]
    cab_conv_wT = [conv_w_T(C, E) for _ in range(nblk)]
    cab_conv_b = [nrm((C,), 0.01) for _ in range(nblk)]
    # PyTorch inits gamma0..gamma4 = 0 (outputs identically zero); use nonzero
    # deterministic values so the synthetic result is non-trivial.
    gamma = jnp.array([0.1, 0.2, 0.3, 0.4, 0.5], jnp.float32)

    w3, b3 = [], []
    for g, (coef, names) in enumerate(BRANCH_MIX):
        blocks = [conv1_wT[g]]
        bias = conv1_b[g]
        for n in names:
            j = _NAME2IDX[n]
            blocks.append(coef * cab_conv_wT[j])
            bias = bias + coef * cab_conv_b[j]
        while len(blocks) < N_SLOTS:
            blocks.append(jnp.zeros((C, K2), jnp.float32))   # filler slot
        w3.append(gamma[g] * jnp.concatenate(blocks, axis=1))          # (C, N_SLOTS*K2)
        b3.append(gamma[g] * bias)
    p["conv1_wT"] = jnp.stack(w3)                                      # (5, C, 1440)
    p["conv1_b"] = jnp.stack(b3).reshape(5, C, 1)
    return p


# -----------------------------------------------------------------------------
# Forward pass (mirrors NeighboringCrossAttention.forward)
# -----------------------------------------------------------------------------
def neighboring_cross_attention(params, x0, x1, x2, x3, x4):
    xs = jnp.stack([x0, x1, x2, x3, x4])                  # (5, B, Cin, H, W)  NCHW
    xs = jnp.transpose(xs, (0, 2, 1, 3, 4))               # (5, Cin, B, H, W)  channel-major
    _, Cin, B, H, W = xs.shape
    E = params["conv0_wT"].shape[1]
    C = params["conv1_wT"].shape[1]
    HW = H * W
    M = B * HW

    # ---- stage 1: 5x conv_scale*_0 (+ ReLU), one pallas_call, channel-major out ----
    cols1 = im2col_cm(xs, KSIZE).reshape(5, KSIZE * KSIZE * Cin, M)    # (5, 36, M)
    ys_T = conv0_batched(cols1, params["conv0_wT"], params["conv0_b"])  # (5, E, M)

    # ---- stage 2: 16 fused cross-attention blocks, one pallas_call, batch folded ----
    q_idx = jnp.array([s[1] for s in CAB_SPECS], jnp.int32)
    k_idx = jnp.array([s[2] for s in CAB_SPECS], jnp.int32)
    attn_T = cross_attention_batched(ys_T, q_idx, k_idx, params,
                                     batch=B, seq=HW)                  # (16, E, M)

    # ---- stage 3: 21 trailing convs collapsed into 5 wide-K matmuls ----
    acts = jnp.concatenate([ys_T, attn_T], axis=0).reshape(21, E, B, H, W)
    acts_grp = acts[_src_indices()]                                    # (5, 5, E, B, H, W)
    cols2 = im2col_cm(acts_grp, KSIZE).reshape(5, N_SLOTS * KSIZE * KSIZE * E, M)
    z = grouped_conv_batched(cols2, params["conv1_wT"], params["conv1_b"])  # (5, C, M)
    z = jnp.transpose(z.reshape(5, C, B, H, W), (0, 2, 1, 3, 4))       # (5, B, C, H, W)
    return tuple(z[i] for i in range(5))


# -----------------------------------------------------------------------------
if __name__ == "__main__":
    B, in_channels, H, W = 2, 4, 8, 8
    channels = 4
    channels_hidden = 32

    key = jax.random.PRNGKey(0)
    kp, k0, k1, k2, k3, k4 = jax.random.split(key, 6)
    params = init_params(kp, in_channels, channels, channels_hidden, KSIZE)

    mk = lambda k: jax.random.normal(k, (B, in_channels, H, W), dtype=jnp.float32)
    x0, x1, x2, x3, x4 = mk(k0), mk(k1), mk(k2), mk(k3), mk(k4)

    fwd = jax.jit(neighboring_cross_attention)
    outs = jax.block_until_ready(fwd(params, x0, x1, x2, x3, x4))

    expected = (B, channels, H, W)
    assert all(o.shape == expected for o in outs), [o.shape for o in outs]
    assert all(bool(jnp.all(jnp.isfinite(o))) for o in outs)
    print("KERNEL_OK")
</pallas_src>

<mosaic_0001>
module attributes {stable_mosaic.version = 11 : i64} {
  func.func @_conv0_kernel(%arg0: i32, %arg1: memref<1x36x128xf32, #tpu.memory_space<vmem>>, %arg2: memref<1x32x36xf32, #tpu.memory_space<vmem>>, %arg3: memref<1x32x1xf32, #tpu.memory_space<vmem>>, %arg4: memref<1x32x128xf32, #tpu.memory_space<vmem>>) attributes {dimension_semantics = [#tpu.dimension_semantics<parallel>], iteration_bounds = array<i64: 5>, scalar_prefetch = 0 : i64, scratch_operands = 0 : i64, tpu.core_type = #tpu.core_type<tc>, window_params = [{transform_indices = @transform_0, window_bounds = array<i64: 1, 36, 128>}, {transform_indices = @transform_1, window_bounds = array<i64: 1, 32, 36>}, {transform_indices = @transform_2, window_bounds = array<i64: 1, 32, 1>}, {transform_indices = @transform_3, window_bounds = array<i64: 1, 32, 128>}]} {
    %c0 = arith.constant 0 : index
    %c0_0 = arith.constant 0 : index
    %c0_1 = arith.constant 0 : index
    %0 = vector.load %arg2[%c0, %c0_0, %c0_1] : memref<1x32x36xf32, #tpu.memory_space<vmem>>, vector<1x32x36xf32>
    %1 = vector.shape_cast %0 : vector<1x32x36xf32> to vector<32x36xf32>
    %c0_2 = arith.constant 0 : index
    %c0_3 = arith.constant 0 : index
    %c0_4 = arith.constant 0 : index
    %2 = vector.load %arg1[%c0_2, %c0_3, %c0_4] : memref<1x36x128xf32, #tpu.memory_space<vmem>>, vector<1x36x128xf32>
    %3 = vector.shape_cast %2 : vector<1x36x128xf32> to vector<36x128xf32>
    %cst = arith.constant dense<0.000000e+00> : vector<32x128xf32>
    %4 = tpu.matmul %1, %3, %cst {dimension_numbers = #tpu.dot_dimension_numbers<[1], [0], [0], [1], [0, 0, 1, 1], [], []>} : vector<32x36xf32>, vector<36x128xf32>, vector<32x128xf32> -> vector<32x128xf32>
    %c0_5 = arith.constant 0 : index
    %c0_6 = arith.constant 0 : index
    %c0_7 = arith.constant 0 : index
    %5 = vector.load %arg3[%c0_5, %c0_6, %c0_7] : memref<1x32x1xf32, #tpu.memory_space<vmem>>, vector<1x32x1xf32>
    %6 = vector.shape_cast %5 : vector<1x32x1xf32> to vector<32x1xf32>
    %7 = vector.broadcast %6 : vector<32x1xf32> to vector<32x128xf32>
    %8 = arith.addf %4, %7 : vector<32x128xf32>
    %cst_8 = arith.constant 0.000000e+00 : f32
    %9 = vector.broadcast %cst_8 : f32 to vector<32x128xf32>
    %10 = arith.maximumf %8, %9 : vector<32x128xf32>
    %c0_9 = arith.constant 0 : index
    %c0_10 = arith.constant 0 : index
    %c0_11 = arith.constant 0 : index
    %11 = vector.load %arg4[%c0_9, %c0_10, %c0_11] : memref<1x32x128xf32, #tpu.memory_space<vmem>>, vector<1x32x128xf32>
    %12 = vector.shape_cast %11 : vector<1x32x128xf32> to vector<32x128xf32>
    %13 = vector.shape_cast %10 : vector<32x128xf32> to vector<1x32x128xf32>
    tpu.vector_store %arg4[%c0_9, %c0_10, %c0_11], %13 {strides = array<i32>} : memref<1x32x128xf32, #tpu.memory_space<vmem>>, vector<1x32x128xf32>,
    return
  }
  func.func @transform_0(%arg0: i32) -> (i32, i32, i32) {
    %c0_i32 = arith.constant 0 : i32
    %c0_i32_0 = arith.constant 0 : i32
    %c0_i32_1 = arith.constant 0 : i32
    return %arg0, %c0_i32, %c0_i32_0 : i32, i32, i32
  }
  func.func @transform_1(%arg0: i32) -> (i32, i32, i32) {
    %c0_i32 = arith.constant 0 : i32
    %c0_i32_0 = arith.constant 0 : i32
    %c0_i32_1 = arith.constant 0 : i32
    return %arg0, %c0_i32, %c0_i32_0 : i32, i32, i32
  }
  func.func @transform_2(%arg0: i32) -> (i32, i32, i32) {
    %c0_i32 = arith.constant 0 : i32
    %c0_i32_0 = arith.constant 0 : i32
    %c0_i32_1 = arith.constant 0 : i32
    return %arg0, %c0_i32, %c0_i32_0 : i32, i32, i32
  }
  func.func @transform_3(%arg0: i32) -> (i32, i32, i32) {
    %c0_i32 = arith.constant 0 : i32
    %c0_i32_0 = arith.constant 0 : i32
    %c0_i32_1 = arith.constant 0 : i32
    return %arg0, %c0_i32, %c0_i32_0 : i32, i32, i32
  }
}

module attributes {stable_mosaic.version = 11 : i64} {
  func.func @_cross_attn_kernel(%arg0: i32, %arg1: memref<16xi32, #tpu.memory_space<smem>>, %arg2: memref<16xi32, #tpu.memory_space<smem>>, %arg3: memref<1x32x128xf32, #tpu.memory_space<vmem>>, %arg4: memref<1x32x128xf32, #tpu.memory_space<vmem>>, %arg5: memref<1x32x32xf32, #tpu.memory_space<vmem>>, %arg6: memref<1x1x32xf32, #tpu.memory_space<vmem>>, %arg7: memref<1x32x32xf32, #tpu.memory_space<vmem>>, %arg8: memref<1x1x32xf32, #tpu.memory_space<vmem>>, %arg9: memref<1x32x32xf32, #tpu.memory_space<vmem>>, %arg10: memref<1x1x32xf32, #tpu.memory_space<vmem>>, %arg11: memref<1x32x32xf32, #tpu.memory_space<vmem>>, %arg12: memref<1x32x1xf32, #tpu.memory_space<vmem>>, %arg13: memref<1x32x1xf32, #tpu.memory_space<vmem>>, %arg14: memref<1x32x1xf32, #tpu.memory_space<vmem>>, %arg15: memref<1x32x128xf32, #tpu.memory_space<vmem>>) attributes {dimension_semantics = [#tpu.dimension_semantics<parallel>], iteration_bounds = array<i64: 16>, scalar_prefetch = 2 : i64, scratch_operands = 0 : i64, tpu.core_type = #tpu.core_type<tc>, window_params = [{transform_indices = @transform_0, window_bounds = array<i64: 1, 32, 128>}, {transform_indices = @transform_1, window_bounds = array<i64: 1, 32, 128>}, {transform_indices = @transform_2, window_bounds = array<i64: 1, 32, 32>}, {transform_indices = @transform_3, window_bounds = array<i64: 1, 1, 32>}, {transform_indices = @transform_4, window_bounds = array<i64: 1, 32, 32>}, {transform_indices = @transform_5, window_bounds = array<i64: 1, 1, 32>}, {transform_indices = @transform_6, window_bounds = array<i64: 1, 32, 32>}, {transform_indices = @transform_7, window_bounds = array<i64: 1, 1, 32>}, {transform_indices = @transform_8, window_bounds = array<i64: 1, 32, 32>}, {transform_indices = @transform_9, window_bounds = array<i64: 1, 32, 1>}, {transform_indices = @transform_10, window_bounds = array<i64: 1, 32, 1>}, {transform_indices = @transform_11, window_bounds = array<i64: 1, 32, 1>}, {transform_indices = @transform_12, window_bounds = array<i64: 1, 32, 128>}]} {
    %c0 = arith.constant 0 : index
    %c0_0 = arith.constant 0 : index
    %c0_1 = arith.constant 0 : index
    %0 = vector.load %arg3[%c0, %c0_0, %c0_1] : memref<1x32x128xf32, #tpu.memory_space<vmem>>, vector<1x32x128xf32>
    %1 = vector.shape_cast %0 : vector<1x32x128xf32> to vector<32x128xf32>
    %2 = tpu.transpose %1, [1, 0] : vector<32x128xf32> -> vector<128x32xf32>
    %c0_2 = arith.constant 0 : index
    %c0_3 = arith.constant 0 : index
    %c0_4 = arith.constant 0 : index
    %3 = vector.load %arg4[%c0_2, %c0_3, %c0_4] : memref<1x32x128xf32, #tpu.memory_space<vmem>>, vector<1x32x128xf32>
    %4 = vector.shape_cast %3 : vector<1x32x128xf32> to vector<32x128xf32>
    %5 = tpu.transpose %4, [1, 0] : vector<32x128xf32> -> vector<128x32xf32>
    %c0_5 = arith.constant 0 : index
    %c0_6 = arith.constant 0 : index
    %c0_7 = arith.constant 0 : index
    %6 = vector.load %arg5[%c0_5, %c0_6, %c0_7] : memref<1x32x32xf32, #tpu.memory_space<vmem>>, vector<1x32x32xf32>
    %7 = vector.shape_cast %6 : vector<1x32x32xf32> to vector<32x32xf32>
    %cst = arith.constant dense<0.000000e+00> : vector<128x32xf32>
    %8 = tpu.matmul %2, %7, %cst {dimension_numbers = #tpu.dot_dimension_numbers<[1], [0], [0], [1], [0, 0, 1, 1], [], []>} : vector<128x32xf32>, vector<32x32xf32>, vector<128x32xf32> -> vector<128x32xf32>
    %c0_8 = arith.constant 0 : index
    %c0_9 = arith.constant 0 : index
    %c0_10 = arith.constant 0 : index
    %9 = vector.load %arg6[%c0_8, %c0_9, %c0_10] : memref<1x1x32xf32, #tpu.memory_space<vmem>>, vector<1x1x32xf32>
    %10 = vector.shape_cast %9 : vector<1x1x32xf32> to vector<1x32xf32>
    %11 = vector.broadcast %10 : vector<1x32xf32> to vector<128x32xf32>
    %12 = arith.addf %8, %11 : vector<128x32xf32>
    %c0_11 = arith.constant 0 : index
    %c0_12 = arith.constant 0 : index
    %c0_13 = arith.constant 0 : index
    %13 = vector.load %arg7[%c0_11, %c0_12, %c0_13] : memref<1x32x32xf32, #tpu.memory_space<vmem>>, vector<1x32x32xf32>
    %14 = vector.shape_cast %13 : vector<1x32x32xf32> to vector<32x32xf32>
    %cst_14 = arith.constant dense<0.000000e+00> : vector<128x32xf32>
    %15 = tpu.matmul %5, %14, %cst_14 {dimension_numbers = #tpu.dot_dimension_numbers<[1], [0], [0], [1], [0, 0, 1, 1], [], []>} : vector<128x32xf32>, vector<32x32xf32>, vector<128x32xf32> -> vector<128x32xf32>
    %c0_15 = arith.constant 0 : index
    %c0_16 = arith.constant 0 : index
    %c0_17 = arith.constant 0 : index
    %16 = vector.load %arg8[%c0_15, %c0_16, %c0_17] : memref<1x1x32xf32, #tpu.memory_space<vmem>>, vector<1x1x32xf32>
    %17 = vector.shape_cast %16 : vector<1x1x32xf32> to vector<1x32xf32>
    %18 = vector.broadcast %17 : vector<1x32xf32> to vector<128x32xf32>
    %19 = arith.addf %15, %18 : vector<128x32xf32>
    %c0_18 = arith.constant 0 : index
    %c0_19 = arith.constant 0 : index
    %c0_20 = arith.constant 0 : index
    %20 = vector.load %arg9[%c0_18, %c0_19, %c0_20] : memref<1x32x32xf32, #tpu.memory_space<vmem>>, vector<1x32x32xf32>
    %21 = vector.shape_cast %20 : vector<1x32x32xf32> to vector<32x32xf32>
    %cst_21 = arith.constant dense<0.000000e+00> : vector<128x32xf32>
    %22 = tpu.matmul %5, %21, %cst_21 {dimension_numbers = #tpu.dot_dimension_numbers<[1], [0], [0], [1], [0, 0, 1, 1], [], []>} : vector<128x32xf32>, vector<32x32xf32>, vector<128x32xf32> -> vector<128x32xf32>
    %c0_22 = arith.constant 0 : index
    %c0_23 = arith.constant 0 : index
    %c0_24 = arith.constant 0 : index
    %23 = vector.load %arg10[%c0_22, %c0_23, %c0_24] : memref<1x1x32xf32, #tpu.memory_space<vmem>>, vector<1x1x32xf32>
    %24 = vector.shape_cast %23 : vector<1x1x32xf32> to vector<1x32xf32>
    %25 = vector.broadcast %24 : vector<1x32xf32> to vector<128x32xf32>
    %26 = arith.addf %22, %25 : vector<128x32xf32>
    %27 = vector.shape_cast %12 : vector<128x32xf32> to vector<2x64x32xf32>
    %cst_25 = arith.constant 0.176776692 : f32
    %28 = vector.broadcast %cst_25 : f32 to vector<2x64x32xf32>
    %29 = arith.mulf %27, %28 : vector<2x64x32xf32>
    %30 = vector.shape_cast %19 : vector<128x32xf32> to vector<2x64x32xf32>
    %31 = vector.shape_cast %26 : vector<128x32xf32> to vector<2x64x32xf32>
    "tpu.trace_start"() <{level = 10 : i32, message = "bqd,bkd->bqk"}> : () -> ()
    %cst_26 = arith.constant dense<0.000000e+00> : vector<2x64x64xf32>
    %32 = tpu.matmul %29, %30, %cst_26 {dimension_numbers = #tpu.dot_dimension_numbers<[2], [2], [1], [1], [0, 0, 0, 1, 1, 1], [0], [0]>} : vector<2x64x32xf32>, vector<2x64x32xf32>, vector<2x64x64xf32> -> vector<2x64x64xf32>
    "tpu.trace_stop"() : () -> ()
    %cst_27 = arith.constant dense<0xFF800000> : vector<2x64xf32>
    %33 = vector.multi_reduction <maximumf>, %32, %cst_27 [2] : vector<2x64x64xf32> to vector<2x64xf32>
    %34 = vector.shape_cast %33 : vector<2x64xf32> to vector<2x64x1xf32>
    %35 = vector.broadcast %34 : vector<2x64x1xf32> to vector<2x64x64xf32>
    %36 = arith.subf %32, %35 : vector<2x64x64xf32>
    %37 = math.exp %36 : vector<2x64x64xf32>
    %cst_28 = arith.constant dense<0.000000e+00> : vector<2x64xf32>
    %38 = vector.multi_reduction <add>, %37, %cst_28 [2] : vector<2x64x64xf32> to vector<2x64xf32>
    %39 = vector.shape_cast %38 : vector<2x64xf32> to vector<2x64x1xf32>
    %40 = tpu.reciprocal %39 {approx = true} : vector<2x64x1xf32> -> vector<2x64x1xf32>
    %41 = vector.broadcast %40 : vector<2x64x1xf32> to vector<2x64x64xf32>
    %42 = arith.mulf %37, %41 : vector<2x64x64xf32>
    "tpu.trace_start"() <{level = 10 : i32, message = "bqk,bkd->bqd"}> : () -> ()
    %cst_29 = arith.constant dense<0.000000e+00> : vector<2x64x32xf32>
    %43 = tpu.matmul %42, %31, %cst_29 {dimension_numbers = #tpu.dot_dimension_numbers<[2], [1], [1], [2], [0, 0, 0, 1, 1, 2], [0], [0]>} : vector<2x64x64xf32>, vector<2x64x32xf32>, vector<2x64x32xf32> -> vector<2x64x32xf32>
    "tpu.trace_stop"() : () -> ()
    %44 = vector.shape_cast %43 : vector<2x64x32xf32> to vector<128x32xf32>
    %c0_30 = arith.constant 0 : index
    %c0_31 = arith.constant 0 : index
    %c0_32 = arith.constant 0 : index
    %45 = vector.load %arg11[%c0_30, %c0_31, %c0_32] : memref<1x32x32xf32, #tpu.memory_space<vmem>>, vector<1x32x32xf32>
    %46 = vector.shape_cast %45 : vector<1x32x32xf32> to vector<32x32xf32>
    %cst_33 = arith.constant dense<0.000000e+00> : vector<32x128xf32>
    %47 = tpu.matmul %46, %44, %cst_33 {dimension_numbers = #tpu.dot_dimension_numbers<[1], [1], [0], [0], [0, 0, 1, 0], [], []>} : vector<32x32xf32>, vector<128x32xf32>, vector<32x128xf32> -> vector<32x128xf32>
    %c0_34 = arith.constant 0 : index
    %c0_35 = arith.constant 0 : index
    %c0_36 = arith.constant 0 : index
    %48 = vector.load %arg12[%c0_34, %c0_35, %c0_36] : memref<1x32x1xf32, #tpu.memory_space<vmem>>, vector<1x32x1xf32>
    %49 = vector.shape_cast %48 : vector<1x32x1xf32> to vector<32x1xf32>
    %50 = vector.broadcast %49 : vector<32x1xf32> to vector<32x128xf32>
    %51 = arith.addf %47, %50 : vector<32x128xf32>
    %cst_37 = arith.constant 0.000000e+00 : f32
    %52 = vector.broadcast %cst_37 : f32 to vector<32x128xf32>
    %53 = arith.maximumf %51, %52 : vector<32x128xf32>
    %cst_38 = arith.constant dense<0.000000e+00> : vector<128xf32>
    %54 = vector.multi_reduction <add>, %53, %cst_38 [0] : vector<32x128xf32> to vector<128xf32>
    %55 = vector.shape_cast %54 : vector<128xf32> to vector<1x128xf32>
    %cst_39 = arith.constant 3.200000e+01 : f32
    %56 = vector.broadcast %cst_39 : f32 to vector<1x128xf32>
    %57 = arith.divf %55, %56 : vector<1x128xf32>
    %58 = vector.broadcast %57 : vector<1x128xf32> to vector<32x128xf32>
    %59 = arith.subf %53, %58 : vector<32x128xf32>
    %60 = arith.mulf %59, %59 : vector<32x128xf32>
    %cst_40 = arith.constant dense<0.000000e+00> : vector<128xf32>
    %61 = vector.multi_reduction <add>, %60, %cst_40 [0] : vector<32x128xf32> to vector<128xf32>
    %62 = vector.shape_cast %61 : vector<128xf32> to vector<1x128xf32>
    %cst_41 = arith.constant 3.200000e+01 : f32
    %63 = vector.broadcast %cst_41 : f32 to vector<1x128xf32>
    %64 = arith.divf %62, %63 : vector<1x128xf32>
    %65 = vector.broadcast %57 : vector<1x128xf32> to vector<32x128xf32>
    %66 = arith.subf %53, %65 : vector<32x128xf32>
    %cst_42 = arith.constant 9.99999974E-6 : f32
    %67 = vector.broadcast %cst_42 : f32 to vector<1x128xf32>
    %68 = arith.addf %64, %67 : vector<1x128xf32>
    %69 = math.rsqrt %68 : vector<1x128xf32>
    %70 = vector.broadcast %69 : vector<1x128xf32> to vector<32x128xf32>
    %71 = arith.mulf %66, %70 : vector<32x128xf32>
    %c0_43 = arith.constant 0 : index
    %c0_44 = arith.constant 0 : index
    %c0_45 = arith.constant 0 : index
    %72 = vector.load %arg13[%c0_43, %c0_44, %c0_45] : memref<1x32x1xf32, #tpu.memory_space<vmem>>, vector<1x32x1xf32>
    %73 = vector.shape_cast %72 : vector<1x32x1xf32> to vector<32x1xf32>
    %74 = vector.broadcast %73 : vector<32x1xf32> to vector<32x128xf32>
    %75 = arith.mulf %71, %74 : vector<32x128xf32>
    %c0_46 = arith.constant 0 : index
    %c0_47 = arith.constant 0 : index
    %c0_48 = arith.constant 0 : index
    %76 = vector.load %arg14[%c0_46, %c0_47, %c0_48] : memref<1x32x1xf32, #tpu.memory_space<vmem>>, vector<1x32x1xf32>
    %77 = vector.shape_cast %76 : vector<1x32x1xf32> to vector<32x1xf32>
    %78 = vector.broadcast %77 : vector<32x1xf32> to vector<32x128xf32>
    %79 = arith.addf %75, %78 : vector<32x128xf32>
    %c0_49 = arith.constant 0 : index
    %c0_50 = arith.constant 0 : index
    %c0_51 = arith.constant 0 : index
    %80 = vector.load %arg15[%c0_49, %c0_50, %c0_51] : memref<1x32x128xf32, #tpu.memory_space<vmem>>, vector<1x32x128xf32>
    %81 = vector.shape_cast %80 : vector<1x32x128xf32> to vector<32x128xf32>
    %82 = vector.shape_cast %79 : vector<32x128xf32> to vector<1x32x128xf32>
    tpu.vector_store %arg15[%c0_49, %c0_50, %c0_51], %82 {strides = array<i32>} : memref<1x32x128xf32, #tpu.memory_space<vmem>>, vector<1x32x128xf32>,
    return
  }
  func.func @transform_0(%arg0: i32, %arg1: memref<16xi32, #tpu.memory_space<smem>>, %arg2: memref<16xi32, #tpu.memory_space<smem>>) -> (i32, i32, i32) {
    %0 = arith.index_cast %arg0 : i32 to index
    %1 = memref.load %arg1[%0] : memref<16xi32, #tpu.memory_space<smem>>
    %c0_i32 = arith.constant 0 : i32
    %c0_i32_0 = arith.constant 0 : i32
    %c0_i32_1 = arith.constant 0 : i32
    return %1, %c0_i32, %c0_i32_0 : i32, i32, i32
  }
  func.func @transform_1(%arg0: i32, %arg1: memref<16xi32, #tpu.memory_space<smem>>, %arg2: memref<16xi32, #tpu.memory_space<smem>>) -> (i32, i32, i32) {
    %0 = arith.index_cast %arg0 : i32 to index
    %1 = memref.load %arg2[%0] : memref<16xi32, #tpu.memory_space<smem>>
    %c0_i32 = arith.constant 0 : i32
    %c0_i32_0 = arith.constant 0 : i32
    %c0_i32_1 = arith.constant 0 : i32
    return %1, %c0_i32, %c0_i32_0 : i32, i32, i32
  }
  func.func @transform_2(%arg0: i32, %arg1: memref<16xi32, #tpu.memory_space<smem>>, %arg2: memref<16xi32, #tpu.memory_space<smem>>) -> (i32, i32, i32) {
    %c0_i32 = arith.constant 0 : i32
    %c0_i32_0 = arith.constant 0 : i32
    %c0_i32_1 = arith.constant 0 : i32
    return %arg0, %c0_i32, %c0_i32_0 : i32, i32, i32
  }
  func.func @transform_3(%arg0: i32, %arg1: memref<16xi32, #tpu.memory_space<smem>>, %arg2: memref<16xi32, #tpu.memory_space<smem>>) -> (i32, i32, i32) {
    %c0_i32 = arith.constant 0 : i32
    %c0_i32_0 = arith.constant 0 : i32
    %c0_i32_1 = arith.constant 0 : i32
    return %arg0, %c0_i32, %c0_i32_0 : i32, i32, i32
  }
  func.func @transform_4(%arg0: i32, %arg1: memref<16xi32, #tpu.memory_space<smem>>, %arg2: memref<16xi32, #tpu.memory_space<smem>>) -> (i32, i32, i32) {
    %c0_i32 = arith.constant 0 : i32
    %c0_i32_0 = arith.constant 0 : i32
    %c0_i32_1 = arith.constant 0 : i32
    return %arg0, %c0_i32, %c0_i32_0 : i32, i32, i32
  }
  func.func @transform_5(%arg0: i32, %arg1: memref<16xi32, #tpu.memory_space<smem>>, %arg2: memref<16xi32, #tpu.memory_space<smem>>) -> (i32, i32, i32) {
    %c0_i32 = arith.constant 0 : i32
    %c0_i32_0 = arith.constant 0 : i32
    %c0_i32_1 = arith.constant 0 : i32
    return %arg0, %c0_i32, %c0_i32_0 : i32, i32, i32
  }
  func.func @transform_6(%arg0: i32, %arg1: memref<16xi32, #tpu.memory_space<smem>>, %arg2: memref<16xi32, #tpu.memory_space<smem>>) -> (i32, i32, i32) {
    %c0_i32 = arith.constant 0 : i32
    %c0_i32_0 = arith.constant 0 : i32
    %c0_i32_1 = arith.constant 0 : i32
    return %arg0, %c0_i32, %c0_i32_0 : i32, i32, i32
  }
  func.func @transform_7(%arg0: i32, %arg1: memref<16xi32, #tpu.memory_space<smem>>, %arg2: memref<16xi32, #tpu.memory_space<smem>>) -> (i32, i32, i32) {
    %c0_i32 = arith.constant 0 : i32
    %c0_i32_0 = arith.constant 0 : i32
    %c0_i32_1 = arith.constant 0 : i32
    return %arg0, %c0_i32, %c0_i32_0 : i32, i32, i32
  }
  func.func @transform_8(%arg0: i32, %arg1: memref<16xi32, #tpu.memory_space<smem>>, %arg2: memref<16xi32, #tpu.memory_space<smem>>) -> (i32, i32, i32) {
    %c0_i32 = arith.constant 0 : i32
    %c0_i32_0 = arith.constant 0 : i32
    %c0_i32_1 = arith.constant 0 : i32
    return %arg0, %c0_i32, %c0_i32_0 : i32, i32, i32
  }
  func.func @transform_9(%arg0: i32, %arg1: memref<16xi32, #tpu.memory_space<smem>>, %arg2: memref<16xi32, #tpu.memory_space<smem>>) -> (i32, i32, i32) {
    %c0_i32 = arith.constant 0 : i32
    %c0_i32_0 = arith.constant 0 : i32
    %c0_i32_1 = arith.constant 0 : i32
    return %arg0, %c0_i32, %c0_i32_0 : i32, i32, i32
  }
  func.func @transform_10(%arg0: i32, %arg1: memref<16xi32, #tpu.memory_space<smem>>, %arg2: memref<16xi32, #tpu.memory_space<smem>>) -> (i32, i32, i32) {
    %c0_i32 = arith.constant 0 : i32
    %c0_i32_0 = arith.constant 0 : i32
    %c0_i32_1 = arith.constant 0 : i32
    return %arg0, %c0_i32, %c0_i32_0 : i32, i32, i32
  }
  func.func @transform_11(%arg0: i32, %arg1: memref<16xi32, #tpu.memory_space<smem>>, %arg2: memref<16xi32, #tpu.memory_space<smem>>) -> (i32, i32, i32) {
    %c0_i32 = arith.constant 0 : i32
    %c0_i32_0 = arith.constant 0 : i32
    %c0_i32_1 = arith.constant 0 : i32
    return %arg0, %c0_i32, %c0_i32_0 : i32, i32, i32
  }
  func.func @transform_12(%arg0: i32, %arg1: memref<16xi32, #tpu.memory_space<smem>>, %arg2: memref<16xi32, #tpu.memory_space<smem>>) -> (i32, i32, i32) {
    %c0_i32 = arith.constant 0 : i32
    %c0_i32_0 = arith.constant 0 : i32
    %c0_i32_1 = arith.constant 0 : i32
    return %arg0, %c0_i32, %c0_i32_0 : i32, i32, i32
  }
}

module attributes {stable_mosaic.version = 11 : i64} {
  func.func @_grouped_conv_kernel(%arg0: i32, %arg1: memref<1x1440x128xf32, #tpu.memory_space<vmem>>, %arg2: memref<1x4x1440xf32, #tpu.memory_space<vmem>>, %arg3: memref<1x4x1xf32, #tpu.memory_space<vmem>>, %arg4: memref<1x4x128xf32, #tpu.memory_space<vmem>>) attributes {dimension_semantics = [#tpu.dimension_semantics<parallel>], iteration_bounds = array<i64: 5>, scalar_prefetch = 0 : i64, scratch_operands = 0 : i64, tpu.core_type = #tpu.core_type<tc>, window_params = [{transform_indices = @transform_0, window_bounds = array<i64: 1, 1440, 128>}, {transform_indices = @transform_1, window_bounds = array<i64: 1, 4, 1440>}, {transform_indices = @transform_2, window_bounds = array<i64: 1, 4, 1>}, {transform_indices = @transform_3, window_bounds = array<i64: 1, 4, 128>}]} {
    %c0 = arith.constant 0 : index
    %c0_0 = arith.constant 0 : index
    %c0_1 = arith.constant 0 : index
    %0 = vector.load %arg2[%c0, %c0_0, %c0_1] : memref<1x4x1440xf32, #tpu.memory_space<vmem>>, vector<1x4x1440xf32>
    %1 = vector.shape_cast %0 : vector<1x4x1440xf32> to vector<4x1440xf32>
    %c0_2 = arith.constant 0 : index
    %c0_3 = arith.constant 0 : index
    %c0_4 = arith.constant 0 : index
    %2 = vector.load %arg1[%c0_2, %c0_3, %c0_4] : memref<1x1440x128xf32, #tpu.memory_space<vmem>>, vector<1x1440x128xf32>
    %3 = vector.shape_cast %2 : vector<1x1440x128xf32> to vector<1440x128xf32>
    %cst = arith.constant dense<0.000000e+00> : vector<4x128xf32>
    %4 = tpu.matmul %1, %3, %cst {dimension_numbers = #tpu.dot_dimension_numbers<[1], [0], [0], [1], [0, 0, 1, 1], [], []>} : vector<4x1440xf32>, vector<1440x128xf32>, vector<4x128xf32> -> vector<4x128xf32>
    %c0_5 = arith.constant 0 : index
    %c0_6 = arith.constant 0 : index
    %c0_7 = arith.constant 0 : index
    %5 = vector.load %arg3[%c0_5, %c0_6, %c0_7] : memref<1x4x1xf32, #tpu.memory_space<vmem>>, vector<1x4x1xf32>
    %6 = vector.shape_cast %5 : vector<1x4x1xf32> to vector<4x1xf32>
    %7 = vector.broadcast %6 : vector<4x1xf32> to vector<4x128xf32>
    %8 = arith.addf %4, %7 : vector<4x128xf32>
    %c0_8 = arith.constant 0 : index
    %c0_9 = arith.constant 0 : index
    %c0_10 = arith.constant 0 : index
    %9 = vector.load %arg4[%c0_8, %c0_9, %c0_10] : memref<1x4x128xf32, #tpu.memory_space<vmem>>, vector<1x4x128xf32>
    %10 = vector.shape_cast %9 : vector<1x4x128xf32> to vector<4x128xf32>
    %11 = vector.shape_cast %8 : vector<4x128xf32> to vector<1x4x128xf32>
    tpu.vector_store %arg4[%c0_8, %c0_9, %c0_10], %11 {strides = array<i32>} : memref<1x4x128xf32, #tpu.memory_space<vmem>>, vector<1x4x128xf32>,
    return
  }
  func.func @transform_0(%arg0: i32) -> (i32, i32, i32) {
    %c0_i32 = arith.constant 0 : i32
    %c0_i32_0 = arith.constant 0 : i32
    %c0_i32_1 = arith.constant 0 : i32
    return %arg0, %c0_i32, %c0_i32_0 : i32, i32, i32
  }
  func.func @transform_1(%arg0: i32) -> (i32, i32, i32) {
    %c0_i32 = arith.constant 0 : i32
    %c0_i32_0 = arith.constant 0 : i32
    %c0_i32_1 = arith.constant 0 : i32
    return %arg0, %c0_i32, %c0_i32_0 : i32, i32, i32
  }
  func.func @transform_2(%arg0: i32) -> (i32, i32, i32) {
    %c0_i32 = arith.constant 0 : i32
    %c0_i32_0 = arith.constant 0 : i32
    %c0_i32_1 = arith.constant 0 : i32
    return %arg0, %c0_i32, %c0_i32_0 : i32, i32, i32
  }
  func.func @transform_3(%arg0: i32) -> (i32, i32, i32) {
    %c0_i32 = arith.constant 0 : i32
    %c0_i32_0 = arith.constant 0 : i32
    %c0_i32_1 = arith.constant 0 : i32
    return %arg0, %c0_i32, %c0_i32_0 : i32, i32, i32
  }
}

</mosaic_0001>

<llo_original>
// kernel: neighboring_cross_attention.3
$region0: #{neighboring_cross_attention.3}
  #allocation0 [shape = 'u32[]', space=smem, size = 0x4, offset = 0x4, fixed_abs, tag = 'smem constant byte address 0x4 - core index']
  #allocation1 [shape = 'u32[144,128]{1,0:T(1,128)}', space=vmem, size = 0x12000, scoped, tag = 'internal scratch']
  %s0 = inlined_call_operand.vmem [shape: f32[5,36,128], index: 0, kind: input, shape index: {}]
  %s1 = inlined_call_operand.vmem [shape: f32[5,32,36], index: 1, kind: input, shape index: {}]
  %s2 = inlined_call_operand.vmem [shape: f32[5,32,1], index: 2, kind: input, shape index: {}]
  %s3 = inlined_call_operand.vmem [shape: f32[5,32,128], index: 3, kind: output, shape index: {}]
  %s4 = sld [smem:[#allocation0]]
  $region45: #{neighboring_cross_attention.3} parent=0
    _
  %s6 = ssub.s32 1, %s4
  %s7 = scalar_select 0, %s6, %s4
  loop: start=0, step=1, limit=7
  $region2: #{neighboring_cross_attention.3} parent=0 // loop_pre_header
    _
  $region3: #{neighboring_cross_attention.3} parent=0 // loop_header
    %s9 = sphi 0, %s13
    %p10 = scmp.ge.s32.totalorder %s9, 7
    %s19 = sphi 0, %s21
    %s22 = sphi 0, %s19
    %s23 = sphi 0, %s22
    %s39 = sphi 0, %s23
    %s45 = sphi 0, %s47
    %s48 = sphi 0, %s45
    %s49 = sphi 0, %s48
    %s65 = sphi 0, %s49
    %s71 = sphi 0, %s73
    %s74 = sphi 0, %s71
    %s75 = sphi 0, %s74
    %s91 = sphi 0, %s75
    %s97 = sphi 0, %s99
    %s100 = sphi 0, %s97
    %s101 = sphi 0, %s100
    %s117 = sphi 0, %s101
  $region4: #{neighboring_cross_attention.3} parent=0 // loop_header_branch
    %12 = sbr.rel (%p10) target = $region8
  $region5: #{neighboring_cross_attention.3} parent=0 // loop_body
    %s14 = ssub.s32 %s9, 1
    %s15 = ssub.s32 %s9, 2
    %s16 = sadd.s32 %s9, 1
    %s17 = ssub.s32 %s9, %s16
    %p18 = scmp.eq.s32.totalorder %s17, 0
    %s20 = sadd.s32 %s19, 1
    %s21 = scalar_select %p18, %s19, %s20
    %p24 = pneg %p18
    %p25 = scmp.eq.s32.totalorder %s9, 4
    %p26 = por %p24, %p25
    %p27 = scmp.ne.s32.totalorder %s19, %s22
    %p28 = scmp.eq.s32.totalorder %s9, 0
    %p29 = por %p27, %p28
    %p30 = scmp.ne.s32.totalorder %s19, %s22
    %p31 = scmp.eq.s32.totalorder %s14, 4
    %p32 = por %p30, %p31
    %p33 = scmp.ne.s32.totalorder %s22, %s23
    %p34 = scmp.eq.s32.totalorder %s14, 0
    %p35 = por %p33, %p34
    %p36 = scmp.ne.s32.totalorder %s22, %s23
    %p37 = scmp.eq.s32.totalorder %s15, 4
    %p38 = por %p36, %p37
    %p40 = scmp.ne.s32.totalorder %s23, %s39
    %p41 = scmp.eq.s32.totalorder %s15, 0
    %p42 = por %p40, %p41
    %s43 = ssub.s32 %s9, %s16
    %p44 = scmp.eq.s32.totalorder %s43, 0
    %s46 = sadd.s32 %s45, 1
    %s47 = scalar_select %p44, %s45, %s46
    %p50 = pneg %p44
    %p51 = scmp.eq.s32.totalorder %s9, 4
    %p52 = por %p50, %p51
    %p53 = scmp.ne.s32.totalorder %s45, %s48
    %p54 = scmp.eq.s32.totalorder %s9, 0
    %p55 = por %p53, %p54
    %p56 = scmp.ne.s32.totalorder %s45, %s48
    %p57 = scmp.eq.s32.totalorder %s14, 4
    %p58 = por %p56, %p57
    %p59 = scmp.ne.s32.totalorder %s48, %s49
    %p60 = scmp.eq.s32.totalorder %s14, 0
    %p61 = por %p59, %p60
    %p62 = scmp.ne.s32.totalorder %s48, %s49
    %p63 = scmp.eq.s32.totalorder %s15, 4
    %p64 = por %p62, %p63
    %p66 = scmp.ne.s32.totalorder %s49, %s65
    %p67 = scmp.eq.s32.totalorder %s15, 0
    %p68 = por %p66, %p67
    %s69 = ssub.s32 %s9, %s16
    %p70 = scmp.eq.s32.totalorder %s69, 0
    %s72 = sadd.s32 %s71, 1
    %s73 = scalar_select %p70, %s71, %s72
    %p76 = pneg %p70
    %p77 = scmp.eq.s32.totalorder %s9, 4
    %p78 = por %p76, %p77
    %p79 = scmp.ne.s32.totalorder %s71, %s74
    %p80 = scmp.eq.s32.totalorder %s9, 0
    %p81 = por %p79, %p80
    %p82 = scmp.ne.s32.totalorder %s71, %s74
    %p83 = scmp.eq.s32.totalorder %s14, 4
    %p84 = por %p82, %p83
    %p85 = scmp.ne.s32.totalorder %s74, %s75
    %p86 = scmp.eq.s32.totalorder %s14, 0
    %p87 = por %p85, %p86
    %p88 = scmp.ne.s32.totalorder %s74, %s75
    %p89 = scmp.eq.s32.totalorder %s15, 4
    %p90 = por %p88, %p89
    %p92 = scmp.ne.s32.totalorder %s75, %s91
    %p93 = scmp.eq.s32.totalorder %s15, 0
    %p94 = por %p92, %p93
    %s95 = ssub.s32 %s9, %s16
    %p96 = scmp.eq.s32.totalorder %s95, 0
    %s98 = sadd.s32 %s97, 1
    %s99 = scalar_select %p96, %s97, %s98
    %p102 = pneg %p96
    %p103 = scmp.eq.s32.totalorder %s9, 4
    %p104 = por %p102, %p103
    %p105 = scmp.ne.s32.totalorder %s97, %s100
    %p106 = scmp.eq.s32.totalorder %s9, 0
    %p107 = por %p105, %p106
    %p108 = scmp.ne.s32.totalorder %s97, %s100
    %p109 = scmp.eq.s32.totalorder %s14, 4
    %p110 = por %p108, %p109
    %p111 = scmp.ne.s32.totalorder %s100, %s101
    %p112 = scmp.eq.s32.totalorder %s14, 0
    %p113 = por %p111, %p112
    %p114 = scmp.ne.s32.totalorder %s100, %s101
    %p115 = scmp.eq.s32.totalorder %s15, 4
    %p116 = por %p114, %p115
    %p118 = scmp.ne.s32.totalorder %s101, %s117
    %p119 = scmp.eq.s32.totalorder %s15, 0
    %p120 = por %p118, %p119
    %p121 = scmp.le.s32.totalorder 1, %s9
    %p122 = scmp.lt.s32.totalorder %s9, 6
    %p123 = pnand %p121, %p122
    %p124 = pneg %p123
    // Predicated region
    $region9: #{neighboring_cross_attention.3} parent=5 // pred_check
      _
    $region10: #{neighboring_cross_attention.3} parent=5 // pred_check_branch
      %126 = sbr.rel (%p123) target = $region12
    $region11: #{neighboring_cross_attention.3} parent=5 // pred_region
      %s127 = ssub.s32 %s9, 1
    $region12: #{neighboring_cross_attention.3} parent=5 // pred_fallthru
      _
    %p128 = scmp.lt.s32.totalorder %s9, 5
    // Predicated region
    $region13: #{neighboring_cross_attention.3} parent=5 // pred_check
      %p129 = pneg %p128
    $region14: #{neighboring_cross_attention.3} parent=5 // pred_check_branch
      %131 = sbr.rel (%p129) target = $region16
    $region15: #{neighboring_cross_attention.3} parent=5 // pred_region
      // Predicated region
      $region17: #{neighboring_cross_attention.3} parent=15 // pred_check
        %p132 = pneg %p29
      $region18: #{neighboring_cross_attention.3} parent=15 // pred_check_branch
        %134 = sbr.rel (%p132) target = $region20
      $region19: #{neighboring_cross_attention.3} parent=15 // pred_region
        %p135 = scmp.lt.s32.totalorder %s9, 4
        %s136 = scalar_select %p135, %s9, 4
        %s137 = smul.addr %s136, 5
        %s138 = smul.addr %s137, 8
        %s139 = scalar_lea.vmem %s0, %s138
      $region20: #{neighboring_cross_attention.3} parent=15 // pred_fallthru
        _
      // Predicated region
      $region21: #{neighboring_cross_attention.3} parent=15 // pred_check
        %p140 = pneg %p55
      $region22: #{neighboring_cross_attention.3} parent=15 // pred_check_branch
        %142 = sbr.rel (%p140) target = $region24
      $region23: #{neighboring_cross_attention.3} parent=15 // pred_region
        %p143 = scmp.lt.s32.totalorder %s9, 4
        %s144 = scalar_select %p143, %s9, 4
        %s145 = smul.addr %s144, 4
        %s146 = smul.addr %s145, 8
        %s147 = scalar_lea.vmem %s1, %s146
      $region24: #{neighboring_cross_attention.3} parent=15 // pred_fallthru
        _
      // Predicated region
      $region25: #{neighboring_cross_attention.3} parent=15 // pred_check
        %p148 = pneg %p81
      $region26: #{neighboring_cross_attention.3} parent=15 // pred_check_branch
        %150 = sbr.rel (%p148) target = $region28
      $region27: #{neighboring_cross_attention.3} parent=15 // pred_region
        %p151 = scmp.lt.s32.totalorder %s9, 4
        %s152 = scalar_select %p151, %s9, 4
        %s153 = smul.addr %s152, 4
        %s154 = smul.addr %s153, 8
        %s155 = scalar_lea.vmem %s2, %s154
      $region28: #{neighboring_cross_attention.3} parent=15 // pred_fallthru
        _
    $region16: #{neighboring_cross_attention.3} parent=5 // pred_fallthru
      _
    %p156 = scmp.le.s32.totalorder 1, %s9
    %p157 = scmp.lt.s32.totalorder %s9, 6
    %p158 = pnand %p156, %p157
    %p159 = pneg %p158
    // Predicated region
    $region29: #{neighboring_cross_attention.3} parent=5 // pred_check
      _
    $region30: #{neighboring_cross_attention.3} parent=5 // pred_check_branch
      %161 = sbr.rel (%p158) target = $region32
    $region31: #{neighboring_cross_attention.3} parent=5 // pred_region
      %s162 = ssub.s32 %s9, 1
      %p163 = scmp.lt.s32.totalorder %s14, 4
      %s164 = scalar_select %p163, %s14, 4
      %s165 = smul.addr %s164, 5
      %s166 = smul.addr %s165, 8
      %s167 = scalar_lea.vmem %s0, %s166
      %p168 = pneg %p35
      %p169 = pneg %p32
      %p170 = scmp.lt.s32.totalorder %s14, 4
      %s171 = scalar_select %p170, %s14, 4
      %s172 = smul.addr %s171, 4
      %s173 = smul.addr %s172, 8
      %s174 = scalar_lea.vmem %s1, %s173
      %p175 = pneg %p61
      %p176 = pneg %p58
      %p177 = scmp.lt.s32.totalorder %s14, 4
      %s178 = scalar_select %p177, %s14, 4
      %s179 = smul.addr %s178, 4
      %s180 = smul.addr %s179, 8
      %s181 = scalar_lea.vmem %s2, %s180
      %p182 = pneg %p87
      %p183 = pneg %p84
      %p184 = pneg %p113
      %p185 = pneg %p110
      %p186 = scmp.lt.s32.totalorder %s14, 4
      %s187 = scalar_select %p186, %s14, 4
      %s188 = smul.addr %s187, 4
      %s189 = smul.addr %s188, 8
      %s190 = scalar_lea.vmem %s3, %s189
      %p191 = scmp.lt.s32.totalorder %s14, 4
      %s192 = scalar_select %p191, %s14, 4
      %s193 = smul.addr %s192, 5
      %s194 = smul.addr %s193, 8
      %s195 = scalar_lea.vmem %s0, %s194
      %p196 = scmp.lt.s32.totalorder %s14, 4
      %s197 = scalar_select %p196, %s14, 4
      %s198 = smul.addr %s197, 4
      %s199 = smul.addr %s198, 8
      %s200 = scalar_lea.vmem %s1, %s199
      %p201 = scmp.lt.s32.totalorder %s14, 4
      %s202 = scalar_select %p201, %s14, 4
      %s203 = smul.addr %s202, 4
      %s204 = smul.addr %s203, 8
      %s205 = scalar_lea.vmem %s2, %s204
      %p206 = scmp.lt.s32.totalorder %s14, 4
      %s207 = scalar_select %p206, %s14, 4
      %s208 = smul.addr %s207, 4
      %s209 = smul.addr %s208, 8
      %s210 = scalar_lea.vmem %s3, %s209
      %v211 = vld [vmem:[%s200] sm:$0xff]
      %v212 = vld [vmem:[%s200 + $0x8] sm:$0xff]
      %v213 = vld [vmem:[%s200 + $0x10] sm:$0xff]
      %v214 = vld [vmem:[%s200 + $0x18] sm:$0xff]
      %v215 = vld [vmem:[%s195] sm:$0xff]
      %v216 = vld [vmem:[%s195 + $0x8] sm:$0xff]
      %v217 = vld [vmem:[%s195 + $0x10] sm:$0xff]
      %v218 = vld [vmem:[%s195 + $0x18] sm:$0xff]
      %v219 = vld [vmem:[%s195 + $0x20] sm:$0xf]
      %v220 = vld [vmem:[%s205] sm:$0xff]
      %v221 = vld [vmem:[%s205 + $0x8] sm:$0xff]
      %v222 = vld [vmem:[%s205 + $0x10] sm:$0xff]
      %v223 = vld [vmem:[%s205 + $0x18] sm:$0xff]
      %225 = vset.pattern.permute.xlu0 0
      %226 = vperm.xlu0 %225, %v220
      %v227 = vpop.permute.xlu0 %226
      %230 = vset.pattern.permute.xlu0 0
      %231 = vperm.xlu0 %230, %v221
      %v232 = vpop.permute.xlu0 %231
      %235 = vset.pattern.permute.xlu0 0
      %236 = vperm.xlu0 %235, %v222
      %v237 = vpop.permute.xlu0 %236
      %240 = vset.pattern.permute.xlu0 0
      %241 = vperm.xlu0 %240, %v223
      %v242 = vpop.permute.xlu0 %241
      %vm244 = vcmask 293888
      %v246 = vsel %vm244, %v211, 0
      %v249 = vsel %vm244, %v212, 0
      %v252 = vsel %vm244, %v213, 0
      %v255 = vsel %vm244, %v214, 0
      %vm257 = vcmask 1043456
      %v259 = vsel %vm257, %v219, 0
      %261 = vmatprep.subr.mxu0 0.0
      %262 = vmatpush1.msra.mxu0 0.0
      %263 = vmatprep.subr.mxu0 0.0
      %264 = vmatpush1.msra.mxu0 0.0
      %265 = vmatprep.subr.mxu0 0.0
      %266 = vmatpush1.msra.mxu0 0.0
      %267 = vmatprep.subr.mxu0 0.0
      %268 = vmatpush1.msra.mxu0 0.0
      %269 = vmatprep.subr.mxu0 0.0
      %270 = vmatpush1.msra.mxu0 0.0
      %271 = vmatprep.subr.mxu0 0.0
      %272 = vmatpush1.msra.mxu0 0.0
      %273 = vmatprep.subr.mxu0 0.0
      %274 = vmatpush1.msra.mxu0 0.0
      %275 = vmatprep.subr.mxu0 0.0
      %276 = vmatpush1.msra.mxu0 0.0
      %277 = vmatprep.subr.mxu0 0.0
      %278 = vmatpush1.msra.mxu0 0.0
      %279 = vmatprep.subr.mxu0 0.0
      %280 = vmatpush1.msra.mxu0 0.0
      %281 = vmatprep.subr.mxu0 0.0
      %282 = vmatpush1.msra.mxu0 0.0
      %283 = vmatprep.subr.mxu0 0.0
      %284 = vmatpush1.msra.mxu0 %v259
      %285 = vmatprep.subr.mxu0 0.0
      %286 = vmatpush1.msra.mxu0 %v218
      %287 = vmatprep.subr.mxu0 0.0
      %288 = vmatpush1.msra.mxu0 %v217
      %289 = vmatprep.subr.mxu0 0.0
      %290 = vmatpush1.msra.mxu0 %v216
      %291 = vmatprep.subr.mxu0 0.0
      %292 = vmatpush1.msra.mxu0 %v215
      %293 = vmatprep.subr.mxu0 0.0
      %294 = vmatpush2.msra.mxu0 0.0
      %295 = vmatprep.subr.mxu0 0.0
      %296 = vmatpush2.msra.mxu0 0.0
      %297 = vmatprep.subr.mxu0 0.0
      %298 = vmatpush2.msra.mxu0 0.0
      %299 = vmatprep.subr.mxu0 0.0
      %300 = vmatpush2.msra.mxu0 0.0
      %301 = vmatprep.subr.mxu0 0.0
      %302 = vmatpush2.msra.mxu0 0.0
      %303 = vmatprep.subr.mxu0 0.0
      %304 = vmatpush2.msra.mxu0 0.0
      %305 = vmatprep.subr.mxu0 0.0
      %306 = vmatpush2.msra.mxu0 0.0
      %307 = vmatprep.subr.mxu0 0.0
      %308 = vmatpush2.msra.mxu0 0.0
      %309 = vmatprep.subr.mxu0 0.0
      %310 = vmatpush2.msra.mxu0 0.0
      %311 = vmatprep.subr.mxu0 0.0
      %312 = vmatpush2.msra.mxu0 0.0
      %313 = vmatprep.subr.mxu0 0.0
      %314 = vmatpush2.msra.mxu0 0.0
      %315 = vmatprep.subr.mxu0 0.0
      %316 = vmatpush2.msra.mxu0 0.0
      %317 = vmatprep.subr.mxu0 0.0
      %318 = vmatpush2.msra.mxu0 0.0
      %319 = vmatprep.subr.mxu0 0.0
      %320 = vmatpush2.msra.mxu0 0.0
      %321 = vmatprep.subr.mxu0 0.0
      %322 = vmatpush2.msra.mxu0 0.0
      %323 = vmatprep.subr.mxu0 0.0
      %324 = vmatpush2.msra.mxu0 0.0
      %325 = vmatprep.mubr.f32.mxu0 0.0
      %326 = vmatmul.mubr.f32.gmra.mxu0 %v246
      %v327 = vpop.f32.mrf.mxu0
      %v328 = vadd.f32 %v227, %v327
      %v329 = vpop.f32.mrf.mxu0
      %330 = vmatprep.mubr.f32.mxu0 0.0
      %331 = vmatmul.mubr.f32.gmra.mxu0 %v249
      %v332 = vpop.f32.mrf.mxu0
      %v333 = vadd.f32 %v232, %v332
      %v334 = vpop.f32.mrf.mxu0
      %335 = vmatprep.mubr.f32.mxu0 0.0
      %336 = vmatmul.mubr.f32.gmra.mxu0 %v252
      %v337 = vpop.f32.mrf.mxu0
      %v338 = vadd.f32 %v237, %v337
      %v339 = vpop.f32.mrf.mxu0
      %340 = vmatprep.mubr.f32.mxu0 0.0
      %341 = vmatmul.mubr.f32.gmra.mxu0 %v255
      %v342 = vpop.f32.mrf.mxu0
      %v343 = vadd.f32 %v242, %v342
      %v344 = vpop.f32.mrf.mxu0
      %345 = vdwg.mxu0
      %v346 = vmax.f32 %v328, 0.0
      %v347 = vmax.f32 %v333, 0.0
      %v348 = vmax.f32 %v338, 0.0
      %v349 = vmax.f32 %v343, 0.0
      %350 = vst [vmem:[%s210] sm:$0xff] %v346
      %351 = vst [vmem:[%s210 + $0x8] sm:$0xff] %v347
      %352 = vst [vmem:[%s210 + $0x10] sm:$0xff] %v348
      %353 = vst [vmem:[%s210 + $0x18] sm:$0xff] %v349
      %p354 = scmp.lt.s32.totalorder %s14, 4
      %s355 = scalar_select %p354, %s14, 4
      %s356 = smul.addr %s355, 4
      %s357 = smul.addr %s356, 8
      %s358 = scalar_lea.vmem %s3, %s357
      // Predicated region
      $region33: #{neighboring_cross_attention.3} parent=31 // pred_check
        %p359 = pneg %p110
      $region34: #{neighboring_cross_attention.3} parent=31 // pred_check_branch
        %361 = sbr.rel (%p359) target = $region36
      $region35: #{neighboring_cross_attention.3} parent=31 // pred_region
        _
      $region36: #{neighboring_cross_attention.3} parent=31 // pred_fallthru
        _
    $region32: #{neighboring_cross_attention.3} parent=5 // pred_fallthru
      _
    %p362 = scmp.le.s32.totalorder 2, %s9
    // Predicated region
    $region37: #{neighboring_cross_attention.3} parent=5 // pred_check
      %p363 = pneg %p362
    $region38: #{neighboring_cross_attention.3} parent=5 // pred_check_branch
      %365 = sbr.rel (%p363) target = $region40
    $region39: #{neighboring_cross_attention.3} parent=5 // pred_region
      %s366 = ssub.s32 %s9, 2
      // Predicated region
      $region41: #{neighboring_cross_attention.3} parent=39 // pred_check
        %p367 = pneg %p116
      $region42: #{neighboring_cross_attention.3} parent=39 // pred_check_branch
        %369 = sbr.rel (%p367) target = $region44
      $region43: #{neighboring_cross_attention.3} parent=39 // pred_region
        %p370 = scmp.lt.s32.totalorder %s15, 4
        %s371 = scalar_select %p370, %s15, 4
        %s372 = smul.addr %s371, 4
        %s373 = smul.addr %s372, 8
        %s374 = scalar_lea.vmem %s3, %s373
      $region44: #{neighboring_cross_attention.3} parent=39 // pred_fallthru
        _
    $region40: #{neighboring_cross_attention.3} parent=5 // pred_fallthru
      _
  $region6: #{neighboring_cross_attention.3} parent=0 // loop_footer
    %s13 = sadd.s32 1, %s9
  $region7: #{neighboring_cross_attention.3} parent=0 // loop_footer_branch
    %8 = sbr.rel target = $region3
  $region8: #{neighboring_cross_attention.3} parent=0 // loop_exit
    _

// kernel: neighboring_cross_attention.4
$region0: #{neighboring_cross_attention.4}
  #allocation0 [shape = 'u32[]', space=smem, size = 0x4, offset = 0x4, fixed_abs, tag = 'smem constant byte address 0x4 - core index']
  #allocation1 [shape = 'u32[144,128]{1,0:T(1,128)}', space=vmem, size = 0x12000, scoped, tag = 'internal scratch']
  #allocation2 [shape = 's32[1]{0}', space=sflag, size = 0x4, scoped, tag = 'scoped memory for neighboring_cross_attention.4']
  #allocation3 [shape = 'u8[512]{0}', space=smem, size = 0x200, scoped, tag = 'prefetched SMEM operand 0']
  #allocation4 [shape = 'u8[512]{0}', space=smem, size = 0x200, scoped, tag = 'prefetched SMEM operand 1']
  %s0 = inlined_call_operand.vmem [shape: s32[16], index: 0, kind: input, shape index: {}]
  %s1 = inlined_call_operand.vmem [shape: s32[16], index: 1, kind: input, shape index: {}]
  %s2 = inlined_call_operand.vmem [shape: f32[5,32,128], index: 2, kind: input, shape index: {}, may-alias: {2,3}]
  %s3 = inlined_call_operand.vmem [shape: f32[5,32,128], index: 3, kind: input, shape index: {}, may-alias: {2,3}]
  %s4 = inlined_call_operand.vmem [shape: f32[16,32,32], index: 4, kind: input, shape index: {}]
  %s5 = inlined_call_operand.vmem [shape: f32[16,1,32], index: 5, kind: input, shape index: {}]
  %s6 = inlined_call_operand.vmem [shape: f32[16,32,32], index: 6, kind: input, shape index: {}]
  %s7 = inlined_call_operand.vmem [shape: f32[16,1,32], index: 7, kind: input, shape index: {}]
  %s8 = inlined_call_operand.vmem [shape: f32[16,32,32], index: 8, kind: input, shape index: {}]
  %s9 = inlined_call_operand.vmem [shape: f32[16,1,32], index: 9, kind: input, shape index: {}]
  %s10 = inlined_call_operand.vmem [shape: f32[16,32,32], index: 10, kind: input, shape index: {}]
  %s11 = inlined_call_operand.vmem [shape: f32[16,32,1], index: 11, kind: input, shape index: {}]
  %s12 = inlined_call_operand.vmem [shape: f32[16,32,1], index: 12, kind: input, shape index: {}]
  %s13 = inlined_call_operand.vmem [shape: f32[16,32,1], index: 13, kind: input, shape index: {}]
  %s14 = inlined_call_operand.vmem [shape: f32[16,32,128], index: 14, kind: output, shape index: {}]
  %s15 = sld [smem:[#allocation0]]
  $region81: #{neighboring_cross_attention.4} parent=0
    _
  %s17 = ssub.s32 1, %s15
  %s18 = scalar_select 0, %s17, %s15
  %s19 = sshll.u32 %s0, 4
  %s20 = int_to_ptr.vmem [resolvable:$true] %s19
  %22 = dma.vmem_to_smem %s20, 16, [#allocation3], [#allocation2]
  %s23 = sshll.u32 %s1, 4
  %s24 = int_to_ptr.vmem [resolvable:$true] %s23
  %26 = dma.vmem_to_smem %s24, 16, [#allocation4], [#allocation2]
  %27 = dma.done [#allocation2], 32
  %28 = sfence
  loop: start=0, step=1, limit=18
  $region2: #{neighboring_cross_attention.4} parent=0 // loop_pre_header
    _
  $region3: #{neighboring_cross_attention.4} parent=0 // loop_header
    %s30 = sphi 0, %s34
    %p31 = scmp.ge.s32.totalorder %s30, 18
    %s42 = sphi 0, %s44
    %s45 = sphi 0, %s42
    %s46 = sphi 0, %s45
    %s62 = sphi 0, %s46
    %s70 = sphi 0, %s72
    %s73 = sphi 0, %s70
    %s74 = sphi 0, %s73
    %s90 = sphi 0, %s74
    %s96 = sphi 0, %s98
    %s99 = sphi 0, %s96
    %s100 = sphi 0, %s99
    %s116 = sphi 0, %s100
    %s122 = sphi 0, %s124
    %s125 = sphi 0, %s122
    %s126 = sphi 0, %s125
    %s142 = sphi 0, %s126
    %s148 = sphi 0, %s150
    %s151 = sphi 0, %s148
    %s152 = sphi 0, %s151
    %s168 = sphi 0, %s152
    %s174 = sphi 0, %s176
    %s177 = sphi 0, %s174
    %s178 = sphi 0, %s177
    %s194 = sphi 0, %s178
    %s200 = sphi 0, %s202
    %s203 = sphi 0, %s200
    %s204 = sphi 0, %s203
    %s220 = sphi 0, %s204
    %s226 = sphi 0, %s228
    %s229 = sphi 0, %s226
    %s230 = sphi 0, %s229
    %s246 = sphi 0, %s230
    %s252 = sphi 0, %s254
    %s255 = sphi 0, %s252
    %s256 = sphi 0, %s255
    %s272 = sphi 0, %s256
    %s278 = sphi 0, %s280
    %s281 = sphi 0, %s278
    %s282 = sphi 0, %s281
    %s298 = sphi 0, %s282
    %s304 = sphi 0, %s306
    %s307 = sphi 0, %s304
    %s308 = sphi 0, %s307
    %s324 = sphi 0, %s308
    %s330 = sphi 0, %s332
    %s333 = sphi 0, %s330
    %s334 = sphi 0, %s333
    %s350 = sphi 0, %s334
    %s356 = sphi 0, %s358
    %s359 = sphi 0, %s356
    %s360 = sphi 0, %s359
    %s376 = sphi 0, %s360
  $region4: #{neighboring_cross_attention.4} parent=0 // loop_header_branch
    %33 = sbr.rel (%p31) target = $region8
  $region5: #{neighboring_cross_attention.4} parent=0 // loop_body
    %s35 = ssub.s32 %s30, 1
    %s36 = ssub.s32 %s30, 2
    %s37 = sadd.s32 %s30, 1
    %s38 = sld [smem:[#allocation3 + %s30]]
    %s39 = sld [smem:[#allocation3 + %s37]]
    %s40 = ssub.s32 %s38, %s39
    %p41 = scmp.eq.s32.totalorder %s40, 0
    %s43 = sadd.s32 %s42, 1
    %s44 = scalar_select %p41, %s42, %s43
    %p47 = pneg %p41
    %p48 = scmp.eq.s32.totalorder %s30, 15
    %p49 = por %p47, %p48
    %p50 = scmp.ne.s32.totalorder %s42, %s45
    %p51 = scmp.eq.s32.totalorder %s30, 0
    %p52 = por %p50, %p51
    %p53 = scmp.ne.s32.totalorder %s42, %s45
    %p54 = scmp.eq.s32.totalorder %s35, 15
    %p55 = por %p53, %p54
    %p56 = scmp.ne.s32.totalorder %s45, %s46
    %p57 = scmp.eq.s32.totalorder %s35, 0
    %p58 = por %p56, %p57
    %p59 = scmp.ne.s32.totalorder %s45, %s46
    %p60 = scmp.eq.s32.totalorder %s36, 15
    %p61 = por %p59, %p60
    %p63 = scmp.ne.s32.totalorder %s46, %s62
    %p64 = scmp.eq.s32.totalorder %s36, 0
    %p65 = por %p63, %p64
    %s66 = sld [smem:[#allocation4 + %s30]]
    %s67 = sld [smem:[#allocation4 + %s37]]
    %s68 = ssub.s32 %s66, %s67
    %p69 = scmp.eq.s32.totalorder %s68, 0
    %s71 = sadd.s32 %s70, 1
    %s72 = scalar_select %p69, %s70, %s71
    %p75 = pneg %p69
    %p76 = scmp.eq.s32.totalorder %s30, 15
    %p77 = por %p75, %p76
    %p78 = scmp.ne.s32.totalorder %s70, %s73
    %p79 = scmp.eq.s32.totalorder %s30, 0
    %p80 = por %p78, %p79
    %p81 = scmp.ne.s32.totalorder %s70, %s73
    %p82 = scmp.eq.s32.totalorder %s35, 15
    %p83 = por %p81, %p82
    %p84 = scmp.ne.s32.totalorder %s73, %s74
    %p85 = scmp.eq.s32.totalorder %s35, 0
    %p86 = por %p84, %p85
    %p87 = scmp.ne.s32.totalorder %s73, %s74
    %p88 = scmp.eq.s32.totalorder %s36, 15
    %p89 = por %p87, %p88
    %p91 = scmp.ne.s32.totalorder %s74, %s90
    %p92 = scmp.eq.s32.totalorder %s36, 0
    %p93 = por %p91, %p92
    %s94 = ssub.s32 %s30, %s37
    %p95 = scmp.eq.s32.totalorder %s94, 0
    %s97 = sadd.s32 %s96, 1
    %s98 = scalar_select %p95, %s96, %s97
    %p101 = pneg %p95
    %p102 = scmp.eq.s32.totalorder %s30, 15
    %p103 = por %p101, %p102
    %p104 = scmp.ne.s32.totalorder %s96, %s99
    %p105 = scmp.eq.s32.totalorder %s30, 0
    %p106 = por %p104, %p105
    %p107 = scmp.ne.s32.totalorder %s96, %s99
    %p108 = scmp.eq.s32.totalorder %s35, 15
    %p109 = por %p107, %p108
    %p110 = scmp.ne.s32.totalorder %s99, %s100
    %p111 = scmp.eq.s32.totalorder %s35, 0
    %p112 = por %p110, %p111
    %p113 = scmp.ne.s32.totalorder %s99, %s100
    %p114 = scmp.eq.s32.totalorder %s36, 15
    %p115 = por %p113, %p114
    %p117 = scmp.ne.s32.totalorder %s100, %s116
    %p118 = scmp.eq.s32.totalorder %s36, 0
    %p119 = por %p117, %p118
    %s120 = ssub.s32 %s30, %s37
    %p121 = scmp.eq.s32.totalorder %s120, 0
    %s123 = sadd.s32 %s122, 1
    %s124 = scalar_select %p121, %s122, %s123
    %p127 = pneg %p121
    %p128 = scmp.eq.s32.totalorder %s30, 15
    %p129 = por %p127, %p128
    %p130 = scmp.ne.s32.totalorder %s122, %s125
    %p131 = scmp.eq.s32.totalorder %s30, 0
    %p132 = por %p130, %p131
    %p133 = scmp.ne.s32.totalorder %s122, %s125
    %p134 = scmp.eq.s32.totalorder %s35, 15
    %p135 = por %p133, %p134
    %p136 = scmp.ne.s32.totalorder %s125, %s126
    %p137 = scmp.eq.s32.totalorder %s35, 0
    %p138 = por %p136, %p137
    %p139 = scmp.ne.s32.totalorder %s125, %s126
    %p140 = scmp.eq.s32.totalorder %s36, 15
    %p141 = por %p139, %p140
    %p143 = scmp.ne.s32.totalorder %s126, %s142
    %p144 = scmp.eq.s32.totalorder %s36, 0
    %p145 = por %p143, %p144
    %s146 = ssub.s32 %s30, %s37
    %p147 = scmp.eq.s32.totalorder %s146, 0
    %s149 = sadd.s32 %s148, 1
    %s150 = scalar_select %p147, %s148, %s149
    %p153 = pneg %p147
    %p154 = scmp.eq.s32.totalorder %s30, 15
    %p155 = por %p153, %p154
    %p156 = scmp.ne.s32.totalorder %s148, %s151
    %p157 = scmp.eq.s32.totalorder %s30, 0
    %p158 = por %p156, %p157
    %p159 = scmp.ne.s32.totalorder %s148, %s151
    %p160 = scmp.eq.s32.totalorder %s35, 15
    %p161 = por %p159, %p160
    %p162 = scmp.ne.s32.totalorder %s151, %s152
    %p163 = scmp.eq.s32.totalorder %s35, 0
    %p164 = por %p162, %p163
    %p165 = scmp.ne.s32.totalorder %s151, %s152
    %p166 = scmp.eq.s32.totalorder %s36, 15
    %p167 = por %p165, %p166
    %p169 = scmp.ne.s32.totalorder %s152, %s168
    %p170 = scmp.eq.s32.totalorder %s36, 0
    %p171 = por %p169, %p170
    %s172 = ssub.s32 %s30, %s37
    %p173 = scmp.eq.s32.totalorder %s172, 0
    %s175 = sadd.s32 %s174, 1
    %s176 = scalar_select %p173, %s174, %s175
    %p179 = pneg %p173
    %p180 = scmp.eq.s32.totalorder %s30, 15
    %p181 = por %p179, %p180
    %p182 = scmp.ne.s32.totalorder %s174, %s177
    %p183 = scmp.eq.s32.totalorder %s30, 0
    %p184 = por %p182, %p183
    %p185 = scmp.ne.s32.totalorder %s174, %s177
    %p186 = scmp.eq.s32.totalorder %s35, 15
    %p187 = por %p185, %p186
    %p188 = scmp.ne.s32.totalorder %s177, %s178
    %p189 = scmp.eq.s32.totalorder %s35, 0
    %p190 = por %p188, %p189
    %p191 = scmp.ne.s32.totalorder %s177, %s178
    %p192 = scmp.eq.s32.totalorder %s36, 15
    %p193 = por %p191, %p192
    %p195 = scmp.ne.s32.totalorder %s178, %s194
    %p196 = scmp.eq.s32.totalorder %s36, 0
    %p197 = por %p195, %p196
    %s198 = ssub.s32 %s30, %s37
    %p199 = scmp.eq.s32.totalorder %s198, 0
    %s201 = sadd.s32 %s200, 1
    %s202 = scalar_select %p199, %s200, %s201
    %p205 = pneg %p199
    %p206 = scmp.eq.s32.totalorder %s30, 15
    %p207 = por %p205, %p206
    %p208 = scmp.ne.s32.totalorder %s200, %s203
    %p209 = scmp.eq.s32.totalorder %s30, 0
    %p210 = por %p208, %p209
    %p211 = scmp.ne.s32.totalorder %s200, %s203
    %p212 = scmp.eq.s32.totalorder %s35, 15
    %p213 = por %p211, %p212
    %p214 = scmp.ne.s32.totalorder %s203, %s204
    %p215 = scmp.eq.s32.totalorder %s35, 0
    %p216 = por %p214, %p215
    %p217 = scmp.ne.s32.totalorder %s203, %s204
    %p218 = scmp.eq.s32.totalorder %s36, 15
    %p219 = por %p217, %p218
    %p221 = scmp.ne.s32.totalorder %s204, %s220
    %p222 = scmp.eq.s32.totalorder %s36, 0
    %p223 = por %p221, %p222
    %s224 = ssub.s32 %s30, %s37
    %p225 = scmp.eq.s32.totalorder %s224, 0
    %s227 = sadd.s32 %s226, 1
    %s228 = scalar_select %p225, %s226, %s227
    %p231 = pneg %p225
    %p232 = scmp.eq.s32.totalorder %s30, 15
    %p233 = por %p231, %p232
    %p234 = scmp.ne.s32.totalorder %s226, %s229
    %p235 = scmp.eq.s32.totalorder %s30, 0
    %p236 = por %p234, %p235
    %p237 = scmp.ne.s32.totalorder %s226, %s229
    %p238 = scmp.eq.s32.totalorder %s35, 15
    %p239 = por %p237, %p238
    %p240 = scmp.ne.s32.totalorder %s229, %s230
    %p241 = scmp.eq.s32.totalorder %s35, 0
    %p242 = por %p240, %p241
    %p243 = scmp.ne.s32.totalorder %s229, %s230
    %p244 = scmp.eq.s32.totalorder %s36, 15
    %p245 = por %p243, %p244
    %p247 = scmp.ne.s32.totalorder %s230, %s246
    %p248 = scmp.eq.s32.totalorder %s36, 0
    %p249 = por %p247, %p248
    %s250 = ssub.s32 %s30, %s37
    %p251 = scmp.eq.s32.totalorder %s250, 0
    %s253 = sadd.s32 %s252, 1
    %s254 = scalar_select %p251, %s252, %s253
    %p257 = pneg %p251
    %p258 = scmp.eq.s32.totalorder %s30, 15
    %p259 = por %p257, %p258
    %p260 = scmp.ne.s32.totalorder %s252, %s255
    %p261 = scmp.eq.s32.totalorder %s30, 0
    %p262 = por %p260, %p261
    %p263 = scmp.ne.s32.totalorder %s252, %s255
    %p264 = scmp.eq.s32.totalorder %s35, 15
    %p265 = por %p263, %p264
    %p266 = scmp.ne.s32.totalorder %s255, %s256
    %p267 = scmp.eq.s32.totalorder %s35, 0
    %p268 = por %p266, %p267
    %p269 = scmp.ne.s32.totalorder %s255, %s256
    %p270 = scmp.eq.s32.totalorder %s36, 15
    %p271 = por %p269, %p270
    %p273 = scmp.ne.s32.totalorder %s256, %s272
    %p274 = scmp.eq.s32.totalorder %s36, 0
    %p275 = por %p273, %p274
    %s276 = ssub.s32 %s30, %s37
    %p277 = scmp.eq.s32.totalorder %s276, 0
    %s279 = sadd.s32 %s278, 1
    %s280 = scalar_select %p277, %s278, %s279
    %p283 = pneg %p277
    %p284 = scmp.eq.s32.totalorder %s30, 15
    %p285 = por %p283, %p284
    %p286 = scmp.ne.s32.totalorder %s278, %s281
    %p287 = scmp.eq.s32.totalorder %s30, 0
    %p288 = por %p286, %p287
    %p289 = scmp.ne.s32.totalorder %s278, %s281
    %p290 = scmp.eq.s32.totalorder %s35, 15
    %p291 = por %p289, %p290
    %p292 = scmp.ne.s32.totalorder %s281, %s282
    %p293 = scmp.eq.s32.totalorder %s35, 0
    %p294 = por %p292, %p293
    %p295 = scmp.ne.s32.totalorder %s281, %s282
    %p296 = scmp.eq.s32.totalorder %s36, 15
    %p297 = por %p295, %p296
    %p299 = scmp.ne.s32.totalorder %s282, %s298
    %p300 = scmp.eq.s32.totalorder %s36, 0
    %p301 = por %p299, %p300
    %s302 = ssub.s32 %s30, %s37
    %p303 = scmp.eq.s32.totalorder %s302, 0
    %s305 = sadd.s32 %s304, 1
    %s306 = scalar_select %p303, %s304, %s305
    %p309 = pneg %p303
    %p310 = scmp.eq.s32.totalorder %s30, 15
    %p311 = por %p309, %p310
    %p312 = scmp.ne.s32.totalorder %s304, %s307
    %p313 = scmp.eq.s32.totalorder %s30, 0
    %p314 = por %p312, %p313
    %p315 = scmp.ne.s32.totalorder %s304, %s307
    %p316 = scmp.eq.s32.totalorder %s35, 15
    %p317 = por %p315, %p316
    %p318 = scmp.ne.s32.totalorder %s307, %s308
    %p319 = scmp.eq.s32.totalorder %s35, 0
    %p320 = por %p318, %p319
    %p321 = scmp.ne.s32.totalorder %s307, %s308
    %p322 = scmp.eq.s32.totalorder %s36, 15
    %p323 = por %p321, %p322
    %p325 = scmp.ne.s32.totalorder %s308, %s324
    %p326 = scmp.eq.s32.totalorder %s36, 0
    %p327 = por %p325, %p326
    %s328 = ssub.s32 %s30, %s37
    %p329 = scmp.eq.s32.totalorder %s328, 0
    %s331 = sadd.s32 %s330, 1
    %s332 = scalar_select %p329, %s330, %s331
    %p335 = pneg %p329
    %p336 = scmp.eq.s32.totalorder %s30, 15
    %p337 = por %p335, %p336
    %p338 = scmp.ne.s32.totalorder %s330, %s333
    %p339 = scmp.eq.s32.totalorder %s30, 0
    %p340 = por %p338, %p339
    %p341 = scmp.ne.s32.totalorder %s330, %s333
    %p342 = scmp.eq.s32.totalorder %s35, 15
    %p343 = por %p341, %p342
    %p344 = scmp.ne.s32.totalorder %s333, %s334
    %p345 = scmp.eq.s32.totalorder %s35, 0
    %p346 = por %p344, %p345
    %p347 = scmp.ne.s32.totalorder %s333, %s334
    %p348 = scmp.eq.s32.totalorder %s36, 15
    %p349 = por %p347, %p348
    %p351 = scmp.ne.s32.totalorder %s334, %s350
    %p352 = scmp.eq.s32.totalorder %s36, 0
    %p353 = por %p351, %p352
    %s354 = ssub.s32 %s30, %s37
    %p355 = scmp.eq.s32.totalorder %s354, 0
    %s357 = sadd.s32 %s356, 1
    %s358 = scalar_select %p355, %s356, %s357
    %p361 = pneg %p355
    %p362 = scmp.eq.s32.totalorder %s30, 15
    %p363 = por %p361, %p362
    %p364 = scmp.ne.s32.totalorder %s356, %s359
    %p365 = scmp.eq.s32.totalorder %s30, 0
    %p366 = por %p364, %p365
    %p367 = scmp.ne.s32.totalorder %s356, %s359
    %p368 = scmp.eq.s32.totalorder %s35, 15
    %p369 = por %p367, %p368
    %p370 = scmp.ne.s32.totalorder %s359, %s360
    %p371 = scmp.eq.s32.totalorder %s35, 0
    %p372 = por %p370, %p371
    %p373 = scmp.ne.s32.totalorder %s359, %s360
    %p374 = scmp.eq.s32.totalorder %s36, 15
    %p375 = por %p373, %p374
    %p377 = scmp.ne.s32.totalorder %s360, %s376
    %p378 = scmp.eq.s32.totalorder %s36, 0
    %p379 = por %p377, %p378
    %p380 = scmp.le.s32.totalorder 1, %s30
    %p381 = scmp.lt.s32.totalorder %s30, 17
    %p382 = pnand %p380, %p381
    %p383 = pneg %p382
    // Predicated region
    $region9: #{neighboring_cross_attention.4} parent=5 // pred_check
      _
    $region10: #{neighboring_cross_attention.4} parent=5 // pred_check_branch
      %385 = sbr.rel (%p382) target = $region12
    $region11: #{neighboring_cross_attention.4} parent=5 // pred_region
      %s386 = ssub.s32 %s30, 1
    $region12: #{neighboring_cross_attention.4} parent=5 // pred_fallthru
      _
    %p387 = scmp.lt.s32.totalorder %s30, 16
    // Predicated region
    $region13: #{neighboring_cross_attention.4} parent=5 // pred_check
      %p388 = pneg %p387
    $region14: #{neighboring_cross_attention.4} parent=5 // pred_check_branch
      %390 = sbr.rel (%p388) target = $region16
    $region15: #{neighboring_cross_attention.4} parent=5 // pred_region
      // Predicated region
      $region17: #{neighboring_cross_attention.4} parent=15 // pred_check
        %p391 = pneg %p52
      $region18: #{neighboring_cross_attention.4} parent=15 // pred_check_branch
        %393 = sbr.rel (%p391) target = $region20
      $region19: #{neighboring_cross_attention.4} parent=15 // pred_region
        %s394 = sld [smem:[#allocation3 + %s30]]
        %p395 = scmp.lt.s32.totalorder %s394, 4
        %s396 = scalar_select %p395, %s394, 4
        %s397 = smul.addr %s396, 4
        %s398 = smul.addr %s397, 8
        %s399 = scalar_lea.vmem %s2, %s398
        %s400 = sld [smem:[#allocation3 + %s30]]
      $region20: #{neighboring_cross_attention.4} parent=15 // pred_fallthru
        _
      // Predicated region
      $region21: #{neighboring_cross_attention.4} parent=15 // pred_check
        %p401 = pneg %p80
      $region22: #{neighboring_cross_attention.4} parent=15 // pred_check_branch
        %403 = sbr.rel (%p401) target = $region24
      $region23: #{neighboring_cross_attention.4} parent=15 // pred_region
        %s404 = sld [smem:[#allocation4 + %s30]]
        %p405 = scmp.lt.s32.totalorder %s404, 4
        %s406 = scalar_select %p405, %s404, 4
        %s407 = smul.addr %s406, 4
        %s408 = smul.addr %s407, 8
        %s409 = scalar_lea.vmem %s3, %s408
        %s410 = sld [smem:[#allocation4 + %s30]]
      $region24: #{neighboring_cross_attention.4} parent=15 // pred_fallthru
        _
      // Predicated region
      $region25: #{neighboring_cross_attention.4} parent=15 // pred_check
        %p411 = pneg %p106
      $region26: #{neighboring_cross_attention.4} parent=15 // pred_check_branch
        %413 = sbr.rel (%p411) target = $region28
      $region27: #{neighboring_cross_attention.4} parent=15 // pred_region
        %p414 = scmp.lt.s32.totalorder %s30, 15
        %s415 = scalar_select %p414, %s30, 15
        %s416 = smul.addr %s415, 4
        %s417 = smul.addr %s416, 8
        %s418 = scalar_lea.vmem %s4, %s417
      $region28: #{neighboring_cross_attention.4} parent=15 // pred_fallthru
        _
      // Predicated region
      $region29: #{neighboring_cross_attention.4} parent=15 // pred_check
        %p419 = pneg %p132
      $region30: #{neighboring_cross_attention.4} parent=15 // pred_check_branch
        %421 = sbr.rel (%p419) target = $region32
      $region31: #{neighboring_cross_attention.4} parent=15 // pred_region
        %p422 = scmp.lt.s32.totalorder %s30, 15
        %s423 = scalar_select %p422, %s30, 15
        %s424 = scalar_lea.vmem %s5, %s423
      $region32: #{neighboring_cross_attention.4} parent=15 // pred_fallthru
        _
      // Predicated region
      $region33: #{neighboring_cross_attention.4} parent=15 // pred_check
        %p425 = pneg %p158
      $region34: #{neighboring_cross_attention.4} parent=15 // pred_check_branch
        %427 = sbr.rel (%p425) target = $region36
      $region35: #{neighboring_cross_attention.4} parent=15 // pred_region
        %p428 = scmp.lt.s32.totalorder %s30, 15
        %s429 = scalar_select %p428, %s30, 15
        %s430 = smul.addr %s429, 4
        %s431 = smul.addr %s430, 8
        %s432 = scalar_lea.vmem %s6, %s431
      $region36: #{neighboring_cross_attention.4} parent=15 // pred_fallthru
        _
      // Predicated region
      $region37: #{neighboring_cross_attention.4} parent=15 // pred_check
        %p433 = pneg %p184
      $region38: #{neighboring_cross_attention.4} parent=15 // pred_check_branch
        %435 = sbr.rel (%p433) target = $region40
      $region39: #{neighboring_cross_attention.4} parent=15 // pred_region
        %p436 = scmp.lt.s32.totalorder %s30, 15
        %s437 = scalar_select %p436, %s30, 15
        %s438 = scalar_lea.vmem %s7, %s437
      $region40: #{neighboring_cross_attention.4} parent=15 // pred_fallthru
        _
      // Predicated region
      $region41: #{neighboring_cross_attention.4} parent=15 // pred_check
        %p439 = pneg %p210
      $region42: #{neighboring_cross_attention.4} parent=15 // pred_check_branch
        %441 = sbr.rel (%p439) target = $region44
      $region43: #{neighboring_cross_attention.4} parent=15 // pred_region
        %p442 = scmp.lt.s32.totalorder %s30, 15
        %s443 = scalar_select %p442, %s30, 15
        %s444 = smul.addr %s443, 4
        %s445 = smul.addr %s444, 8
        %s446 = scalar_lea.vmem %s8, %s445
      $region44: #{neighboring_cross_attention.4} parent=15 // pred_fallthru
        _
      // Predicated region
      $region45: #{neighboring_cross_attention.4} parent=15 // pred_check
        %p447 = pneg %p236
      $region46: #{neighboring_cross_attention.4} parent=15 // pred_check_branch
        %449 = sbr.rel (%p447) target = $region48
      $region47: #{neighboring_cross_attention.4} parent=15 // pred_region
        %p450 = scmp.lt.s32.totalorder %s30, 15
        %s451 = scalar_select %p450, %s30, 15
        %s452 = scalar_lea.vmem %s9, %s451
      $region48: #{neighboring_cross_attention.4} parent=15 // pred_fallthru
        _
      // Predicated region
      $region49: #{neighboring_cross_attention.4} parent=15 // pred_check
        %p453 = pneg %p262
      $region50: #{neighboring_cross_attention.4} parent=15 // pred_check_branch
        %455 = sbr.rel (%p453) target = $region52
      $region51: #{neighboring_cross_attention.4} parent=15 // pred_region
        %p456 = scmp.lt.s32.totalorder %s30, 15
        %s457 = scalar_select %p456, %s30, 15
        %s458 = smul.addr %s457, 4
        %s459 = smul.addr %s458, 8
        %s460 = scalar_lea.vmem %s10, %s459
      $region52: #{neighboring_cross_attention.4} parent=15 // pred_fallthru
        _
      // Predicated region
      $region53: #{neighboring_cross_attention.4} parent=15 // pred_check
        %p461 = pneg %p288
      $region54: #{neighboring_cross_attention.4} parent=15 // pred_check_branch
        %463 = sbr.rel (%p461) target = $region56
      $region55: #{neighboring_cross_attention.4} parent=15 // pred_region
        %p464 = scmp.lt.s32.totalorder %s30, 15
        %s465 = scalar_select %p464, %s30, 15
        %s466 = smul.addr %s465, 4
        %s467 = smul.addr %s466, 8
        %s468 = scalar_lea.vmem %s11, %s467
      $region56: #{neighboring_cross_attention.4} parent=15 // pred_fallthru
        _
      // Predicated region
      $region57: #{neighboring_cross_attention.4} parent=15 // pred_check
        %p469 = pneg %p314
      $region58: #{neighboring_cross_attention.4} parent=15 // pred_check_branch
        %471 = sbr.rel (%p469) target = $region60
      $region59: #{neighboring_cross_attention.4} parent=15 // pred_region
        %p472 = scmp.lt.s32.totalorder %s30, 15
        %s473 = scalar_select %p472, %s30, 15
        %s474 = smul.addr %s473, 4
        %s475 = smul.addr %s474, 8
        %s476 = scalar_lea.vmem %s12, %s475
      $region60: #{neighboring_cross_attention.4} parent=15 // pred_fallthru
        _
      // Predicated region
      $region61: #{neighboring_cross_attention.4} parent=15 // pred_check
        %p477 = pneg %p340
      $region62: #{neighboring_cross_attention.4} parent=15 // pred_check_branch
        %479 = sbr.rel (%p477) target = $region64
      $region63: #{neighboring_cross_attention.4} parent=15 // pred_region
        %p480 = scmp.lt.s32.totalorder %s30, 15
        %s481 = scalar_select %p480, %s30, 15
        %s482 = smul.addr %s481, 4
        %s483 = smul.addr %s482, 8
        %s484 = scalar_lea.vmem %s13, %s483
      $region64: #{neighboring_cross_attention.4} parent=15 // pred_fallthru
        _
    $region16: #{neighboring_cross_attention.4} parent=5 // pred_fallthru
      _
    %p485 = scmp.le.s32.totalorder 1, %s30
    %p486 = scmp.lt.s32.totalorder %s30, 17
    %p487 = pnand %p485, %p486
    %p488 = pneg %p487
    // Predicated region
    $region65: #{neighboring_cross_attention.4} parent=5 // pred_check
      _
    $region66: #{neighboring_cross_attention.4} parent=5 // pred_check_branch
      %490 = sbr.rel (%p487) target = $region68
    $region67: #{neighboring_cross_attention.4} parent=5 // pred_region
      %s491 = ssub.s32 %s30, 1
      %s492 = sld [smem:[#allocation3 + %s35]]
      %p493 = scmp.lt.s32.totalorder %s492, 4
      %s494 = scalar_select %p493, %s492, 4
      %s495 = smul.addr %s494, 4
      %s496 = smul.addr %s495, 8
      %s497 = scalar_lea.vmem %s2, %s496
      %p498 = pneg %p58
      %p499 = pneg %p55
      %s500 = sld [smem:[#allocation4 + %s35]]
      %p501 = scmp.lt.s32.totalorder %s500, 4
      %s502 = scalar_select %p501, %s500, 4
      %s503 = smul.addr %s502, 4
      %s504 = smul.addr %s503, 8
      %s505 = scalar_lea.vmem %s3, %s504
      %p506 = pneg %p86
      %p507 = pneg %p83
      %p508 = scmp.lt.s32.totalorder %s35, 15
      %s509 = scalar_select %p508, %s35, 15
      %s510 = smul.addr %s509, 4
      %s511 = smul.addr %s510, 8
      %s512 = scalar_lea.vmem %s4, %s511
      %p513 = pneg %p112
      %p514 = pneg %p109
      %p515 = scmp.lt.s32.totalorder %s35, 15
      %s516 = scalar_select %p515, %s35, 15
      %s517 = scalar_lea.vmem %s5, %s516
      %p518 = pneg %p138
      %p519 = pneg %p135
      %p520 = scmp.lt.s32.totalorder %s35, 15
      %s521 = scalar_select %p520, %s35, 15
      %s522 = smul.addr %s521, 4
      %s523 = smul.addr %s522, 8
      %s524 = scalar_lea.vmem %s6, %s523
      %p525 = pneg %p164
      %p526 = pneg %p161
      %p527 = scmp.lt.s32.totalorder %s35, 15
      %s528 = scalar_select %p527, %s35, 15
      %s529 = scalar_lea.vmem %s7, %s528
      %p530 = pneg %p190
      %p531 = pneg %p187
      %p532 = scmp.lt.s32.totalorder %s35, 15
      %s533 = scalar_select %p532, %s35, 15
      %s534 = smul.addr %s533, 4
      %s535 = smul.addr %s534, 8
      %s536 = scalar_lea.vmem %s8, %s535
      %p537 = pneg %p216
      %p538 = pneg %p213
      %p539 = scmp.lt.s32.totalorder %s35, 15
      %s540 = scalar_select %p539, %s35, 15
      %s541 = scalar_lea.vmem %s9, %s540
      %p542 = pneg %p242
      %p543 = pneg %p239
      %p544 = scmp.lt.s32.totalorder %s35, 15
      %s545 = scalar_select %p544, %s35, 15
      %s546 = smul.addr %s545, 4
      %s547 = smul.addr %s546, 8
      %s548 = scalar_lea.vmem %s10, %s547
      %p549 = pneg %p268
      %p550 = pneg %p265
      %p551 = scmp.lt.s32.totalorder %s35, 15
      %s552 = scalar_select %p551, %s35, 15
      %s553 = smul.addr %s552, 4
      %s554 = smul.addr %s553, 8
      %s555 = scalar_lea.vmem %s11, %s554
      %p556 = pneg %p294
      %p557 = pneg %p291
      %p558 = scmp.lt.s32.totalorder %s35, 15
      %s559 = scalar_select %p558, %s35, 15
      %s560 = smul.addr %s559, 4
      %s561 = smul.addr %s560, 8
      %s562 = scalar_lea.vmem %s12, %s561
      %p563 = pneg %p320
      %p564 = pneg %p317
      %p565 = scmp.lt.s32.totalorder %s35, 15
      %s566 = scalar_select %p565, %s35, 15
      %s567 = smul.addr %s566, 4
      %s568 = smul.addr %s567, 8
      %s569 = scalar_lea.vmem %s13, %s568
      %p570 = pneg %p346
      %p571 = pneg %p343
      %p572 = pneg %p372
      %p573 = pneg %p369
      %p574 = scmp.lt.s32.totalorder %s35, 15
      %s575 = scalar_select %p574, %s35, 15
      %s576 = smul.addr %s575, 4
      %s577 = smul.addr %s576, 8
      %s578 = scalar_lea.vmem %s14, %s577
      %s579 = sld [smem:[#allocation3 + %s35]]
      %p580 = scmp.lt.s32.totalorder %s579, 4
      %s581 = scalar_select %p580, %s579, 4
      %s582 = smul.addr %s581, 4
      %s583 = smul.addr %s582, 8
      %s584 = scalar_lea.vmem %s2, %s583
      %s585 = sld [smem:[#allocation3 + %s35]]
      %s586 = sld [smem:[#allocation4 + %s35]]
      %p587 = scmp.lt.s32.totalorder %s586, 4
      %s588 = scalar_select %p587, %s586, 4
      %s589 = smul.addr %s588, 4
      %s590 = smul.addr %s589, 8
      %s591 = scalar_lea.vmem %s3, %s590
      %s592 = sld [smem:[#allocation4 + %s35]]
      %p593 = scmp.lt.s32.totalorder %s35, 15
      %s594 = scalar_select %p593, %s35, 15
      %s595 = smul.addr %s594, 4
      %s596 = smul.addr %s595, 8
      %s597 = scalar_lea.vmem %s4, %s596
      %p598 = scmp.lt.s32.totalorder %s35, 15
      %s599 = scalar_select %p598, %s35, 15
      %s600 = scalar_lea.vmem %s5, %s599
      %p601 = scmp.lt.s32.totalorder %s35, 15
      %s602 = scalar_select %p601, %s35, 15
      %s603 = smul.addr %s602, 4
      %s604 = smul.addr %s603, 8
      %s605 = scalar_lea.vmem %s6, %s604
      %p606 = scmp.lt.s32.totalorder %s35, 15
      %s607 = scalar_select %p606, %s35, 15
      %s608 = scalar_lea.vmem %s7, %s607
      %p609 = scmp.lt.s32.totalorder %s35, 15
      %s610 = scalar_select %p609, %s35, 15
      %s611 = smul.addr %s610, 4
      %s612 = smul.addr %s611, 8
      %s613 = scalar_lea.vmem %s8, %s612
      %p614 = scmp.lt.s32.totalorder %s35, 15
      %s615 = scalar_select %p614, %s35, 15
      %s616 = scalar_lea.vmem %s9, %s615
      %p617 = scmp.lt.s32.totalorder %s35, 15
      %s618 = scalar_select %p617, %s35, 15
      %s619 = smul.addr %s618, 4
      %s620 = smul.addr %s619, 8
      %s621 = scalar_lea.vmem %s10, %s620
      %p622 = scmp.lt.s32.totalorder %s35, 15
      %s623 = scalar_select %p622, %s35, 15
      %s624 = smul.addr %s623, 4
      %s625 = smul.addr %s624, 8
      %s626 = scalar_lea.vmem %s11, %s625
      %p627 = scmp.lt.s32.totalorder %s35, 15
      %s628 = scalar_select %p627, %s35, 15
      %s629 = smul.addr %s628, 4
      %s630 = smul.addr %s629, 8
      %s631 = scalar_lea.vmem %s12, %s630
      %p632 = scmp.lt.s32.totalorder %s35, 15
      %s633 = scalar_select %p632, %s35, 15
      %s634 = smul.addr %s633, 4
      %s635 = smul.addr %s634, 8
      %s636 = scalar_lea.vmem %s13, %s635
      %p637 = scmp.lt.s32.totalorder %s35, 15
      %s638 = scalar_select %p637, %s35, 15
      %s639 = smul.addr %s638, 4
      %s640 = smul.addr %s639, 8
      %s641 = scalar_lea.vmem %s14, %s640
      %v642 = vld [vmem:[%s584] sm:$0xff]
      %v643 = vld [vmem:[%s584 + $0x8] sm:$0xff]
      %v644 = vld [vmem:[%s584 + $0x10] sm:$0xff]
      %v645 = vld [vmem:[%s584 + $0x18] sm:$0xff]
      %646 = vxpose.xlu0.b32.start [1/16] %v642, 128
      %647 = vxpose.xlu0.b32.cont [2/16] %v643, 128
      %648 = vxpose.xlu0.b32.cont [3/16] %v644, 128
      %649 = vxpose.xlu0.b32.cont [4/16] %v645, 128
      %650 = vxpose.xlu0.b32.cont [5/16] 0.0, 128
      %651 = vxpose.xlu0.b32.cont [6/16] 0.0, 128
      %652 = vxpose.xlu0.b32.cont [7/16] 0.0, 128
      %653 = vxpose.xlu0.b32.cont [8/16] 0.0, 128
      %654 = vxpose.xlu0.b32.cont [9/16] 0.0, 128
      %655 = vxpose.xlu0.b32.cont [10/16] 0.0, 128
      %656 = vxpose.xlu0.b32.cont [11/16] 0.0, 128
      %657 = vxpose.xlu0.b32.cont [12/16] 0.0, 128
      %658 = vxpose.xlu0.b32.cont [13/16] 0.0, 128
      %659 = vxpose.xlu0.b32.cont [14/16] 0.0, 128
      %660 = vxpose.xlu0.b32.cont [15/16] 0.0, 128
      %661 = vxpose.xlu0.b32.end [16/16] 0.0, 128
      %v662 = vpop.trf.xlu0
      %v663 = vpop.trf.xlu0
      %v664 = vpop.trf.xlu0
      %v665 = vpop.trf.xlu0
      %v666 = vpop.trf.xlu0
      %v667 = vpop.trf.xlu0
      %v668 = vpop.trf.xlu0
      %v669 = vpop.trf.xlu0
      %v670 = vpop.trf.xlu0
      %v671 = vpop.trf.xlu0
      %v672 = vpop.trf.xlu0
      %v673 = vpop.trf.xlu0
      %v674 = vpop.trf.xlu0
      %v675 = vpop.trf.xlu0
      %v676 = vpop.trf.xlu0
      %v677 = vpop.trf.xlu0
      %v678 = vld [vmem:[%s591] sm:$0xff]
      %v679 = vld [vmem:[%s591 + $0x8] sm:$0xff]
      %v680 = vld [vmem:[%s591 + $0x10] sm:$0xff]
      %v681 = vld [vmem:[%s591 + $0x18] sm:$0xff]
      %682 = vxpose.xlu0.b32.start [1/16] %v678, 128
      %683 = vxpose.xlu0.b32.cont [2/16] %v679, 128
      %684 = vxpose.xlu0.b32.cont [3/16] %v680, 128
      %685 = vxpose.xlu0.b32.cont [4/16] %v681, 128
      %686 = vxpose.xlu0.b32.cont [5/16] 0.0, 128
      %687 = vxpose.xlu0.b32.cont [6/16] 0.0, 128
      %688 = vxpose.xlu0.b32.cont [7/16] 0.0, 128
      %689 = vxpose.xlu0.b32.cont [8/16] 0.0, 128
      %690 = vxpose.xlu0.b32.cont [9/16] 0.0, 128
      %691 = vxpose.xlu0.b32.cont [10/16] 0.0, 128
      %692 = vxpose.xlu0.b32.cont [11/16] 0.0, 128
      %693 = vxpose.xlu0.b32.cont [12/16] 0.0, 128
      %694 = vxpose.xlu0.b32.cont [13/16] 0.0, 128
      %695 = vxpose.xlu0.b32.cont [14/16] 0.0, 128
      %696 = vxpose.xlu0.b32.cont [15/16] 0.0, 128
      %697 = vxpose.xlu0.b32.end [16/16] 0.0, 128
      %v698 = vpop.trf.xlu0
      %v699 = vpop.trf.xlu0
      %v700 = vpop.trf.xlu0
      %v701 = vpop.trf.xlu0
      %v702 = vpop.trf.xlu0
      %v703 = vpop.trf.xlu0
      %v704 = vpop.trf.xlu0
      %v705 = vpop.trf.xlu0
      %v706 = vpop.trf.xlu0
      %v707 = vpop.trf.xlu0
      %v708 = vpop.trf.xlu0
      %v709 = vpop.trf.xlu0
      %v710 = vpop.trf.xlu0
      %v711 = vpop.trf.xlu0
      %v712 = vpop.trf.xlu0
      %v713 = vpop.trf.xlu0
      %v714 = vld [vmem:[%s597] sm:$0xff]
      %v715 = vld [vmem:[%s597 + $0x8] sm:$0xff]
      %v716 = vld [vmem:[%s597 + $0x10] sm:$0xff]
      %v717 = vld [vmem:[%s597 + $0x18] sm:$0xff]
      %v718 = vld [vmem:[%s600] sm:$0x1]
      %v720 = vlaneseq
      %v721 = vshrl.u32 %v720, 7
      %v722 = vsub.s32 0, %v721
      %v723 = vrot.slane %v718, %v722
      %vm725 = vcmask 261120
      %v727 = vsel %vm725, %v662, 0
      %v730 = vsel %vm725, %v663, 0
      %v733 = vsel %vm725, %v664, 0
      %v736 = vsel %vm725, %v665, 0
      %v739 = vsel %vm725, %v666, 0
      %v742 = vsel %vm725, %v667, 0
      %v745 = vsel %vm725, %v668, 0
      %v748 = vsel %vm725, %v669, 0
      %v751 = vsel %vm725, %v670, 0
      %v754 = vsel %vm725, %v671, 0
      %v757 = vsel %vm725, %v672, 0
      %v760 = vsel %vm725, %v673, 0
      %v763 = vsel %vm725, %v674, 0
      %v766 = vsel %vm725, %v675, 0
      %v769 = vsel %vm725, %v676, 0
      %v772 = vsel %vm725, %v677, 0
      %774 = vmatprep.subr.mxu0 0.0
      %775 = vmatpush1.msra.mxu0 0.0
      %776 = vmatprep.subr.mxu0 0.0
      %777 = vmatpush1.msra.mxu0 0.0
      %778 = vmatprep.subr.mxu0 0.0
      %779 = vmatpush1.msra.mxu0 0.0
      %780 = vmatprep.subr.mxu0 0.0
      %781 = vmatpush1.msra.mxu0 0.0
      %782 = vmatprep.subr.mxu0 0.0
      %783 = vmatpush1.msra.mxu0 0.0
      %784 = vmatprep.subr.mxu0 0.0
      %785 = vmatpush1.msra.mxu0 0.0
      %786 = vmatprep.subr.mxu0 0.0
      %787 = vmatpush1.msra.mxu0 0.0
      %788 = vmatprep.subr.mxu0 0.0
      %789 = vmatpush1.msra.mxu0 0.0
      %790 = vmatprep.subr.mxu0 0.0
      %791 = vmatpush1.msra.mxu0 0.0
      %792 = vmatprep.subr.mxu0 0.0
      %793 = vmatpush1.msra.mxu0 0.0
      %794 = vmatprep.subr.mxu0 0.0
      %795 = vmatpush1.msra.mxu0 0.0
      %796 = vmatprep.subr.mxu0 0.0
      %797 = vmatpush1.msra.mxu0 0.0
      %798 = vmatprep.subr.mxu0 0.0
      %799 = vmatpush1.msra.mxu0 %v717
      %800 = vmatprep.subr.mxu0 0.0
      %801 = vmatpush1.msra.mxu0 %v716
      %802 = vmatprep.subr.mxu0 0.0
      %803 = vmatpush1.msra.mxu0 %v715
      %804 = vmatprep.subr.mxu0 0.0
      %805 = vmatpush1.msra.mxu0 %v714
      %806 = vmatprep.subr.mxu0 0.0
      %807 = vmatpush2.msra.mxu0 0.0
      %808 = vmatprep.subr.mxu0 0.0
      %809 = vmatpush2.msra.mxu0 0.0
      %810 = vmatprep.subr.mxu0 0.0
      %811 = vmatpush2.msra.mxu0 0.0
      %812 = vmatprep.subr.mxu0 0.0
      %813 = vmatpush2.msra.mxu0 0.0
      %814 = vmatprep.subr.mxu0 0.0
      %815 = vmatpush2.msra.mxu0 0.0
      %816 = vmatprep.subr.mxu0 0.0
      %817 = vmatpush2.msra.mxu0 0.0
      %818 = vmatprep.subr.mxu0 0.0
      %819 = vmatpush2.msra.mxu0 0.0
      %820 = vmatprep.subr.mxu0 0.0
      %821 = vmatpush2.msra.mxu0 0.0
      %822 = vmatprep.subr.mxu0 0.0
      %823 = vmatpush2.msra.mxu0 0.0
      %824 = vmatprep.subr.mxu0 0.0
      %825 = vmatpush2.msra.mxu0 0.0
      %826 = vmatprep.subr.mxu0 0.0
      %827 = vmatpush2.msra.mxu0 0.0
      %828 = vmatprep.subr.mxu0 0.0
      %829 = vmatpush2.msra.mxu0 0.0
      %830 = vmatprep.subr.mxu0 0.0
      %831 = vmatpush2.msra.mxu0 0.0
      %832 = vmatprep.subr.mxu0 0.0
      %833 = vmatpush2.msra.mxu0 0.0
      %834 = vmatprep.subr.mxu0 0.0
      %835 = vmatpush2.msra.mxu0 0.0
      %836 = vmatprep.subr.mxu0 0.0
      %837 = vmatpush2.msra.mxu0 0.0
      %838 = vmatprep.mubr.f32.mxu0 0.0
      %839 = vmatmul.mubr.f32.gmra.mxu0 %v727
      %v840 = vpop.f32.mrf.mxu0
      %v841 = vadd.f32 %v723, %v840
      %v842 = vpop.f32.mrf.mxu0
      %843 = vmatprep.mubr.f32.mxu0 0.0
      %844 = vmatmul.mubr.f32.gmra.mxu0 %v730
      %v845 = vpop.f32.mrf.mxu0
      %v846 = vadd.f32 %v723, %v845
      %v847 = vpop.f32.mrf.mxu0
      %848 = vmatprep.mubr.f32.mxu0 0.0
      %849 = vmatmul.mubr.f32.gmra.mxu0 %v733
      %v850 = vpop.f32.mrf.mxu0
      %v851 = vadd.f32 %v723, %v850
      %v852 = vpop.f32.mrf.mxu0
      %853 = vmatprep.mubr.f32.mxu0 0.0
      %854 = vmatmul.mubr.f32.gmra.mxu0 %v736
      %v855 = vpop.f32.mrf.mxu0
      %v856 = vadd.f32 %v723, %v855
      %v857 = vpop.f32.mrf.mxu0
      %858 = vmatprep.mubr.f32.mxu0 0.0
      %859 = vmatmul.mubr.f32.gmra.mxu0 %v739
      %v860 = vpop.f32.mrf.mxu0
      %v861 = vadd.f32 %v723, %v860
      %v862 = vpop.f32.mrf.mxu0
      %863 = vmatprep.mubr.f32.mxu0 0.0
      %864 = vmatmul.mubr.f32.gmra.mxu0 %v742
      %v865 = vpop.f32.mrf.mxu0
      %v866 = vadd.f32 %v723, %v865
      %v867 = vpop.f32.mrf.mxu0
      %868 = vmatprep.mubr.f32.mxu0 0.0
      %869 = vmatmul.mubr.f32.gmra.mxu0 %v745
      %v870 = vpop.f32.mrf.mxu0
      %v871 = vadd.f32 %v723, %v870
      %v872 = vpop.f32.mrf.mxu0
      %873 = vmatprep.mubr.f32.mxu0 0.0
      %874 = vmatmul.mubr.f32.gmra.mxu0 %v748
      %v875 = vpop.f32.mrf.mxu0
      %v876 = vadd.f32 %v723, %v875
      %v877 = vpop.f32.mrf.mxu0
      %878 = vmatprep.mubr.f32.mxu0 0.0
      %879 = vmatmul.mubr.f32.gmra.mxu0 %v751
      %v880 = vpop.f32.mrf.mxu0
      %v881 = vadd.f32 %v723, %v880
      %v882 = vpop.f32.mrf.mxu0
      %883 = vmatprep.mubr.f32.mxu0 0.0
      %884 = vmatmul.mubr.f32.gmra.mxu0 %v754
      %v885 = vpop.f32.mrf.mxu0
      %v886 = vadd.f32 %v723, %v885
      %v887 = vpop.f32.mrf.mxu0
      %888 = vmatprep.mubr.f32.mxu0 0.0
      %889 = vmatmul.mubr.f32.gmra.mxu0 %v757
      %v890 = vpop.f32.mrf.mxu0
      %v891 = vadd.f32 %v723, %v890
      %v892 = vpop.f32.mrf.mxu0
      %893 = vmatprep.mubr.f32.mxu0 0.0
      %894 = vmatmul.mubr.f32.gmra.mxu0 %v760
      %v895 = vpop.f32.mrf.mxu0
      %v896 = vadd.f32 %v723, %v895
      %v897 = vpop.f32.mrf.mxu0
      %898 = vmatprep.mubr.f32.mxu0 0.0
      %899 = vmatmul.mubr.f32.gmra.mxu0 %v763
      %v900 = vpop.f32.mrf.mxu0
      %v901 = vadd.f32 %v723, %v900
      %v902 = vpop.f32.mrf.mxu0
      %903 = vmatprep.mubr.f32.mxu0 0.0
      %904 = vmatmul.mubr.f32.gmra.mxu0 %v766
      %v905 = vpop.f32.mrf.mxu0
      %v906 = vadd.f32 %v723, %v905
      %v907 = vpop.f32.mrf.mxu0
      %908 = vmatprep.mubr.f32.mxu0 0.0
      %909 = vmatmul.mubr.f32.gmra.mxu0 %v769
      %v910 = vpop.f32.mrf.mxu0
      %v911 = vadd.f32 %v723, %v910
      %v912 = vpop.f32.mrf.mxu0
      %913 = vmatprep.mubr.f32.mxu0 0.0
      %914 = vmatmul.mubr.f32.gmra.mxu0 %v772
      %v915 = vpop.f32.mrf.mxu0
      %v916 = vadd.f32 %v723, %v915
      %v917 = vpop.f32.mrf.mxu0
      %918 = vdwg.mxu0
      %v919 = vld [vmem:[%s605] sm:$0xff]
      %v920 = vld [vmem:[%s605 + $0x8] sm:$0xff]
      %v921 = vld [vmem:[%s605 + $0x10] sm:$0xff]
      %v922 = vld [vmem:[%s605 + $0x18] sm:$0xff]
      %v923 = vld [vmem:[%s608] sm:$0x1]
      %v925 = vlaneseq
      %v926 = vshrl.u32 %v925, 7
      %v927 = vsub.s32 0, %v926
      %v928 = vrot.slane %v923, %v927
      %v931 = vsel %vm725, %v698, 0
      %v934 = vsel %vm725, %v699, 0
      %v937 = vsel %vm725, %v700, 0
      %v940 = vsel %vm725, %v701, 0
      %v943 = vsel %vm725, %v702, 0
      %v946 = vsel %vm725, %v703, 0
      %v949 = vsel %vm725, %v704, 0
      %v952 = vsel %vm725, %v705, 0
      %v955 = vsel %vm725, %v706, 0
      %v958 = vsel %vm725, %v707, 0
      %v961 = vsel %vm725, %v708, 0
      %v964 = vsel %vm725, %v709, 0
      %v967 = vsel %vm725, %v710, 0
      %v970 = vsel %vm725, %v711, 0
      %v973 = vsel %vm725, %v712, 0
      %v976 = vsel %vm725, %v713, 0
      %978 = vmatprep.subr.mxu0 0.0
      %979 = vmatpush1.msra.mxu0 0.0
      %980 = vmatprep.subr.mxu0 0.0
      %981 = vmatpush1.msra.mxu0 0.0
      %982 = vmatprep.subr.mxu0 0.0
      %983 = vmatpush1.msra.mxu0 0.0
      %984 = vmatprep.subr.mxu0 0.0
      %985 = vmatpush1.msra.mxu0 0.0
      %986 = vmatprep.subr.mxu0 0.0
      %987 = vmatpush1.msra.mxu0 0.0
      %988 = vmatprep.subr.mxu0 0.0
      %989 = vmatpush1.msra.mxu0 0.0
      %990 = vmatprep.subr.mxu0 0.0
      %991 = vmatpush1.msra.mxu0 0.0
      %992 = vmatprep.subr.mxu0 0.0
      %993 = vmatpush1.msra.mxu0 0.0
      %994 = vmatprep.subr.mxu0 0.0
      %995 = vmatpush1.msra.mxu0 0.0
      %996 = vmatprep.subr.mxu0 0.0
      %997 = vmatpush1.msra.mxu0 0.0
      %998 = vmatprep.subr.mxu0 0.0
      %999 = vmatpush1.msra.mxu0 0.0
      %1000 = vmatprep.subr.mxu0 0.0
      %1001 = vmatpush1.msra.mxu0 0.0
      %1002 = vmatprep.subr.mxu0 0.0
      %1003 = vmatpush1.msra.mxu0 %v922
      %1004 = vmatprep.subr.mxu0 0.0
      %1005 = vmatpush1.msra.mxu0 %v921
      %1006 = vmatprep.subr.mxu0 0.0
      %1007 = vmatpush1.msra.mxu0 %v920
      %1008 = vmatprep.subr.mxu0 0.0
      %1009 = vmatpush1.msra.mxu0 %v919
      %1010 = vmatprep.subr.mxu0 0.0
      %1011 = vmatpush2.msra.mxu0 0.0
      %1012 = vmatprep.subr.mxu0 0.0
      %1013 = vmatpush2.msra.mxu0 0.0
      %1014 = vmatprep.subr.mxu0 0.0
      %1015 = vmatpush2.msra.mxu0 0.0
      %1016 = vmatprep.subr.mxu0 0.0
      %1017 = vmatpush2.msra.mxu0 0.0
      %1018 = vmatprep.subr.mxu0 0.0
      %1019 = vmatpush2.msra.mxu0 0.0
      %1020 = vmatprep.subr.mxu0 0.0
      %1021 = vmatpush2.msra.mxu0 0.0
      %1022 = vmatprep.subr.mxu0 0.0
      %1023 = vmatpush2.msra.mxu0 0.0
      %1024 = vmatprep.subr.mxu0 0.0
      %1025 = vmatpush2.msra.mxu0 0.0
      %1026 = vmatprep.subr.mxu0 0.0
      %1027 = vmatpush2.msra.mxu0 0.0
      %1028 = vmatprep.subr.mxu0 0.0
      %1029 = vmatpush2.msra.mxu0 0.0
      %1030 = vmatprep.subr.mxu0 0.0
      %1031 = vmatpush2.msra.mxu0 0.0
      %1032 = vmatprep.subr.mxu0 0.0
      %1033 = vmatpush2.msra.mxu0 0.0
      %1034 = vmatprep.subr.mxu0 0.0
      %1035 = vmatpush2.msra.mxu0 0.0
      %1036 = vmatprep.subr.mxu0 0.0
      %1037 = vmatpush2.msra.mxu0 0.0
      %1038 = vmatprep.subr.mxu0 0.0
      %1039 = vmatpush2.msra.mxu0 0.0
      %1040 = vmatprep.subr.mxu0 0.0
      %1041 = vmatpush2.msra.mxu0 0.0
      %1042 = vmatprep.mubr.f32.mxu0 0.0
      %1043 = vmatmul.mubr.f32.gmra.mxu0 %v931
      %v1044 = vpop.f32.mrf.mxu0
      %v1045 = vadd.f32 %v928, %v1044
      %v1046 = vpop.f32.mrf.mxu0
      %1047 = vmatprep.mubr.f32.mxu0 0.0
      %1048 = vmatmul.mubr.f32.gmra.mxu0 %v934
      %v1049 = vpop.f32.mrf.mxu0
      %v1050 = vadd.f32 %v928, %v1049
      %v1051 = vpop.f32.mrf.mxu0
      %1052 = vmatprep.mubr.f32.mxu0 0.0
      %1053 = vmatmul.mubr.f32.gmra.mxu0 %v937
      %v1054 = vpop.f32.mrf.mxu0
      %v1055 = vadd.f32 %v928, %v1054
      %v1056 = vpop.f32.mrf.mxu0
      %1057 = vmatprep.mubr.f32.mxu0 0.0
      %1058 = vmatmul.mubr.f32.gmra.mxu0 %v940
      %v1059 = vpop.f32.mrf.mxu0
      %v1060 = vadd.f32 %v928, %v1059
      %v1061 = vpop.f32.mrf.mxu0
      %1062 = vmatprep.mubr.f32.mxu0 0.0
      %1063 = vmatmul.mubr.f32.gmra.mxu0 %v943
      %v1064 = vpop.f32.mrf.mxu0
      %v1065 = vadd.f32 %v928, %v1064
      %v1066 = vpop.f32.mrf.mxu0
      %1067 = vmatprep.mubr.f32.mxu0 0.0
      %1068 = vmatmul.mubr.f32.gmra.mxu0 %v946
      %v1069 = vpop.f32.mrf.mxu0
      %v1070 = vadd.f32 %v928, %v1069
      %v1071 = vpop.f32.mrf.mxu0
      %1072 = vmatprep.mubr.f32.mxu0 0.0
      %1073 = vmatmul.mubr.f32.gmra.mxu0 %v949
      %v1074 = vpop.f32.mrf.mxu0
      %v1075 = vadd.f32 %v928, %v1074
      %v1076 = vpop.f32.mrf.mxu0
      %1077 = vmatprep.mubr.f32.mxu0 0.0
      %1078 = vmatmul.mubr.f32.gmra.mxu0 %v952
      %v1079 = vpop.f32.mrf.mxu0
      %v1080 = vadd.f32 %v928, %v1079
      %v1081 = vpop.f32.mrf.mxu0
      %1082 = vmatprep.mubr.f32.mxu0 0.0
      %1083 = vmatmul.mubr.f32.gmra.mxu0 %v955
      %v1084 = vpop.f32.mrf.mxu0
      %v1085 = vadd.f32 %v928, %v1084
      %v1086 = vpop.f32.mrf.mxu0
      %1087 = vmatprep.mubr.f32.mxu0 0.0
      %1088 = vmatmul.mubr.f32.gmra.mxu0 %v958
      %v1089 = vpop.f32.mrf.mxu0
      %v1090 = vadd.f32 %v928, %v1089
      %v1091 = vpop.f32.mrf.mxu0
      %1092 = vmatprep.mubr.f32.mxu0 0.0
      %1093 = vmatmul.mubr.f32.gmra.mxu0 %v961
      %v1094 = vpop.f32.mrf.mxu0
      %v1095 = vadd.f32 %v928, %v1094
      %v1096 = vpop.f32.mrf.mxu0
      %1097 = vmatprep.mubr.f32.mxu0 0.0
      %1098 = vmatmul.mubr.f32.gmra.mxu0 %v964
      %v1099 = vpop.f32.mrf.mxu0
      %v1100 = vadd.f32 %v928, %v1099
      %v1101 = vpop.f32.mrf.mxu0
      %1102 = vmatprep.mubr.f32.mxu0 0.0
      %1103 = vmatmul.mubr.f32.gmra.mxu0 %v967
      %v1104 = vpop.f32.mrf.mxu0
      %v1105 = vadd.f32 %v928, %v1104
      %v1106 = vpop.f32.mrf.mxu0
      %1107 = vmatprep.mubr.f32.mxu0 0.0
      %1108 = vmatmul.mubr.f32.gmra.mxu0 %v970
      %v1109 = vpop.f32.mrf.mxu0
      %v1110 = vadd.f32 %v928, %v1109
      %v1111 = vpop.f32.mrf.mxu0
      %1112 = vmatprep.mubr.f32.mxu0 0.0
      %1113 = vmatmul.mubr.f32.gmra.mxu0 %v973
      %v1114 = vpop.f32.mrf.mxu0
      %v1115 = vadd.f32 %v928, %v1114
      %v1116 = vpop.f32.mrf.mxu0
      %1117 = vmatprep.mubr.f32.mxu0 0.0
      %1118 = vmatmul.mubr.f32.gmra.mxu0 %v976
      %v1119 = vpop.f32.mrf.mxu0
      %v1120 = vadd.f32 %v928, %v1119
      %v1121 = vpop.f32.mrf.mxu0
      %1122 = vdwg.mxu0
      %v1123 = vld [vmem:[%s613] sm:$0xff]
      %v1124 = vld [vmem:[%s613 + $0x8] sm:$0xff]
      %v1125 = vld [vmem:[%s613 + $0x10] sm:$0xff]
      %v1126 = vld [vmem:[%s613 + $0x18] sm:$0xff]
      %v1127 = vld [vmem:[%s616] sm:$0x1]
      %v1129 = vlaneseq
      %v1130 = vshrl.u32 %v1129, 7
      %v1131 = vsub.s32 0, %v1130
      %v1132 = vrot.slane %v1127, %v1131
      %1134 = vmatprep.subr.mxu0 0.0
      %1135 = vmatpush1.msra.mxu0 0.0
      %1136 = vmatprep.subr.mxu0 0.0
      %1137 = vmatpush1.msra.mxu0 0.0
      %1138 = vmatprep.subr.mxu0 0.0
      %1139 = vmatpush1.msra.mxu0 0.0
      %1140 = vmatprep.subr.mxu0 0.0
      %1141 = vmatpush1.msra.mxu0 0.0
      %1142 = vmatprep.subr.mxu0 0.0
      %1143 = vmatpush1.msra.mxu0 0.0
      %1144 = vmatprep.subr.mxu0 0.0
      %1145 = vmatpush1.msra.mxu0 0.0
      %1146 = vmatprep.subr.mxu0 0.0
      %1147 = vmatpush1.msra.mxu0 0.0
      %1148 = vmatprep.subr.mxu0 0.0
      %1149 = vmatpush1.msra.mxu0 0.0
      %1150 = vmatprep.subr.mxu0 0.0
      %1151 = vmatpush1.msra.mxu0 0.0
      %1152 = vmatprep.subr.mxu0 0.0
      %1153 = vmatpush1.msra.mxu0 0.0
      %1154 = vmatprep.subr.mxu0 0.0
      %1155 = vmatpush1.msra.mxu0 0.0
      %1156 = vmatprep.subr.mxu0 0.0
      %1157 = vmatpush1.msra.mxu0 0.0
      %1158 = vmatprep.subr.mxu0 0.0
      %1159 = vmatpush1.msra.mxu0 %v1126
      %1160 = vmatprep.subr.mxu0 0.0
      %1161 = vmatpush1.msra.mxu0 %v1125
      %1162 = vmatprep.subr.mxu0 0.0
      %1163 = vmatpush1.msra.mxu0 %v1124
      %1164 = vmatprep.subr.mxu0 0.0
      %1165 = vmatpush1.msra.mxu0 %v1123
      %1166 = vmatprep.subr.mxu0 0.0
      %1167 = vmatpush2.msra.mxu0 0.0
      %1168 = vmatprep.subr.mxu0 0.0
      %1169 = vmatpush2.msra.mxu0 0.0
      %1170 = vmatprep.subr.mxu0 0.0
      %1171 = vmatpush2.msra.mxu0 0.0
      %1172 = vmatprep.subr.mxu0 0.0
      %1173 = vmatpush2.msra.mxu0 0.0
      %1174 = vmatprep.subr.mxu0 0.0
      %1175 = vmatpush2.msra.mxu0 0.0
      %1176 = vmatprep.subr.mxu0 0.0
      %1177 = vmatpush2.msra.mxu0 0.0
      %1178 = vmatprep.subr.mxu0 0.0
      %1179 = vmatpush2.msra.mxu0 0.0
      %1180 = vmatprep.subr.mxu0 0.0
      %1181 = vmatpush2.msra.mxu0 0.0
      %1182 = vmatprep.subr.mxu0 0.0
      %1183 = vmatpush2.msra.mxu0 0.0
      %1184 = vmatprep.subr.mxu0 0.0
      %1185 = vmatpush2.msra.mxu0 0.0
      %1186 = vmatprep.subr.mxu0 0.0
      %1187 = vmatpush2.msra.mxu0 0.0
      %1188 = vmatprep.subr.mxu0 0.0
      %1189 = vmatpush2.msra.mxu0 0.0
      %1190 = vmatprep.subr.mxu0 0.0
      %1191 = vmatpush2.msra.mxu0 0.0
      %1192 = vmatprep.subr.mxu0 0.0
      %1193 = vmatpush2.msra.mxu0 0.0
      %1194 = vmatprep.subr.mxu0 0.0
      %1195 = vmatpush2.msra.mxu0 0.0
      %1196 = vmatprep.subr.mxu0 0.0
      %1197 = vmatpush2.msra.mxu0 0.0
      %1198 = vmatprep.mubr.f32.mxu0 0.0
      %1199 = vmatmul.mubr.f32.gmra.mxu0 %v931
      %v1200 = vpop.f32.mrf.mxu0
      %v1201 = vadd.f32 %v1132, %v1200
      %v1202 = vpop.f32.mrf.mxu0
      %1203 = vmatprep.mubr.f32.mxu0 0.0
      %1204 = vmatmul.mubr.f32.gmra.mxu0 %v934
      %v1205 = vpop.f32.mrf.mxu0
      %v1206 = vadd.f32 %v1132, %v1205
      %v1207 = vpop.f32.mrf.mxu0
      %1208 = vmatprep.mubr.f32.mxu0 0.0
      %1209 = vmatmul.mubr.f32.gmra.mxu0 %v937
      %v1210 = vpop.f32.mrf.mxu0
      %v1211 = vadd.f32 %v1132, %v1210
      %v1212 = vpop.f32.mrf.mxu0
      %1213 = vmatprep.mubr.f32.mxu0 0.0
      %1214 = vmatmul.mubr.f32.gmra.mxu0 %v940
      %v1215 = vpop.f32.mrf.mxu0
      %v1216 = vadd.f32 %v1132, %v1215
      %v1217 = vpop.f32.mrf.mxu0
      %1218 = vmatprep.mubr.f32.mxu0 0.0
      %1219 = vmatmul.mubr.f32.gmra.mxu0 %v943
      %v1220 = vpop.f32.mrf.mxu0
      %v1221 = vadd.f32 %v1132, %v1220
      %v1222 = vpop.f32.mrf.mxu0
      %1223 = vmatprep.mubr.f32.mxu0 0.0
      %1224 = vmatmul.mubr.f32.gmra.mxu0 %v946
      %v1225 = vpop.f32.mrf.mxu0
      %v1226 = vadd.f32 %v1132, %v1225
      %v1227 = vpop.f32.mrf.mxu0
      %1228 = vmatprep.mubr.f32.mxu0 0.0
      %1229 = vmatmul.mubr.f32.gmra.mxu0 %v949
      %v1230 = vpop.f32.mrf.mxu0
      %v1231 = vadd.f32 %v1132, %v1230
      %v1232 = vpop.f32.mrf.mxu0
      %1233 = vmatprep.mubr.f32.mxu0 0.0
      %1234 = vmatmul.mubr.f32.gmra.mxu0 %v952
      %v1235 = vpop.f32.mrf.mxu0
      %v1236 = vadd.f32 %v1132, %v1235
      %v1237 = vpop.f32.mrf.mxu0
      %1238 = vmatprep.mubr.f32.mxu0 0.0
      %1239 = vmatmul.mubr.f32.gmra.mxu0 %v955
      %v1240 = vpop.f32.mrf.mxu0
      %v1241 = vadd.f32 %v1132, %v1240
      %v1242 = vpop.f32.mrf.mxu0
      %1243 = vmatprep.mubr.f32.mxu0 0.0
      %1244 = vmatmul.mubr.f32.gmra.mxu0 %v958
      %v1245 = vpop.f32.mrf.mxu0
      %v1246 = vadd.f32 %v1132, %v1245
      %v1247 = vpop.f32.mrf.mxu0
      %1248 = vmatprep.mubr.f32.mxu0 0.0
      %1249 = vmatmul.mubr.f32.gmra.mxu0 %v961
      %v1250 = vpop.f32.mrf.mxu0
      %v1251 = vadd.f32 %v1132, %v1250
      %v1252 = vpop.f32.mrf.mxu0
      %1253 = vmatprep.mubr.f32.mxu0 0.0
      %1254 = vmatmul.mubr.f32.gmra.mxu0 %v964
      %v1255 = vpop.f32.mrf.mxu0
      %v1256 = vadd.f32 %v1132, %v1255
      %v1257 = vpop.f32.mrf.mxu0
      %1258 = vmatprep.mubr.f32.mxu0 0.0
      %1259 = vmatmul.mubr.f32.gmra.mxu0 %v967
      %v1260 = vpop.f32.mrf.mxu0
      %v1261 = vadd.f32 %v1132, %v1260
      %v1262 = vpop.f32.mrf.mxu0
      %1263 = vmatprep.mubr.f32.mxu0 0.0
      %1264 = vmatmul.mubr.f32.gmra.mxu0 %v970
      %v1265 = vpop.f32.mrf.mxu0
      %v1266 = vadd.f32 %v1132, %v1265
      %v1267 = vpop.f32.mrf.mxu0
      %1268 = vmatprep.mubr.f32.mxu0 0.0
      %1269 = vmatmul.mubr.f32.gmra.mxu0 %v973
      %v1270 = vpop.f32.mrf.mxu0
      %v1271 = vadd.f32 %v1132, %v1270
      %v1272 = vpop.f32.mrf.mxu0
      %1273 = vmatprep.mubr.f32.mxu0 0.0
      %1274 = vmatmul.mubr.f32.gmra.mxu0 %v976
      %v1275 = vpop.f32.mrf.mxu0
      %v1276 = vadd.f32 %v1132, %v1275
      %v1277 = vpop.f32.mrf.mxu0
      %1278 = vdwg.mxu0
      %v1279 = vmul.f32 %v841, 0.17677669
      %v1280 = vmul.f32 %v846, 0.17677669
      %v1281 = vmul.f32 %v851, 0.17677669
      %v1282 = vmul.f32 %v856, 0.17677669
      %v1283 = vmul.f32 %v861, 0.17677669
      %v1284 = vmul.f32 %v866, 0.17677669
      %v1285 = vmul.f32 %v871, 0.17677669
      %v1286 = vmul.f32 %v876, 0.17677669
      %v1287 = vmul.f32 %v881, 0.17677669
      %v1288 = vmul.f32 %v886, 0.17677669
      %v1289 = vmul.f32 %v891, 0.17677669
      %v1290 = vmul.f32 %v896, 0.17677669
      %v1291 = vmul.f32 %v901, 0.17677669
      %v1292 = vmul.f32 %v906, 0.17677669
      %v1293 = vmul.f32 %v911, 0.17677669
      %v1294 = vmul.f32 %v916, 0.17677669
      %v1296 = vsel %vm725, %v1279, 0
      %v1299 = vsel %vm725, %v1280, 0
      %v1302 = vsel %vm725, %v1281, 0
      %v1305 = vsel %vm725, %v1282, 0
      %v1308 = vsel %vm725, %v1283, 0
      %v1311 = vsel %vm725, %v1284, 0
      %v1314 = vsel %vm725, %v1285, 0
      %v1317 = vsel %vm725, %v1286, 0
      %v1320 = vsel %vm725, %v1045, 0
      %v1323 = vsel %vm725, %v1050, 0
      %v1326 = vsel %vm725, %v1055, 0
      %v1329 = vsel %vm725, %v1060, 0
      %v1332 = vsel %vm725, %v1065, 0
      %v1335 = vsel %vm725, %v1070, 0
      %v1338 = vsel %vm725, %v1075, 0
      %v1341 = vsel %vm725, %v1080, 0
      %1343 = vmatprep.subr.mxu0 0.0
      %1344 = vmatpush1.xpose.msra.mxu0 0.0
      %1345 = vmatprep.subr.mxu0 0.0
      %1346 = vmatpush1.xpose.msra.mxu0 0.0
      %1347 = vmatprep.subr.mxu0 0.0
      %1348 = vmatpush1.xpose.msra.mxu0 0.0
      %1349 = vmatprep.subr.mxu0 0.0
      %1350 = vmatpush1.xpose.msra.mxu0 0.0
      %1351 = vmatprep.subr.mxu0 0.0
      %1352 = vmatpush1.xpose.msra.mxu0 0.0
      %1353 = vmatprep.subr.mxu0 0.0
      %1354 = vmatpush1.xpose.msra.mxu0 0.0
      %1355 = vmatprep.subr.mxu0 0.0
      %1356 = vmatpush1.xpose.msra.mxu0 0.0
      %1357 = vmatprep.subr.mxu0 0.0
      %1358 = vmatpush1.xpose.msra.mxu0 0.0
      %1359 = vmatprep.subr.mxu0 0.0
      %1360 = vmatpush1.xpose.msra.mxu0 %v1341
      %1361 = vmatprep.subr.mxu0 0.0
      %1362 = vmatpush1.xpose.msra.mxu0 %v1338
      %1363 = vmatprep.subr.mxu0 0.0
      %1364 = vmatpush1.xpose.msra.mxu0 %v1335
      %1365 = vmatprep.subr.mxu0 0.0
      %1366 = vmatpush1.xpose.msra.mxu0 %v1332
      %1367 = vmatprep.subr.mxu0 0.0
      %1368 = vmatpush1.xpose.msra.mxu0 %v1329
      %1369 = vmatprep.subr.mxu0 0.0
      %1370 = vmatpush1.xpose.msra.mxu0 %v1326
      %1371 = vmatprep.subr.mxu0 0.0
      %1372 = vmatpush1.xpose.msra.mxu0 %v1323
      %1373 = vmatprep.subr.mxu0 0.0
      %1374 = vmatpush1.xpose.msra.mxu0 %v1320
      %1375 = vmatprep.subr.mxu0 0.0
      %1376 = vmatpush2.xpose.msra.mxu0 0.0
      %1377 = vmatprep.subr.mxu0 0.0
      %1378 = vmatpush2.xpose.msra.mxu0 0.0
      %1379 = vmatprep.subr.mxu0 0.0
      %1380 = vmatpush2.xpose.msra.mxu0 0.0
      %1381 = vmatprep.subr.mxu0 0.0
      %1382 = vmatpush2.xpose.msra.mxu0 0.0
      %1383 = vmatprep.subr.mxu0 0.0
      %1384 = vmatpush2.xpose.msra.mxu0 0.0
      %1385 = vmatprep.subr.mxu0 0.0
      %1386 = vmatpush2.xpose.msra.mxu0 0.0
      %1387 = vmatprep.subr.mxu0 0.0
      %1388 = vmatpush2.xpose.msra.mxu0 0.0
      %1389 = vmatprep.subr.mxu0 0.0
      %1390 = vmatpush2.xpose.msra.mxu0 0.0
      %1391 = vmatprep.subr.mxu0 0.0
      %1392 = vmatpush2.xpose.msra.mxu0 0.0
      %1393 = vmatprep.subr.mxu0 0.0
      %1394 = vmatpush2.xpose.msra.mxu0 0.0
      %1395 = vmatprep.subr.mxu0 0.0
      %1396 = vmatpush2.xpose.msra.mxu0 0.0
      %1397 = vmatprep.subr.mxu0 0.0
      %1398 = vmatpush2.xpose.msra.mxu0 0.0
      %1399 = vmatprep.subr.mxu0 0.0
      %1400 = vmatpush2.xpose.msra.mxu0 0.0
      %1401 = vmatprep.subr.mxu0 0.0
      %1402 = vmatpush2.xpose.msra.mxu0 0.0
      %1403 = vmatprep.subr.mxu0 0.0
      %1404 = vmatpush2.xpose.msra.mxu0 0.0
      %1405 = vmatprep.subr.mxu0 0.0
      %1406 = vmatpush2.xpose.msra.mxu0 0.0
      %1407 = vmatprep.mubr.f32.mxu0 0.0
      %1408 = vmatmul.mubr.f32.gmra.mxu0 %v1296
      %v1409 = vpop.f32.mrf.mxu0
      %v1410 = vadd.f32 0.0, %v1409
      %v1411 = vpop.f32.mrf.mxu0
      %1412 = vmatprep.mubr.f32.mxu0 0.0
      %1413 = vmatmul.mubr.f32.gmra.mxu0 %v1299
      %v1414 = vpop.f32.mrf.mxu0
      %v1415 = vadd.f32 0.0, %v1414
      %v1416 = vpop.f32.mrf.mxu0
      %1417 = vmatprep.mubr.f32.mxu0 0.0
      %1418 = vmatmul.mubr.f32.gmra.mxu0 %v1302
      %v1419 = vpop.f32.mrf.mxu0
      %v1420 = vadd.f32 0.0, %v1419
      %v1421 = vpop.f32.mrf.mxu0
      %1422 = vmatprep.mubr.f32.mxu0 0.0
      %1423 = vmatmul.mubr.f32.gmra.mxu0 %v1305
      %v1424 = vpop.f32.mrf.mxu0
      %v1425 = vadd.f32 0.0, %v1424
      %v1426 = vpop.f32.mrf.mxu0
      %1427 = vmatprep.mubr.f32.mxu0 0.0
      %1428 = vmatmul.mubr.f32.gmra.mxu0 %v1308
      %v1429 = vpop.f32.mrf.mxu0
      %v1430 = vadd.f32 0.0, %v1429
      %v1431 = vpop.f32.mrf.mxu0
      %1432 = vmatprep.mubr.f32.mxu0 0.0
      %1433 = vmatmul.mubr.f32.gmra.mxu0 %v1311
      %v1434 = vpop.f32.mrf.mxu0
      %v1435 = vadd.f32 0.0, %v1434
      %v1436 = vpop.f32.mrf.mxu0
      %1437 = vmatprep.mubr.f32.mxu0 0.0
      %1438 = vmatmul.mubr.f32.gmra.mxu0 %v1314
      %v1439 = vpop.f32.mrf.mxu0
      %v1440 = vadd.f32 0.0, %v1439
      %v1441 = vpop.f32.mrf.mxu0
      %1442 = vmatprep.mubr.f32.mxu0 0.0
      %1443 = vmatmul.mubr.f32.gmra.mxu0 %v1317
      %v1444 = vpop.f32.mrf.mxu0
      %v1445 = vadd.f32 0.0, %v1444
      %v1446 = vpop.f32.mrf.mxu0
      %1447 = vdwg.mxu0
      %v1449 = vsel %vm725, %v1287, 0
      %v1452 = vsel %vm725, %v1288, 0
      %v1455 = vsel %vm725, %v1289, 0
      %v1458 = vsel %vm725, %v1290, 0
      %v1461 = vsel %vm725, %v1291, 0
      %v1464 = vsel %vm725, %v1292, 0
      %v1467 = vsel %vm725, %v1293, 0
      %v1470 = vsel %vm725, %v1294, 0
      %v1473 = vsel %vm725, %v1085, 0
      %v1476 = vsel %vm725, %v1090, 0
      %v1479 = vsel %vm725, %v1095, 0
      %v1482 = vsel %vm725, %v1100, 0
      %v1485 = vsel %vm725, %v1105, 0
      %v1488 = vsel %vm725, %v1110, 0
      %v1491 = vsel %vm725, %v1115, 0
      %v1494 = vsel %vm725, %v1120, 0
      %1496 = vmatprep.subr.mxu0 0.0
      %1497 = vmatpush1.xpose.msra.mxu0 0.0
      %1498 = vmatprep.subr.mxu0 0.0
      %1499 = vmatpush1.xpose.msra.mxu0 0.0
      %1500 = vmatprep.subr.mxu0 0.0
      %1501 = vmatpush1.xpose.msra.mxu0 0.0
      %1502 = vmatprep.subr.mxu0 0.0
      %1503 = vmatpush1.xpose.msra.mxu0 0.0
      %1504 = vmatprep.subr.mxu0 0.0
      %1505 = vmatpush1.xpose.msra.mxu0 0.0
      %1506 = vmatprep.subr.mxu0 0.0
      %1507 = vmatpush1.xpose.msra.mxu0 0.0
      %1508 = vmatprep.subr.mxu0 0.0
      %1509 = vmatpush1.xpose.msra.mxu0 0.0
      %1510 = vmatprep.subr.mxu0 0.0
      %1511 = vmatpush1.xpose.msra.mxu0 0.0
      %1512 = vmatprep.subr.mxu0 0.0
      %1513 = vmatpush1.xpose.msra.mxu0 %v1494
      %1514 = vmatprep.subr.mxu0 0.0
      %1515 = vmatpush1.xpose.msra.mxu0 %v1491
      %1516 = vmatprep.subr.mxu0 0.0
      %1517 = vmatpush1.xpose.msra.mxu0 %v1488
      %1518 = vmatprep.subr.mxu0 0.0
      %1519 = vmatpush1.xpose.msra.mxu0 %v1485
      %1520 = vmatprep.subr.mxu0 0.0
      %1521 = vmatpush1.xpose.msra.mxu0 %v1482
      %1522 = vmatprep.subr.mxu0 0.0
      %1523 = vmatpush1.xpose.msra.mxu0 %v1479
      %1524 = vmatprep.subr.mxu0 0.0
      %1525 = vmatpush1.xpose.msra.mxu0 %v1476
      %1526 = vmatprep.subr.mxu0 0.0
      %1527 = vmatpush1.xpose.msra.mxu0 %v1473
      %1528 = vmatprep.subr.mxu0 0.0
      %1529 = vmatpush2.xpose.msra.mxu0 0.0
      %1530 = vmatprep.subr.mxu0 0.0
      %1531 = vmatpush2.xpose.msra.mxu0 0.0
      %1532 = vmatprep.subr.mxu0 0.0
      %1533 = vmatpush2.xpose.msra.mxu0 0.0
      %1534 = vmatprep.subr.mxu0 0.0
      %1535 = vmatpush2.xpose.msra.mxu0 0.0
      %1536 = vmatprep.subr.mxu0 0.0
      %1537 = vmatpush2.xpose.msra.mxu0 0.0
      %1538 = vmatprep.subr.mxu0 0.0
      %1539 = vmatpush2.xpose.msra.mxu0 0.0
      %1540 = vmatprep.subr.mxu0 0.0
      %1541 = vmatpush2.xpose.msra.mxu0 0.0
      %1542 = vmatprep.subr.mxu0 0.0
      %1543 = vmatpush2.xpose.msra.mxu0 0.0
      %1544 = vmatprep.subr.mxu0 0.0
      %1545 = vmatpush2.xpose.msra.mxu0 0.0
      %1546 = vmatprep.subr.mxu0 0.0
      %1547 = vmatpush2.xpose.msra.mxu0 0.0
      %1548 = vmatprep.subr.mxu0 0.0
      %1549 = vmatpush2.xpose.msra.mxu0 0.0
      %1550 = vmatprep.subr.mxu0 0.0
      %1551 = vmatpush2.xpose.msra.mxu0 0.0
      %1552 = vmatprep.subr.mxu0 0.0
      %1553 = vmatpush2.xpose.msra.mxu0 0.0
      %1554 = vmatprep.subr.mxu0 0.0
      %1555 = vmatpush2.xpose.msra.mxu0 0.0
      %1556 = vmatprep.subr.mxu0 0.0
      %1557 = vmatpush2.xpose.msra.mxu0 0.0
      %1558 = vmatprep.subr.mxu0 0.0
      %1559 = vmatpush2.xpose.msra.mxu0 0.0
      %1560 = vmatprep.mubr.f32.mxu0 0.0
      %1561 = vmatmul.mubr.f32.gmra.mxu0 %v1449
      %v1562 = vpop.f32.mrf.mxu0
      %v1563 = vadd.f32 0.0, %v1562
      %v1564 = vpop.f32.mrf.mxu0
      %1565 = vmatprep.mubr.f32.mxu0 0.0
      %1566 = vmatmul.mubr.f32.gmra.mxu0 %v1452
      %v1567 = vpop.f32.mrf.mxu0
      %v1568 = vadd.f32 0.0, %v1567
      %v1569 = vpop.f32.mrf.mxu0
      %1570 = vmatprep.mubr.f32.mxu0 0.0
      %1571 = vmatmul.mubr.f32.gmra.mxu0 %v1455
      %v1572 = vpop.f32.mrf.mxu0
      %v1573 = vadd.f32 0.0, %v1572
      %v1574 = vpop.f32.mrf.mxu0
      %1575 = vmatprep.mubr.f32.mxu0 0.0
      %1576 = vmatmul.mubr.f32.gmra.mxu0 %v1458
      %v1577 = vpop.f32.mrf.mxu0
      %v1578 = vadd.f32 0.0, %v1577
      %v1579 = vpop.f32.mrf.mxu0
      %1580 = vmatprep.mubr.f32.mxu0 0.0
      %1581 = vmatmul.mubr.f32.gmra.mxu0 %v1461
      %v1582 = vpop.f32.mrf.mxu0
      %v1583 = vadd.f32 0.0, %v1582
      %v1584 = vpop.f32.mrf.mxu0
      %1585 = vmatprep.mubr.f32.mxu0 0.0
      %1586 = vmatmul.mubr.f32.gmra.mxu0 %v1464
      %v1587 = vpop.f32.mrf.mxu0
      %v1588 = vadd.f32 0.0, %v1587
      %v1589 = vpop.f32.mrf.mxu0
      %1590 = vmatprep.mubr.f32.mxu0 0.0
      %1591 = vmatmul.mubr.f32.gmra.mxu0 %v1467
      %v1592 = vpop.f32.mrf.mxu0
      %v1593 = vadd.f32 0.0, %v1592
      %v1594 = vpop.f32.mrf.mxu0
      %1595 = vmatprep.mubr.f32.mxu0 0.0
      %1596 = vmatmul.mubr.f32.gmra.mxu0 %v1470
      %v1597 = vpop.f32.mrf.mxu0
      %v1598 = vadd.f32 0.0, %v1597
      %v1599 = vpop.f32.mrf.mxu0
      %1600 = vdwg.mxu0
      %vm1601 = vcmask 523264
      %v1602 = vsel %vm1601, %v1410, -inf
      %1603 = vmax.xlane.f32.xlu0 %v1602
      %v1604 = vpop.xlane.xlu0 %1603
      %v1605 = vsel %vm1601, %v1415, -inf
      %1606 = vmax.xlane.f32.xlu0 %v1605
      %v1607 = vpop.xlane.xlu0 %1606
      %v1608 = vsel %vm1601, %v1420, -inf
      %1609 = vmax.xlane.f32.xlu0 %v1608
      %v1610 = vpop.xlane.xlu0 %1609
      %v1611 = vsel %vm1601, %v1425, -inf
      %1612 = vmax.xlane.f32.xlu0 %v1611
      %v1613 = vpop.xlane.xlu0 %1612
      %v1614 = vsel %vm1601, %v1430, -inf
      %1615 = vmax.xlane.f32.xlu0 %v1614
      %v1616 = vpop.xlane.xlu0 %1615
      %v1617 = vsel %vm1601, %v1435, -inf
      %1618 = vmax.xlane.f32.xlu0 %v1617
      %v1619 = vpop.xlane.xlu0 %1618
      %v1620 = vsel %vm1601, %v1440, -inf
      %1621 = vmax.xlane.f32.xlu0 %v1620
      %v1622 = vpop.xlane.xlu0 %1621
      %v1623 = vsel %vm1601, %v1445, -inf
      %1624 = vmax.xlane.f32.xlu0 %v1623
      %v1625 = vpop.xlane.xlu0 %1624
      %v1626 = vsel %vm1601, %v1563, -inf
      %1627 = vmax.xlane.f32.xlu0 %v1626
      %v1628 = vpop.xlane.xlu0 %1627
      %v1629 = vsel %vm1601, %v1568, -inf
      %1630 = vmax.xlane.f32.xlu0 %v1629
      %v1631 = vpop.xlane.xlu0 %1630
      %v1632 = vsel %vm1601, %v1573, -inf
      %1633 = vmax.xlane.f32.xlu0 %v1632
      %v1634 = vpop.xlane.xlu0 %1633
      %v1635 = vsel %vm1601, %v1578, -inf
      %1636 = vmax.xlane.f32.xlu0 %v1635
      %v1637 = vpop.xlane.xlu0 %1636
      %v1638 = vsel %vm1601, %v1583, -inf
      %1639 = vmax.xlane.f32.xlu0 %v1638
      %v1640 = vpop.xlane.xlu0 %1639
      %v1641 = vsel %vm1601, %v1588, -inf
      %1642 = vmax.xlane.f32.xlu0 %v1641
      %v1643 = vpop.xlane.xlu0 %1642
      %v1644 = vsel %vm1601, %v1593, -inf
      %1645 = vmax.xlane.f32.xlu0 %v1644
      %v1646 = vpop.xlane.xlu0 %1645
      %v1647 = vsel %vm1601, %v1598, -inf
      %1648 = vmax.xlane.f32.xlu0 %v1647
      %v1649 = vpop.xlane.xlu0 %1648
      %v1650 = vsub.f32 %v1410, %v1604
      %v1651 = vsub.f32 %v1415, %v1607
      %v1652 = vsub.f32 %v1420, %v1610
      %v1653 = vsub.f32 %v1425, %v1613
      %v1654 = vsub.f32 %v1430, %v1616
      %v1655 = vsub.f32 %v1435, %v1619
      %v1656 = vsub.f32 %v1440, %v1622
      %v1657 = vsub.f32 %v1445, %v1625
      %v1658 = vsub.f32 %v1563, %v1628
      %v1659 = vsub.f32 %v1568, %v1631
      %v1660 = vsub.f32 %v1573, %v1634
      %v1661 = vsub.f32 %v1578, %v1637
      %v1662 = vsub.f32 %v1583, %v1640
      %v1663 = vsub.f32 %v1588, %v1643
      %v1664 = vsub.f32 %v1593, %v1646
      %v1665 = vsub.f32 %v1598, %v1649
      %v1666 = vmul.f32 %v1650, 1.442695
      %v1667 = vpow.pop %v1666
      %v1668 = vmul.f32 %v1651, 1.442695
      %v1669 = vpow.pop %v1668
      %v1670 = vmul.f32 %v1652, 1.442695
      %v1671 = vpow.pop %v1670
      %v1672 = vmul.f32 %v1653, 1.442695
      %v1673 = vpow.pop %v1672
      %v1674 = vmul.f32 %v1654, 1.442695
      %v1675 = vpow.pop %v1674
      %v1676 = vmul.f32 %v1655, 1.442695
      %v1677 = vpow.pop %v1676
      %v1678 = vmul.f32 %v1656, 1.442695
      %v1679 = vpow.pop %v1678
      %v1680 = vmul.f32 %v1657, 1.442695
      %v1681 = vpow.pop %v1680
      %v1682 = vmul.f32 %v1658, 1.442695
      %v1683 = vpow.pop %v1682
      %v1684 = vmul.f32 %v1659, 1.442695
      %v1685 = vpow.pop %v1684
      %v1686 = vmul.f32 %v1660, 1.442695
      %v1687 = vpow.pop %v1686
      %v1688 = vmul.f32 %v1661, 1.442695
      %v1689 = vpow.pop %v1688
      %v1690 = vmul.f32 %v1662, 1.442695
      %v1691 = vpow.pop %v1690
      %v1692 = vmul.f32 %v1663, 1.442695
      %v1693 = vpow.pop %v1692
      %v1694 = vmul.f32 %v1664, 1.442695
      %v1695 = vpow.pop %v1694
      %v1696 = vmul.f32 %v1665, 1.442695
      %v1697 = vpow.pop %v1696
      %v1698 = vsel %vm1601, %v1667, 0.0
      %1699 = vadd.xlane.f32.xlu0 %v1698
      %v1700 = vpop.xlane.xlu0 %1699
      %v1701 = vsel %vm1601, %v1669, 0.0
      %1702 = vadd.xlane.f32.xlu0 %v1701
      %v1703 = vpop.xlane.xlu0 %1702
      %v1704 = vsel %vm1601, %v1671, 0.0
      %1705 = vadd.xlane.f32.xlu0 %v1704
      %v1706 = vpop.xlane.xlu0 %1705
      %v1707 = vsel %vm1601, %v1673, 0.0
      %1708 = vadd.xlane.f32.xlu0 %v1707
      %v1709 = vpop.xlane.xlu0 %1708
      %v1710 = vsel %vm1601, %v1675, 0.0
      %1711 = vadd.xlane.f32.xlu0 %v1710
      %v1712 = vpop.xlane.xlu0 %1711
      %v1713 = vsel %vm1601, %v1677, 0.0
      %1714 = vadd.xlane.f32.xlu0 %v1713
      %v1715 = vpop.xlane.xlu0 %1714
      %v1716 = vsel %vm1601, %v1679, 0.0
      %1717 = vadd.xlane.f32.xlu0 %v1716
      %v1718 = vpop.xlane.xlu0 %1717
      %v1719 = vsel %vm1601, %v1681, 0.0
      %1720 = vadd.xlane.f32.xlu0 %v1719
      %v1721 = vpop.xlane.xlu0 %1720
      %v1722 = vsel %vm1601, %v1683, 0.0
      %1723 = vadd.xlane.f32.xlu0 %v1722
      %v1724 = vpop.xlane.xlu0 %1723
      %v1725 = vsel %vm1601, %v1685, 0.0
      %1726 = vadd.xlane.f32.xlu0 %v1725
      %v1727 = vpop.xlane.xlu0 %1726
      %v1728 = vsel %vm1601, %v1687, 0.0
      %1729 = vadd.xlane.f32.xlu0 %v1728
      %v1730 = vpop.xlane.xlu0 %1729
      %v1731 = vsel %vm1601, %v1689, 0.0
      %1732 = vadd.xlane.f32.xlu0 %v1731
      %v1733 = vpop.xlane.xlu0 %1732
      %v1734 = vsel %vm1601, %v1691, 0.0
      %1735 = vadd.xlane.f32.xlu0 %v1734
      %v1736 = vpop.xlane.xlu0 %1735
      %v1737 = vsel %vm1601, %v1693, 0.0
      %1738 = vadd.xlane.f32.xlu0 %v1737
      %v1739 = vpop.xlane.xlu0 %1738
      %v1740 = vsel %vm1601, %v1695, 0.0
      %1741 = vadd.xlane.f32.xlu0 %v1740
      %v1742 = vpop.xlane.xlu0 %1741
      %v1743 = vsel %vm1601, %v1697, 0.0
      %1744 = vadd.xlane.f32.xlu0 %v1743
      %v1745 = vpop.xlane.xlu0 %1744
      %v1746 = vrcp.pop %v1700
      %v1747 = vrcp.pop %v1703
      %v1748 = vrcp.pop %v1706
      %v1749 = vrcp.pop %v1709
      %v1750 = vrcp.pop %v1712
      %v1751 = vrcp.pop %v1715
      %v1752 = vrcp.pop %v1718
      %v1753 = vrcp.pop %v1721
      %v1754 = vrcp.pop %v1724
      %v1755 = vrcp.pop %v1727
      %v1756 = vrcp.pop %v1730
      %v1757 = vrcp.pop %v1733
      %v1758 = vrcp.pop %v1736
      %v1759 = vrcp.pop %v1739
      %v1760 = vrcp.pop %v1742
      %v1761 = vrcp.pop %v1745
      %v1762 = vmul.f32 %v1667, %v1746
      %v1763 = vmul.f32 %v1669, %v1747
      %v1764 = vmul.f32 %v1671, %v1748
      %v1765 = vmul.f32 %v1673, %v1749
      %v1766 = vmul.f32 %v1675, %v1750
      %v1767 = vmul.f32 %v1677, %v1751
      %v1768 = vmul.f32 %v1679, %v1752
      %v1769 = vmul.f32 %v1681, %v1753
      %v1770 = vmul.f32 %v1683, %v1754
      %v1771 = vmul.f32 %v1685, %v1755
      %v1772 = vmul.f32 %v1687, %v1756
      %v1773 = vmul.f32 %v1689, %v1757
      %v1774 = vmul.f32 %v1691, %v1758
      %v1775 = vmul.f32 %v1693, %v1759
      %v1776 = vmul.f32 %v1695, %v1760
      %v1777 = vmul.f32 %v1697, %v1761
      %v1779 = vsel %vm1601, %v1762, 0
      %v1782 = vsel %vm1601, %v1763, 0
      %v1785 = vsel %vm1601, %v1764, 0
      %v1788 = vsel %vm1601, %v1765, 0
      %v1791 = vsel %vm1601, %v1766, 0
      %v1794 = vsel %vm1601, %v1767, 0
      %v1797 = vsel %vm1601, %v1768, 0
      %v1800 = vsel %vm1601, %v1769, 0
      %1802 = vmatprep.subr.mxu0 0.0
      %1803 = vmatpush1.msra.mxu0 0.0
      %1804 = vmatprep.subr.mxu0 0.0
      %1805 = vmatpush1.msra.mxu0 0.0
      %1806 = vmatprep.subr.mxu0 0.0
      %1807 = vmatpush1.msra.mxu0 0.0
      %1808 = vmatprep.subr.mxu0 0.0
      %1809 = vmatpush1.msra.mxu0 0.0
      %1810 = vmatprep.subr.mxu0 0.0
      %1811 = vmatpush1.msra.mxu0 0.0
      %1812 = vmatprep.subr.mxu0 0.0
      %1813 = vmatpush1.msra.mxu0 0.0
      %1814 = vmatprep.subr.mxu0 0.0
      %1815 = vmatpush1.msra.mxu0 0.0
      %1816 = vmatprep.subr.mxu0 0.0
      %1817 = vmatpush1.msra.mxu0 0.0
      %1818 = vmatprep.subr.mxu0 0.0
      %1819 = vmatpush1.msra.mxu0 %v1236
      %1820 = vmatprep.subr.mxu0 0.0
      %1821 = vmatpush1.msra.mxu0 %v1231
      %1822 = vmatprep.subr.mxu0 0.0
      %1823 = vmatpush1.msra.mxu0 %v1226
      %1824 = vmatprep.subr.mxu0 0.0
      %1825 = vmatpush1.msra.mxu0 %v1221
      %1826 = vmatprep.subr.mxu0 0.0
      %1827 = vmatpush1.msra.mxu0 %v1216
      %1828 = vmatprep.subr.mxu0 0.0
      %1829 = vmatpush1.msra.mxu0 %v1211
      %1830 = vmatprep.subr.mxu0 0.0
      %1831 = vmatpush1.msra.mxu0 %v1206
      %1832 = vmatprep.subr.mxu0 0.0
      %1833 = vmatpush1.msra.mxu0 %v1201
      %1834 = vmatprep.subr.mxu0 0.0
      %1835 = vmatpush2.msra.mxu0 0.0
      %1836 = vmatprep.subr.mxu0 0.0
      %1837 = vmatpush2.msra.mxu0 0.0
      %1838 = vmatprep.subr.mxu0 0.0
      %1839 = vmatpush2.msra.mxu0 0.0
      %1840 = vmatprep.subr.mxu0 0.0
      %1841 = vmatpush2.msra.mxu0 0.0
      %1842 = vmatprep.subr.mxu0 0.0
      %1843 = vmatpush2.msra.mxu0 0.0
      %1844 = vmatprep.subr.mxu0 0.0
      %1845 = vmatpush2.msra.mxu0 0.0
      %1846 = vmatprep.subr.mxu0 0.0
      %1847 = vmatpush2.msra.mxu0 0.0
      %1848 = vmatprep.subr.mxu0 0.0
      %1849 = vmatpush2.msra.mxu0 0.0
      %1850 = vmatprep.subr.mxu0 0.0
      %1851 = vmatpush2.msra.mxu0 0.0
      %1852 = vmatprep.subr.mxu0 0.0
      %1853 = vmatpush2.msra.mxu0 0.0
      %1854 = vmatprep.subr.mxu0 0.0
      %1855 = vmatpush2.msra.mxu0 0.0
      %1856 = vmatprep.subr.mxu0 0.0
      %1857 = vmatpush2.msra.mxu0 0.0
      %1858 = vmatprep.subr.mxu0 0.0
      %1859 = vmatpush2.msra.mxu0 0.0
      %1860 = vmatprep.subr.mxu0 0.0
      %1861 = vmatpush2.msra.mxu0 0.0
      %1862 = vmatprep.subr.mxu0 0.0
      %1863 = vmatpush2.msra.mxu0 0.0
      %1864 = vmatprep.subr.mxu0 0.0
      %1865 = vmatpush2.msra.mxu0 0.0
      %1866 = vmatprep.mubr.f32.mxu0 0.0
      %1867 = vmatmul.mubr.f32.gmra.mxu0 %v1779
      %v1868 = vpop.f32.mrf.mxu0
      %v1869 = vadd.f32 0.0, %v1868
      %v1870 = vpop.f32.mrf.mxu0
      %1871 = vmatprep.mubr.f32.mxu0 0.0
      %1872 = vmatmul.mubr.f32.gmra.mxu0 %v1782
      %v1873 = vpop.f32.mrf.mxu0
      %v1874 = vadd.f32 0.0, %v1873
      %v1875 = vpop.f32.mrf.mxu0
      %1876 = vmatprep.mubr.f32.mxu0 0.0
      %1877 = vmatmul.mubr.f32.gmra.mxu0 %v1785
      %v1878 = vpop.f32.mrf.mxu0
      %v1879 = vadd.f32 0.0, %v1878
      %v1880 = vpop.f32.mrf.mxu0
      %1881 = vmatprep.mubr.f32.mxu0 0.0
      %1882 = vmatmul.mubr.f32.gmra.mxu0 %v1788
      %v1883 = vpop.f32.mrf.mxu0
      %v1884 = vadd.f32 0.0, %v1883
      %v1885 = vpop.f32.mrf.mxu0
      %1886 = vmatprep.mubr.f32.mxu0 0.0
      %1887 = vmatmul.mubr.f32.gmra.mxu0 %v1791
      %v1888 = vpop.f32.mrf.mxu0
      %v1889 = vadd.f32 0.0, %v1888
      %v1890 = vpop.f32.mrf.mxu0
      %1891 = vmatprep.mubr.f32.mxu0 0.0
      %1892 = vmatmul.mubr.f32.gmra.mxu0 %v1794
      %v1893 = vpop.f32.mrf.mxu0
      %v1894 = vadd.f32 0.0, %v1893
      %v1895 = vpop.f32.mrf.mxu0
      %1896 = vmatprep.mubr.f32.mxu0 0.0
      %1897 = vmatmul.mubr.f32.gmra.mxu0 %v1797
      %v1898 = vpop.f32.mrf.mxu0
      %v1899 = vadd.f32 0.0, %v1898
      %v1900 = vpop.f32.mrf.mxu0
      %1901 = vmatprep.mubr.f32.mxu0 0.0
      %1902 = vmatmul.mubr.f32.gmra.mxu0 %v1800
      %v1903 = vpop.f32.mrf.mxu0
      %v1904 = vadd.f32 0.0, %v1903
      %v1905 = vpop.f32.mrf.mxu0
      %1906 = vdwg.mxu0
      %v1908 = vsel %vm1601, %v1770, 0
      %v1911 = vsel %vm1601, %v1771, 0
      %v1914 = vsel %vm1601, %v1772, 0
      %v1917 = vsel %vm1601, %v1773, 0
      %v1920 = vsel %vm1601, %v1774, 0
      %v1923 = vsel %vm1601, %v1775, 0
      %v1926 = vsel %vm1601, %v1776, 0
      %v1929 = vsel %vm1601, %v1777, 0
      %1931 = vmatprep.subr.mxu0 0.0
      %1932 = vmatpush1.msra.mxu0 0.0
      %1933 = vmatprep.subr.mxu0 0.0
      %1934 = vmatpush1.msra.mxu0 0.0
      %1935 = vmatprep.subr.mxu0 0.0
      %1936 = vmatpush1.msra.mxu0 0.0
      %1937 = vmatprep.subr.mxu0 0.0
      %1938 = vmatpush1.msra.mxu0 0.0
      %1939 = vmatprep.subr.mxu0 0.0
      %1940 = vmatpush1.msra.mxu0 0.0
      %1941 = vmatprep.subr.mxu0 0.0
      %1942 = vmatpush1.msra.mxu0 0.0
      %1943 = vmatprep.subr.mxu0 0.0
      %1944 = vmatpush1.msra.mxu0 0.0
      %1945 = vmatprep.subr.mxu0 0.0
      %1946 = vmatpush1.msra.mxu0 0.0
      %1947 = vmatprep.subr.mxu0 0.0
      %1948 = vmatpush1.msra.mxu0 %v1276
      %1949 = vmatprep.subr.mxu0 0.0
      %1950 = vmatpush1.msra.mxu0 %v1271
      %1951 = vmatprep.subr.mxu0 0.0
      %1952 = vmatpush1.msra.mxu0 %v1266
      %1953 = vmatprep.subr.mxu0 0.0
      %1954 = vmatpush1.msra.mxu0 %v1261
      %1955 = vmatprep.subr.mxu0 0.0
      %1956 = vmatpush1.msra.mxu0 %v1256
      %1957 = vmatprep.subr.mxu0 0.0
      %1958 = vmatpush1.msra.mxu0 %v1251
      %1959 = vmatprep.subr.mxu0 0.0
      %1960 = vmatpush1.msra.mxu0 %v1246
      %1961 = vmatprep.subr.mxu0 0.0
      %1962 = vmatpush1.msra.mxu0 %v1241
      %1963 = vmatprep.subr.mxu0 0.0
      %1964 = vmatpush2.msra.mxu0 0.0
      %1965 = vmatprep.subr.mxu0 0.0
      %1966 = vmatpush2.msra.mxu0 0.0
      %1967 = vmatprep.subr.mxu0 0.0
      %1968 = vmatpush2.msra.mxu0 0.0
      %1969 = vmatprep.subr.mxu0 0.0
      %1970 = vmatpush2.msra.mxu0 0.0
      %1971 = vmatprep.subr.mxu0 0.0
      %1972 = vmatpush2.msra.mxu0 0.0
      %1973 = vmatprep.subr.mxu0 0.0
      %1974 = vmatpush2.msra.mxu0 0.0
      %1975 = vmatprep.subr.mxu0 0.0
      %1976 = vmatpush2.msra.mxu0 0.0
      %1977 = vmatprep.subr.mxu0 0.0
      %1978 = vmatpush2.msra.mxu0 0.0
      %1979 = vmatprep.subr.mxu0 0.0
      %1980 = vmatpush2.msra.mxu0 0.0
      %1981 = vmatprep.subr.mxu0 0.0
      %1982 = vmatpush2.msra.mxu0 0.0
      %1983 = vmatprep.subr.mxu0 0.0
      %1984 = vmatpush2.msra.mxu0 0.0
      %1985 = vmatprep.subr.mxu0 0.0
      %1986 = vmatpush2.msra.mxu0 0.0
      %1987 = vmatprep.subr.mxu0 0.0
      %1988 = vmatpush2.msra.mxu0 0.0
      %1989 = vmatprep.subr.mxu0 0.0
      %1990 = vmatpush2.msra.mxu0 0.0
      %1991 = vmatprep.subr.mxu0 0.0
      %1992 = vmatpush2.msra.mxu0 0.0
      %1993 = vmatprep.subr.mxu0 0.0
      %1994 = vmatpush2.msra.mxu0 0.0
      %1995 = vmatprep.mubr.f32.mxu0 0.0
      %1996 = vmatmul.mubr.f32.gmra.mxu0 %v1908
      %v1997 = vpop.f32.mrf.mxu0
      %v1998 = vadd.f32 0.0, %v1997
      %v1999 = vpop.f32.mrf.mxu0
      %2000 = vmatprep.mubr.f32.mxu0 0.0
      %2001 = vmatmul.mubr.f32.gmra.mxu0 %v1911
      %v2002 = vpop.f32.mrf.mxu0
      %v2003 = vadd.f32 0.0, %v2002
      %v2004 = vpop.f32.mrf.mxu0
      %2005 = vmatprep.mubr.f32.mxu0 0.0
      %2006 = vmatmul.mubr.f32.gmra.mxu0 %v1914
      %v2007 = vpop.f32.mrf.mxu0
      %v2008 = vadd.f32 0.0, %v2007
      %v2009 = vpop.f32.mrf.mxu0
      %2010 = vmatprep.mubr.f32.mxu0 0.0
      %2011 = vmatmul.mubr.f32.gmra.mxu0 %v1917
      %v2012 = vpop.f32.mrf.mxu0
      %v2013 = vadd.f32 0.0, %v2012
      %v2014 = vpop.f32.mrf.mxu0
      %2015 = vmatprep.mubr.f32.mxu0 0.0
      %2016 = vmatmul.mubr.f32.gmra.mxu0 %v1920
      %v2017 = vpop.f32.mrf.mxu0
      %v2018 = vadd.f32 0.0, %v2017
      %v2019 = vpop.f32.mrf.mxu0
      %2020 = vmatprep.mubr.f32.mxu0 0.0
      %2021 = vmatmul.mubr.f32.gmra.mxu0 %v1923
      %v2022 = vpop.f32.mrf.mxu0
      %v2023 = vadd.f32 0.0, %v2022
      %v2024 = vpop.f32.mrf.mxu0
      %2025 = vmatprep.mubr.f32.mxu0 0.0
      %2026 = vmatmul.mubr.f32.gmra.mxu0 %v1926
      %v2027 = vpop.f32.mrf.mxu0
      %v2028 = vadd.f32 0.0, %v2027
      %v2029 = vpop.f32.mrf.mxu0
      %2030 = vmatprep.mubr.f32.mxu0 0.0
      %2031 = vmatmul.mubr.f32.gmra.mxu0 %v1929
      %v2032 = vpop.f32.mrf.mxu0
      %v2033 = vadd.f32 0.0, %v2032
      %v2034 = vpop.f32.mrf.mxu0
      %2035 = vdwg.mxu0
      %v2036 = vld [vmem:[%s621] sm:$0xff]
      %v2037 = vld [vmem:[%s621 + $0x8] sm:$0xff]
      %v2038 = vld [vmem:[%s621 + $0x10] sm:$0xff]
      %v2039 = vld [vmem:[%s621 + $0x18] sm:$0xff]
      %v2040 = vld [vmem:[%s626] sm:$0xff]
      %v2041 = vld [vmem:[%s626 + $0x8] sm:$0xff]
      %v2042 = vld [vmem:[%s626 + $0x10] sm:$0xff]
      %v2043 = vld [vmem:[%s626 + $0x18] sm:$0xff]
      %2045 = vset.pattern.permute.xlu0 0
      %2046 = vperm.xlu0 %2045, %v2040
      %v2047 = vpop.permute.xlu0 %2046
      %2050 = vset.pattern.permute.xlu0 0
      %2051 = vperm.xlu0 %2050, %v2041
      %v2052 = vpop.permute.xlu0 %2051
      %2055 = vset.pattern.permute.xlu0 0
      %2056 = vperm.xlu0 %2055, %v2042
      %v2057 = vpop.permute.xlu0 %2056
      %2060 = vset.pattern.permute.xlu0 0
      %2061 = vperm.xlu0 %2060, %v2043
      %v2062 = vpop.permute.xlu0 %2061
      %v2065 = vsel %vm725, %v2036, 0
      %v2068 = vsel %vm725, %v2037, 0
      %v2071 = vsel %vm725, %v2038, 0
      %v2074 = vsel %vm725, %v2039, 0
      %v2077 = vsel %vm725, %v1869, 0
      %v2080 = vsel %vm725, %v1874, 0
      %v2083 = vsel %vm725, %v1879, 0
      %v2086 = vsel %vm725, %v1884, 0
      %v2089 = vsel %vm725, %v1889, 0
      %v2092 = vsel %vm725, %v1894, 0
      %v2095 = vsel %vm725, %v1899, 0
      %v2098 = vsel %vm725, %v1904, 0
      %v2101 = vsel %vm725, %v1998, 0
      %v2104 = vsel %vm725, %v2003, 0
      %v2107 = vsel %vm725, %v2008, 0
      %v2110 = vsel %vm725, %v2013, 0
      %v2113 = vsel %vm725, %v2018, 0
      %v2116 = vsel %vm725, %v2023, 0
      %v2119 = vsel %vm725, %v2028, 0
      %v2122 = vsel %vm725, %v2033, 0
      %2124 = vmatprep.subr.mxu0 0.0
      %2125 = vmatpush1.xpose.msra.mxu0 %v2122
      %2126 = vmatprep.subr.mxu0 0.0
      %2127 = vmatpush1.xpose.msra.mxu0 %v2119
      %2128 = vmatprep.subr.mxu0 0.0
      %2129 = vmatpush1.xpose.msra.mxu0 %v2116
      %2130 = vmatprep.subr.mxu0 0.0
      %2131 = vmatpush1.xpose.msra.mxu0 %v2113
      %2132 = vmatprep.subr.mxu0 0.0
      %2133 = vmatpush1.xpose.msra.mxu0 %v2110
      %2134 = vmatprep.subr.mxu0 0.0
      %2135 = vmatpush1.xpose.msra.mxu0 %v2107
      %2136 = vmatprep.subr.mxu0 0.0
      %2137 = vmatpush1.xpose.msra.mxu0 %v2104
      %2138 = vmatprep.subr.mxu0 0.0
      %2139 = vmatpush1.xpose.msra.mxu0 %v2101
      %2140 = vmatprep.subr.mxu0 0.0
      %2141 = vmatpush1.xpose.msra.mxu0 %v2098
      %2142 = vmatprep.subr.mxu0 0.0
      %2143 = vmatpush1.xpose.msra.mxu0 %v2095
      %2144 = vmatprep.subr.mxu0 0.0
      %2145 = vmatpush1.xpose.msra.mxu0 %v2092
      %2146 = vmatprep.subr.mxu0 0.0
      %2147 = vmatpush1.xpose.msra.mxu0 %v2089
      %2148 = vmatprep.subr.mxu0 0.0
      %2149 = vmatpush1.xpose.msra.mxu0 %v2086
      %2150 = vmatprep.subr.mxu0 0.0
      %2151 = vmatpush1.xpose.msra.mxu0 %v2083
      %2152 = vmatprep.subr.mxu0 0.0
      %2153 = vmatpush1.xpose.msra.mxu0 %v2080
      %2154 = vmatprep.subr.mxu0 0.0
      %2155 = vmatpush1.xpose.msra.mxu0 %v2077
      %2156 = vmatprep.subr.mxu0 0.0
      %2157 = vmatpush2.xpose.msra.mxu0 0.0
      %2158 = vmatprep.subr.mxu0 0.0
      %2159 = vmatpush2.xpose.msra.mxu0 0.0
      %2160 = vmatprep.subr.mxu0 0.0
      %2161 = vmatpush2.xpose.msra.mxu0 0.0
      %2162 = vmatprep.subr.mxu0 0.0
      %2163 = vmatpush2.xpose.msra.mxu0 0.0
      %2164 = vmatprep.subr.mxu0 0.0
      %2165 = vmatpush2.xpose.msra.mxu0 0.0
      %2166 = vmatprep.subr.mxu0 0.0
      %2167 = vmatpush2.xpose.msra.mxu0 0.0
      %2168 = vmatprep.subr.mxu0 0.0
      %2169 = vmatpush2.xpose.msra.mxu0 0.0
      %2170 = vmatprep.subr.mxu0 0.0
      %2171 = vmatpush2.xpose.msra.mxu0 0.0
      %2172 = vmatprep.subr.mxu0 0.0
      %2173 = vmatpush2.xpose.msra.mxu0 0.0
      %2174 = vmatprep.subr.mxu0 0.0
      %2175 = vmatpush2.xpose.msra.mxu0 0.0
      %2176 = vmatprep.subr.mxu0 0.0
      %2177 = vmatpush2.xpose.msra.mxu0 0.0
      %2178 = vmatprep.subr.mxu0 0.0
      %2179 = vmatpush2.xpose.msra.mxu0 0.0
      %2180 = vmatprep.subr.mxu0 0.0
      %2181 = vmatpush2.xpose.msra.mxu0 0.0
      %2182 = vmatprep.subr.mxu0 0.0
      %2183 = vmatpush2.xpose.msra.mxu0 0.0
      %2184 = vmatprep.subr.mxu0 0.0
      %2185 = vmatpush2.xpose.msra.mxu0 0.0
      %2186 = vmatprep.subr.mxu0 0.0
      %2187 = vmatpush2.xpose.msra.mxu0 0.0
      %2188 = vmatprep.mubr.f32.mxu0 0.0
      %2189 = vmatmul.mubr.f32.gmra.mxu0 %v2065
      %v2190 = vpop.f32.mrf.mxu0
      %v2191 = vadd.f32 %v2047, %v2190
      %v2192 = vpop.f32.mrf.mxu0
      %2193 = vmatprep.mubr.f32.mxu0 0.0
      %2194 = vmatmul.mubr.f32.gmra.mxu0 %v2068
      %v2195 = vpop.f32.mrf.mxu0
      %v2196 = vadd.f32 %v2052, %v2195
      %v2197 = vpop.f32.mrf.mxu0
      %2198 = vmatprep.mubr.f32.mxu0 0.0
      %2199 = vmatmul.mubr.f32.gmra.mxu0 %v2071
      %v2200 = vpop.f32.mrf.mxu0
      %v2201 = vadd.f32 %v2057, %v2200
      %v2202 = vpop.f32.mrf.mxu0
      %2203 = vmatprep.mubr.f32.mxu0 0.0
      %2204 = vmatmul.mubr.f32.gmra.mxu0 %v2074
      %v2205 = vpop.f32.mrf.mxu0
      %v2206 = vadd.f32 %v2062, %v2205
      %v2207 = vpop.f32.mrf.mxu0
      %2208 = vdwg.mxu0
      %v2209 = vmax.f32 %v2191, 0.0
      %v2210 = vmax.f32 %v2196, 0.0
      %v2211 = vmax.f32 %v2201, 0.0
      %v2212 = vmax.f32 %v2206, 0.0
      %v2213 = vadd.f32 %v2209, %v2210
      %v2214 = vadd.f32 %v2213, %v2211
      %v2215 = vadd.f32 %v2214, %v2212
      %v2216 = vrot.slane %v2215, 4
      %v2217 = vadd.f32 %v2215, %v2216
      %v2218 = vrot.slane %v2217, 2
      %v2219 = vadd.f32 %v2217, %v2218
      %v2220 = vrot.slane %v2219, 1
      %v2221 = vadd.f32 %v2219, %v2220
      %v2222 = vrcp.pop 32.0
      %v2223 = vmul.f32 %v2221, %v2222
      %v2224 = vsub.f32 %v2209, %v2223
      %v2225 = vsub.f32 %v2210, %v2223
      %v2226 = vsub.f32 %v2211, %v2223
      %v2227 = vsub.f32 %v2212, %v2223
      %v2228 = vmul.f32 %v2224, %v2224
      %v2229 = vmul.f32 %v2225, %v2225
      %v2230 = vmul.f32 %v2226, %v2226
      %v2231 = vmul.f32 %v2227, %v2227
      %v2232 = vadd.f32 %v2228, %v2229
      %v2233 = vadd.f32 %v2232, %v2230
      %v2234 = vadd.f32 %v2233, %v2231
      %v2235 = vrot.slane %v2234, 4
      %v2236 = vadd.f32 %v2234, %v2235
      %v2237 = vrot.slane %v2236, 2
      %v2238 = vadd.f32 %v2236, %v2237
      %v2239 = vrot.slane %v2238, 1
      %v2240 = vadd.f32 %v2238, %v2239
      %v2241 = vmul.f32 %v2240, %v2222
      %v2242 = vadd.f32 %v2241, 1e-05
      %v2243 = vrsqrt.pop %v2242
      %v2244 = vmul.f32 %v2224, %v2243
      %v2245 = vmul.f32 %v2225, %v2243
      %v2246 = vmul.f32 %v2226, %v2243
      %v2247 = vmul.f32 %v2227, %v2243
      %v2248 = vld [vmem:[%s631] sm:$0xff]
      %v2249 = vld [vmem:[%s631 + $0x8] sm:$0xff]
      %v2250 = vld [vmem:[%s631 + $0x10] sm:$0xff]
      %v2251 = vld [vmem:[%s631 + $0x18] sm:$0xff]
      %2253 = vset.pattern.permute.xlu0 0
      %2254 = vperm.xlu0 %2253, %v2248
      %v2255 = vpop.permute.xlu0 %2254
      %2258 = vset.pattern.permute.xlu0 0
      %2259 = vperm.xlu0 %2258, %v2249
      %v2260 = vpop.permute.xlu0 %2259
      %2263 = vset.pattern.permute.xlu0 0
      %2264 = vperm.xlu0 %2263, %v2250
      %v2265 = vpop.permute.xlu0 %2264
      %2268 = vset.pattern.permute.xlu0 0
      %2269 = vperm.xlu0 %2268, %v2251
      %v2270 = vpop.permute.xlu0 %2269
      %v2272 = vmul.f32 %v2244, %v2255
      %v2273 = vmul.f32 %v2245, %v2260
      %v2274 = vmul.f32 %v2246, %v2265
      %v2275 = vmul.f32 %v2247, %v2270
      %v2276 = vld [vmem:[%s636] sm:$0xff]
      %v2277 = vld [vmem:[%s636 + $0x8] sm:$0xff]
      %v2278 = vld [vmem:[%s636 + $0x10] sm:$0xff]
      %v2279 = vld [vmem:[%s636 + $0x18] sm:$0xff]
      %2281 = vset.pattern.permute.xlu0 0
      %2282 = vperm.xlu0 %2281, %v2276
      %v2283 = vpop.permute.xlu0 %2282
      %2286 = vset.pattern.permute.xlu0 0
      %2287 = vperm.xlu0 %2286, %v2277
      %v2288 = vpop.permute.xlu0 %2287
      %2291 = vset.pattern.permute.xlu0 0
      %2292 = vperm.xlu0 %2291, %v2278
      %v2293 = vpop.permute.xlu0 %2292
      %2296 = vset.pattern.permute.xlu0 0
      %2297 = vperm.xlu0 %2296, %v2279
      %v2298 = vpop.permute.xlu0 %2297
      %v2300 = vadd.f32 %v2272, %v2283
      %v2301 = vadd.f32 %v2273, %v2288
      %v2302 = vadd.f32 %v2274, %v2293
      %v2303 = vadd.f32 %v2275, %v2298
      %2304 = vst [vmem:[%s641] sm:$0xff] %v2300
      %2305 = vst [vmem:[%s641 + $0x8] sm:$0xff] %v2301
      %2306 = vst [vmem:[%s641 + $0x10] sm:$0xff] %v2302
      %2307 = vst [vmem:[%s641 + $0x18] sm:$0xff] %v2303
      %p2308 = scmp.lt.s32.totalorder %s35, 15
      %s2309 = scalar_select %p2308, %s35, 15
      %s2310 = smul.addr %s2309, 4
      %s2311 = smul.addr %s2310, 8
      %s2312 = scalar_lea.vmem %s14, %s2311
      // Predicated region
      $region69: #{neighboring_cross_attention.4} parent=67 // pred_check
        %p2313 = pneg %p369
      $region70: #{neighboring_cross_attention.4} parent=67 // pred_check_branch
        %2315 = sbr.rel (%p2313) target = $region72
      $region71: #{neighboring_cross_attention.4} parent=67 // pred_region
        _
      $region72: #{neighboring_cross_attention.4} parent=67 // pred_fallthru
        _
    $region68: #{neighboring_cross_attention.4} parent=5 // pred_fallthru
      _
    %p2316 = scmp.le.s32.totalorder 2, %s30
    // Predicated region
    $region73: #{neighboring_cross_attention.4} parent=5 // pred_check
      %p2317 = pneg %p2316
    $region74: #{neighboring_cross_attention.4} parent=5 // pred_check_branch
      %2319 = sbr.rel (%p2317) target = $region76
    $region75: #{neighboring_cross_attention.4} parent=5 // pred_region
      %s2320 = ssub.s32 %s30, 2
      // Predicated region
      $region77: #{neighboring_cross_attention.4} parent=75 // pred_check
        %p2321 = pneg %p375
      $region78: #{neighboring_cross_attention.4} parent=75 // pred_check_branch
        %2323 = sbr.rel (%p2321) target = $region80
      $region79: #{neighboring_cross_attention.4} parent=75 // pred_region
        %p2324 = scmp.lt.s32.totalorder %s36, 15
        %s2325 = scalar_select %p2324, %s36, 15
        %s2326 = smul.addr %s2325, 4
        %s2327 = smul.addr %s2326, 8
        %s2328 = scalar_lea.vmem %s14, %s2327
      $region80: #{neighboring_cross_attention.4} parent=75 // pred_fallthru
        _
    $region76: #{neighboring_cross_attention.4} parent=5 // pred_fallthru
      _
  $region6: #{neighboring_cross_attention.4} parent=0 // loop_footer
    %s34 = sadd.s32 1, %s30
  $region7: #{neighboring_cross_attention.4} parent=0 // loop_footer_branch
    %29 = sbr.rel target = $region3
  $region8: #{neighboring_cross_attention.4} parent=0 // loop_exit
    _

// kernel: neighboring_cross_attention.5
$region0: #{neighboring_cross_attention.5}
  #allocation0 [shape = 'u32[]', space=smem, size = 0x4, offset = 0x4, fixed_abs, tag = 'smem constant byte address 0x4 - core index']
  #allocation1 [shape = 'u32[144,128]{1,0:T(1,128)}', space=vmem, size = 0x12000, scoped, tag = 'internal scratch']
  %s0 = inlined_call_operand.vmem [shape: f32[5,1440,128], index: 0, kind: input, shape index: {}]
  %s1 = inlined_call_operand.vmem [shape: f32[5,4,1440], index: 1, kind: input, shape index: {}]
  %s2 = inlined_call_operand.vmem [shape: f32[5,4,1], index: 2, kind: input, shape index: {}]
  %s3 = inlined_call_operand.vmem [shape: f32[5,4,128], index: 3, kind: output, shape index: {}]
  %s4 = sld [smem:[#allocation0]]
  $region45: #{neighboring_cross_attention.5} parent=0
    _
  %s6 = ssub.s32 1, %s4
  %s7 = scalar_select 0, %s6, %s4
  loop: start=0, step=1, limit=7
  $region2: #{neighboring_cross_attention.5} parent=0 // loop_pre_header
    _
  $region3: #{neighboring_cross_attention.5} parent=0 // loop_header
    %s9 = sphi 0, %s13
    %p10 = scmp.ge.s32.totalorder %s9, 7
    %s19 = sphi 0, %s21
    %s22 = sphi 0, %s19
    %s23 = sphi 0, %s22
    %s39 = sphi 0, %s23
    %s45 = sphi 0, %s47
    %s48 = sphi 0, %s45
    %s49 = sphi 0, %s48
    %s65 = sphi 0, %s49
    %s71 = sphi 0, %s73
    %s74 = sphi 0, %s71
    %s75 = sphi 0, %s74
    %s91 = sphi 0, %s75
    %s97 = sphi 0, %s99
    %s100 = sphi 0, %s97
    %s101 = sphi 0, %s100
    %s117 = sphi 0, %s101
  $region4: #{neighboring_cross_attention.5} parent=0 // loop_header_branch
    %12 = sbr.rel (%p10) target = $region8
  $region5: #{neighboring_cross_attention.5} parent=0 // loop_body
    %s14 = ssub.s32 %s9, 1
    %s15 = ssub.s32 %s9, 2
    %s16 = sadd.s32 %s9, 1
    %s17 = ssub.s32 %s9, %s16
    %p18 = scmp.eq.s32.totalorder %s17, 0
    %s20 = sadd.s32 %s19, 1
    %s21 = scalar_select %p18, %s19, %s20
    %p24 = pneg %p18
    %p25 = scmp.eq.s32.totalorder %s9, 4
    %p26 = por %p24, %p25
    %p27 = scmp.ne.s32.totalorder %s19, %s22
    %p28 = scmp.eq.s32.totalorder %s9, 0
    %p29 = por %p27, %p28
    %p30 = scmp.ne.s32.totalorder %s19, %s22
    %p31 = scmp.eq.s32.totalorder %s14, 4
    %p32 = por %p30, %p31
    %p33 = scmp.ne.s32.totalorder %s22, %s23
    %p34 = scmp.eq.s32.totalorder %s14, 0
    %p35 = por %p33, %p34
    %p36 = scmp.ne.s32.totalorder %s22, %s23
    %p37 = scmp.eq.s32.totalorder %s15, 4
    %p38 = por %p36, %p37
    %p40 = scmp.ne.s32.totalorder %s23, %s39
    %p41 = scmp.eq.s32.totalorder %s15, 0
    %p42 = por %p40, %p41
    %s43 = ssub.s32 %s9, %s16
    %p44 = scmp.eq.s32.totalorder %s43, 0
    %s46 = sadd.s32 %s45, 1
    %s47 = scalar_select %p44, %s45, %s46
    %p50 = pneg %p44
    %p51 = scmp.eq.s32.totalorder %s9, 4
    %p52 = por %p50, %p51
    %p53 = scmp.ne.s32.totalorder %s45, %s48
    %p54 = scmp.eq.s32.totalorder %s9, 0
    %p55 = por %p53, %p54
    %p56 = scmp.ne.s32.totalorder %s45, %s48
    %p57 = scmp.eq.s32.totalorder %s14, 4
    %p58 = por %p56, %p57
    %p59 = scmp.ne.s32.totalorder %s48, %s49
    %p60 = scmp.eq.s32.totalorder %s14, 0
    %p61 = por %p59, %p60
    %p62 = scmp.ne.s32.totalorder %s48, %s49
    %p63 = scmp.eq.s32.totalorder %s15, 4
    %p64 = por %p62, %p63
    %p66 = scmp.ne.s32.totalorder %s49, %s65
    %p67 = scmp.eq.s32.totalorder %s15, 0
    %p68 = por %p66, %p67
    %s69 = ssub.s32 %s9, %s16
    %p70 = scmp.eq.s32.totalorder %s69, 0
    %s72 = sadd.s32 %s71, 1
    %s73 = scalar_select %p70, %s71, %s72
    %p76 = pneg %p70
    %p77 = scmp.eq.s32.totalorder %s9, 4
    %p78 = por %p76, %p77
    %p79 = scmp.ne.s32.totalorder %s71, %s74
    %p80 = scmp.eq.s32.totalorder %s9, 0
    %p81 = por %p79, %p80
    %p82 = scmp.ne.s32.totalorder %s71, %s74
    %p83 = scmp.eq.s32.totalorder %s14, 4
    %p84 = por %p82, %p83
    %p85 = scmp.ne.s32.totalorder %s74, %s75
    %p86 = scmp.eq.s32.totalorder %s14, 0
    %p87 = por %p85, %p86
    %p88 = scmp.ne.s32.totalorder %s74, %s75
    %p89 = scmp.eq.s32.totalorder %s15, 4
    %p90 = por %p88, %p89
    %p92 = scmp.ne.s32.totalorder %s75, %s91
    %p93 = scmp.eq.s32.totalorder %s15, 0
    %p94 = por %p92, %p93
    %s95 = ssub.s32 %s9, %s16
    %p96 = scmp.eq.s32.totalorder %s95, 0
    %s98 = sadd.s32 %s97, 1
    %s99 = scalar_select %p96, %s97, %s98
    %p102 = pneg %p96
    %p103 = scmp.eq.s32.totalorder %s9, 4
    %p104 = por %p102, %p103
    %p105 = scmp.ne.s32.totalorder %s97, %s100
    %p106 = scmp.eq.s32.totalorder %s9, 0
    %p107 = por %p105, %p106
    %p108 = scmp.ne.s32.totalorder %s97, %s100
    %p109 = scmp.eq.s32.totalorder %s14, 4
    %p110 = por %p108, %p109
    %p111 = scmp.ne.s32.totalorder %s100, %s101
    %p112 = scmp.eq.s32.totalorder %s14, 0
    %p113 = por %p111, %p112
    %p114 = scmp.ne.s32.totalorder %s100, %s101
    %p115 = scmp.eq.s32.totalorder %s15, 4
    %p116 = por %p114, %p115
    %p118 = scmp.ne.s32.totalorder %s101, %s117
    %p119 = scmp.eq.s32.totalorder %s15, 0
    %p120 = por %p118, %p119
    %p121 = scmp.le.s32.totalorder 1, %s9
    %p122 = scmp.lt.s32.totalorder %s9, 6
    %p123 = pnand %p121, %p122
    %p124 = pneg %p123
    // Predicated region
    $region9: #{neighboring_cross_attention.5} parent=5 // pred_check
      _
    $region10: #{neighboring_cross_attention.5} parent=5 // pred_check_branch
      %126 = sbr.rel (%p123) target = $region12
    $region11: #{neighboring_cross_attention.5} parent=5 // pred_region
      %s127 = ssub.s32 %s9, 1
    $region12: #{neighboring_cross_attention.5} parent=5 // pred_fallthru
      _
    %p128 = scmp.lt.s32.totalorder %s9, 5
    // Predicated region
    $region13: #{neighboring_cross_attention.5} parent=5 // pred_check
      %p129 = pneg %p128
    $region14: #{neighboring_cross_attention.5} parent=5 // pred_check_branch
      %131 = sbr.rel (%p129) target = $region16
    $region15: #{neighboring_cross_attention.5} parent=5 // pred_region
      // Predicated region
      $region17: #{neighboring_cross_attention.5} parent=15 // pred_check
        %p132 = pneg %p29
      $region18: #{neighboring_cross_attention.5} parent=15 // pred_check_branch
        %134 = sbr.rel (%p132) target = $region20
      $region19: #{neighboring_cross_attention.5} parent=15 // pred_region
        %p135 = scmp.lt.s32.totalorder %s9, 4
        %s136 = scalar_select %p135, %s9, 4
        %s137 = smul.addr %s136, 180
        %s138 = smul.addr %s137, 8
        %s139 = scalar_lea.vmem %s0, %s138
      $region20: #{neighboring_cross_attention.5} parent=15 // pred_fallthru
        _
      // Predicated region
      $region21: #{neighboring_cross_attention.5} parent=15 // pred_check
        %p140 = pneg %p55
      $region22: #{neighboring_cross_attention.5} parent=15 // pred_check_branch
        %142 = sbr.rel (%p140) target = $region24
      $region23: #{neighboring_cross_attention.5} parent=15 // pred_region
        %p143 = scmp.lt.s32.totalorder %s9, 4
        %s144 = scalar_select %p143, %s9, 4
        %s145 = smul.addr %s144, 12
        %s146 = smul.addr %s145, 4
        %s147 = scalar_lea.vmem %s1, %s146
      $region24: #{neighboring_cross_attention.5} parent=15 // pred_fallthru
        _
      // Predicated region
      $region25: #{neighboring_cross_attention.5} parent=15 // pred_check
        %p148 = pneg %p81
      $region26: #{neighboring_cross_attention.5} parent=15 // pred_check_branch
        %150 = sbr.rel (%p148) target = $region28
      $region27: #{neighboring_cross_attention.5} parent=15 // pred_region
        %p151 = scmp.lt.s32.totalorder %s9, 4
        %s152 = scalar_select %p151, %s9, 4
        %s153 = smul.addr %s152, 4
        %s154 = scalar_lea.vmem %s2, %s153
      $region28: #{neighboring_cross_attention.5} parent=15 // pred_fallthru
        _
    $region16: #{neighboring_cross_attention.5} parent=5 // pred_fallthru
      _
    %p155 = scmp.le.s32.totalorder 1, %s9
    %p156 = scmp.lt.s32.totalorder %s9, 6
    %p157 = pnand %p155, %p156
    %p158 = pneg %p157
    // Predicated region
    $region29: #{neighboring_cross_attention.5} parent=5 // pred_check
      _
    $region30: #{neighboring_cross_attention.5} parent=5 // pred_check_branch
      %160 = sbr.rel (%p157) target = $region32
    $region31: #{neighboring_cross_attention.5} parent=5 // pred_region
      %s161 = ssub.s32 %s9, 1
      %p162 = scmp.lt.s32.totalorder %s14, 4
      %s163 = scalar_select %p162, %s14, 4
      %s164 = smul.addr %s163, 180
      %s165 = smul.addr %s164, 8
      %s166 = scalar_lea.vmem %s0, %s165
      %p167 = pneg %p35
      %p168 = pneg %p32
      %p169 = scmp.lt.s32.totalorder %s14, 4
      %s170 = scalar_select %p169, %s14, 4
      %s171 = smul.addr %s170, 12
      %s172 = smul.addr %s171, 4
      %s173 = scalar_lea.vmem %s1, %s172
      %p174 = pneg %p61
      %p175 = pneg %p58
      %p176 = scmp.lt.s32.totalorder %s14, 4
      %s177 = scalar_select %p176, %s14, 4
      %s178 = smul.addr %s177, 4
      %s179 = scalar_lea.vmem %s2, %s178
      %p180 = pneg %p87
      %p181 = pneg %p84
      %p182 = pneg %p113
      %p183 = pneg %p110
      %p184 = scmp.lt.s32.totalorder %s14, 4
      %s185 = scalar_select %p184, %s14, 4
      %s186 = smul.addr %s185, 4
      %s187 = scalar_lea.vmem %s3, %s186
      %p188 = scmp.lt.s32.totalorder %s14, 4
      %s189 = scalar_select %p188, %s14, 4
      %s190 = smul.addr %s189, 180
      %s191 = smul.addr %s190, 8
      %s192 = scalar_lea.vmem %s0, %s191
      %p193 = scmp.lt.s32.totalorder %s14, 4
      %s194 = scalar_select %p193, %s14, 4
      %s195 = smul.addr %s194, 12
      %s196 = smul.addr %s195, 4
      %s197 = scalar_lea.vmem %s1, %s196
      %p198 = scmp.lt.s32.totalorder %s14, 4
      %s199 = scalar_select %p198, %s14, 4
      %s200 = smul.addr %s199, 4
      %s201 = scalar_lea.vmem %s2, %s200
      %p202 = scmp.lt.s32.totalorder %s14, 4
      %s203 = scalar_select %p202, %s14, 4
      %s204 = smul.addr %s203, 4
      %s205 = scalar_lea.vmem %s3, %s204
      %v206 = vld [vmem:[%s197] sm:$0xff]
      %v207 = vld [vmem:[%s197 + $0x8] sm:$0xff]
      %v208 = vld [vmem:[%s197 + $0x10] sm:$0xff]
      %v209 = vld [vmem:[%s197 + $0x18] sm:$0xff]
      %v210 = vld [vmem:[%s197 + $0x20] sm:$0xff]
      %v211 = vld [vmem:[%s197 + $0x28] sm:$0xff]
      %v212 = vld [vmem:[%s192] sm:$0xff]
      %v213 = vld [vmem:[%s192 + $0x8] sm:$0xff]
      %v214 = vld [vmem:[%s192 + $0x10] sm:$0xff]
      %v215 = vld [vmem:[%s192 + $0x18] sm:$0xff]
      %v216 = vld [vmem:[%s192 + $0x20] sm:$0xff]
      %v217 = vld [vmem:[%s192 + $0x28] sm:$0xff]
      %v218 = vld [vmem:[%s192 + $0x30] sm:$0xff]
      %v219 = vld [vmem:[%s192 + $0x38] sm:$0xff]
      %v220 = vld [vmem:[%s192 + $0x40] sm:$0xff]
      %v221 = vld [vmem:[%s192 + $0x48] sm:$0xff]
      %v222 = vld [vmem:[%s192 + $0x50] sm:$0xff]
      %v223 = vld [vmem:[%s192 + $0x58] sm:$0xff]
      %v224 = vld [vmem:[%s192 + $0x60] sm:$0xff]
      %v225 = vld [vmem:[%s192 + $0x68] sm:$0xff]
      %v226 = vld [vmem:[%s192 + $0x70] sm:$0xff]
      %v227 = vld [vmem:[%s192 + $0x78] sm:$0xff]
      %v228 = vld [vmem:[%s192 + $0x80] sm:$0xff]
      %v229 = vld [vmem:[%s192 + $0x88] sm:$0xff]
      %v230 = vld [vmem:[%s192 + $0x90] sm:$0xff]
      %v231 = vld [vmem:[%s192 + $0x98] sm:$0xff]
      %v232 = vld [vmem:[%s192 + $0xa0] sm:$0xff]
      %v233 = vld [vmem:[%s192 + $0xa8] sm:$0xff]
      %v234 = vld [vmem:[%s192 + $0xb0] sm:$0xff]
      %v235 = vld [vmem:[%s192 + $0xb8] sm:$0xff]
      %v236 = vld [vmem:[%s192 + $0xc0] sm:$0xff]
      %v237 = vld [vmem:[%s192 + $0xc8] sm:$0xff]
      %v238 = vld [vmem:[%s192 + $0xd0] sm:$0xff]
      %v239 = vld [vmem:[%s192 + $0xd8] sm:$0xff]
      %v240 = vld [vmem:[%s192 + $0xe0] sm:$0xff]
      %v241 = vld [vmem:[%s192 + $0xe8] sm:$0xff]
      %v242 = vld [vmem:[%s192 + $0xf0] sm:$0xff]
      %v243 = vld [vmem:[%s192 + $0xf8] sm:$0xff]
      %v244 = vld [vmem:[%s192 + $0x100] sm:$0xff]
      %v245 = vld [vmem:[%s192 + $0x108] sm:$0xff]
      %v246 = vld [vmem:[%s192 + $0x110] sm:$0xff]
      %v247 = vld [vmem:[%s192 + $0x118] sm:$0xff]
      %v248 = vld [vmem:[%s192 + $0x120] sm:$0xff]
      %v249 = vld [vmem:[%s192 + $0x128] sm:$0xff]
      %v250 = vld [vmem:[%s192 + $0x130] sm:$0xff]
      %v251 = vld [vmem:[%s192 + $0x138] sm:$0xff]
      %v252 = vld [vmem:[%s192 + $0x140] sm:$0xff]
      %v253 = vld [vmem:[%s192 + $0x148] sm:$0xff]
      %v254 = vld [vmem:[%s192 + $0x150] sm:$0xff]
      %v255 = vld [vmem:[%s192 + $0x158] sm:$0xff]
      %v256 = vld [vmem:[%s192 + $0x160] sm:$0xff]
      %v257 = vld [vmem:[%s192 + $0x168] sm:$0xff]
      %v258 = vld [vmem:[%s192 + $0x170] sm:$0xff]
      %v259 = vld [vmem:[%s192 + $0x178] sm:$0xff]
      %v260 = vld [vmem:[%s192 + $0x180] sm:$0xff]
      %v261 = vld [vmem:[%s192 + $0x188] sm:$0xff]
      %v262 = vld [vmem:[%s192 + $0x190] sm:$0xff]
      %v263 = vld [vmem:[%s192 + $0x198] sm:$0xff]
      %v264 = vld [vmem:[%s192 + $0x1a0] sm:$0xff]
      %v265 = vld [vmem:[%s192 + $0x1a8] sm:$0xff]
      %v266 = vld [vmem:[%s192 + $0x1b0] sm:$0xff]
      %v267 = vld [vmem:[%s192 + $0x1b8] sm:$0xff]
      %v268 = vld [vmem:[%s192 + $0x1c0] sm:$0xff]
      %v269 = vld [vmem:[%s192 + $0x1c8] sm:$0xff]
      %v270 = vld [vmem:[%s192 + $0x1d0] sm:$0xff]
      %v271 = vld [vmem:[%s192 + $0x1d8] sm:$0xff]
      %v272 = vld [vmem:[%s192 + $0x1e0] sm:$0xff]
      %v273 = vld [vmem:[%s192 + $0x1e8] sm:$0xff]
      %v274 = vld [vmem:[%s192 + $0x1f0] sm:$0xff]
      %v275 = vld [vmem:[%s192 + $0x1f8] sm:$0xff]
      %v276 = vld [vmem:[%s192 + $0x200] sm:$0xff]
      %v277 = vld [vmem:[%s192 + $0x208] sm:$0xff]
      %v278 = vld [vmem:[%s192 + $0x210] sm:$0xff]
      %v279 = vld [vmem:[%s192 + $0x218] sm:$0xff]
      %v280 = vld [vmem:[%s192 + $0x220] sm:$0xff]
      %v281 = vld [vmem:[%s192 + $0x228] sm:$0xff]
      %v282 = vld [vmem:[%s192 + $0x230] sm:$0xff]
      %v283 = vld [vmem:[%s192 + $0x238] sm:$0xff]
      %v284 = vld [vmem:[%s192 + $0x240] sm:$0xff]
      %v285 = vld [vmem:[%s192 + $0x248] sm:$0xff]
      %v286 = vld [vmem:[%s192 + $0x250] sm:$0xff]
      %v287 = vld [vmem:[%s192 + $0x258] sm:$0xff]
      %v288 = vld [vmem:[%s192 + $0x260] sm:$0xff]
      %v289 = vld [vmem:[%s192 + $0x268] sm:$0xff]
      %v290 = vld [vmem:[%s192 + $0x270] sm:$0xff]
      %v291 = vld [vmem:[%s192 + $0x278] sm:$0xff]
      %v292 = vld [vmem:[%s192 + $0x280] sm:$0xff]
      %v293 = vld [vmem:[%s192 + $0x288] sm:$0xff]
      %v294 = vld [vmem:[%s192 + $0x290] sm:$0xff]
      %v295 = vld [vmem:[%s192 + $0x298] sm:$0xff]
      %v296 = vld [vmem:[%s192 + $0x2a0] sm:$0xff]
      %v297 = vld [vmem:[%s192 + $0x2a8] sm:$0xff]
      %v298 = vld [vmem:[%s192 + $0x2b0] sm:$0xff]
      %v299 = vld [vmem:[%s192 + $0x2b8] sm:$0xff]
      %v300 = vld [vmem:[%s192 + $0x2c0] sm:$0xff]
      %v301 = vld [vmem:[%s192 + $0x2c8] sm:$0xff]
      %v302 = vld [vmem:[%s192 + $0x2d0] sm:$0xff]
      %v303 = vld [vmem:[%s192 + $0x2d8] sm:$0xff]
      %v304 = vld [vmem:[%s192 + $0x2e0] sm:$0xff]
      %v305 = vld [vmem:[%s192 + $0x2e8] sm:$0xff]
      %v306 = vld [vmem:[%s192 + $0x2f0] sm:$0xff]
      %v307 = vld [vmem:[%s192 + $0x2f8] sm:$0xff]
      %v308 = vld [vmem:[%s192 + $0x300] sm:$0xff]
      %v309 = vld [vmem:[%s192 + $0x308] sm:$0xff]
      %v310 = vld [vmem:[%s192 + $0x310] sm:$0xff]
      %v311 = vld [vmem:[%s192 + $0x318] sm:$0xff]
      %v312 = vld [vmem:[%s192 + $0x320] sm:$0xff]
      %v313 = vld [vmem:[%s192 + $0x328] sm:$0xff]
      %v314 = vld [vmem:[%s192 + $0x330] sm:$0xff]
      %v315 = vld [vmem:[%s192 + $0x338] sm:$0xff]
      %v316 = vld [vmem:[%s192 + $0x340] sm:$0xff]
      %v317 = vld [vmem:[%s192 + $0x348] sm:$0xff]
      %v318 = vld [vmem:[%s192 + $0x350] sm:$0xff]
      %v319 = vld [vmem:[%s192 + $0x358] sm:$0xff]
      %v320 = vld [vmem:[%s192 + $0x360] sm:$0xff]
      %v321 = vld [vmem:[%s192 + $0x368] sm:$0xff]
      %v322 = vld [vmem:[%s192 + $0x370] sm:$0xff]
      %v323 = vld [vmem:[%s192 + $0x378] sm:$0xff]
      %v324 = vld [vmem:[%s192 + $0x380] sm:$0xff]
      %v325 = vld [vmem:[%s192 + $0x388] sm:$0xff]
      %v326 = vld [vmem:[%s192 + $0x390] sm:$0xff]
      %v327 = vld [vmem:[%s192 + $0x398] sm:$0xff]
      %v328 = vld [vmem:[%s192 + $0x3a0] sm:$0xff]
      %v329 = vld [vmem:[%s192 + $0x3a8] sm:$0xff]
      %v330 = vld [vmem:[%s192 + $0x3b0] sm:$0xff]
      %v331 = vld [vmem:[%s192 + $0x3b8] sm:$0xff]
      %v332 = vld [vmem:[%s192 + $0x3c0] sm:$0xff]
      %v333 = vld [vmem:[%s192 + $0x3c8] sm:$0xff]
      %v334 = vld [vmem:[%s192 + $0x3d0] sm:$0xff]
      %v335 = vld [vmem:[%s192 + $0x3d8] sm:$0xff]
      %v336 = vld [vmem:[%s192 + $0x3e0] sm:$0xff]
      %v337 = vld [vmem:[%s192 + $0x3e8] sm:$0xff]
      %v338 = vld [vmem:[%s192 + $0x3f0] sm:$0xff]
      %v339 = vld [vmem:[%s192 + $0x3f8] sm:$0xff]
      %v340 = vld [vmem:[%s192 + $0x400] sm:$0xff]
      %v341 = vld [vmem:[%s192 + $0x408] sm:$0xff]
      %v342 = vld [vmem:[%s192 + $0x410] sm:$0xff]
      %v343 = vld [vmem:[%s192 + $0x418] sm:$0xff]
      %v344 = vld [vmem:[%s192 + $0x420] sm:$0xff]
      %v345 = vld [vmem:[%s192 + $0x428] sm:$0xff]
      %v346 = vld [vmem:[%s192 + $0x430] sm:$0xff]
      %v347 = vld [vmem:[%s192 + $0x438] sm:$0xff]
      %v348 = vld [vmem:[%s192 + $0x440] sm:$0xff]
      %v349 = vld [vmem:[%s192 + $0x448] sm:$0xff]
      %v350 = vld [vmem:[%s192 + $0x450] sm:$0xff]
      %v351 = vld [vmem:[%s192 + $0x458] sm:$0xff]
      %v352 = vld [vmem:[%s192 + $0x460] sm:$0xff]
      %v353 = vld [vmem:[%s192 + $0x468] sm:$0xff]
      %v354 = vld [vmem:[%s192 + $0x470] sm:$0xff]
      %v355 = vld [vmem:[%s192 + $0x478] sm:$0xff]
      %v356 = vld [vmem:[%s192 + $0x480] sm:$0xff]
      %v357 = vld [vmem:[%s192 + $0x488] sm:$0xff]
      %v358 = vld [vmem:[%s192 + $0x490] sm:$0xff]
      %v359 = vld [vmem:[%s192 + $0x498] sm:$0xff]
      %v360 = vld [vmem:[%s192 + $0x4a0] sm:$0xff]
      %v361 = vld [vmem:[%s192 + $0x4a8] sm:$0xff]
      %v362 = vld [vmem:[%s192 + $0x4b0] sm:$0xff]
      %v363 = vld [vmem:[%s192 + $0x4b8] sm:$0xff]
      %v364 = vld [vmem:[%s192 + $0x4c0] sm:$0xff]
      %v365 = vld [vmem:[%s192 + $0x4c8] sm:$0xff]
      %v366 = vld [vmem:[%s192 + $0x4d0] sm:$0xff]
      %v367 = vld [vmem:[%s192 + $0x4d8] sm:$0xff]
      %v368 = vld [vmem:[%s192 + $0x4e0] sm:$0xff]
      %v369 = vld [vmem:[%s192 + $0x4e8] sm:$0xff]
      %v370 = vld [vmem:[%s192 + $0x4f0] sm:$0xff]
      %v371 = vld [vmem:[%s192 + $0x4f8] sm:$0xff]
      %v372 = vld [vmem:[%s192 + $0x500] sm:$0xff]
      %v373 = vld [vmem:[%s192 + $0x508] sm:$0xff]
      %v374 = vld [vmem:[%s192 + $0x510] sm:$0xff]
      %v375 = vld [vmem:[%s192 + $0x518] sm:$0xff]
      %v376 = vld [vmem:[%s192 + $0x520] sm:$0xff]
      %v377 = vld [vmem:[%s192 + $0x528] sm:$0xff]
      %v378 = vld [vmem:[%s192 + $0x530] sm:$0xff]
      %v379 = vld [vmem:[%s192 + $0x538] sm:$0xff]
      %v380 = vld [vmem:[%s192 + $0x540] sm:$0xff]
      %v381 = vld [vmem:[%s192 + $0x548] sm:$0xff]
      %v382 = vld [vmem:[%s192 + $0x550] sm:$0xff]
      %v383 = vld [vmem:[%s192 + $0x558] sm:$0xff]
      %v384 = vld [vmem:[%s192 + $0x560] sm:$0xff]
      %v385 = vld [vmem:[%s192 + $0x568] sm:$0xff]
      %v386 = vld [vmem:[%s192 + $0x570] sm:$0xff]
      %v387 = vld [vmem:[%s192 + $0x578] sm:$0xff]
      %v388 = vld [vmem:[%s192 + $0x580] sm:$0xff]
      %v389 = vld [vmem:[%s192 + $0x588] sm:$0xff]
      %v390 = vld [vmem:[%s192 + $0x590] sm:$0xff]
      %v391 = vld [vmem:[%s192 + $0x598] sm:$0xff]
      %v392 = vld [vmem:[%s201] sm:$0xf]
      %394 = vset.pattern.permute.xlu0 0
      %395 = vperm.xlu0 %394, %v392
      %v396 = vpop.permute.xlu0 %395
      %v404 = vcombine.high %v206, %v206
      %v405 = vcombine.high %v207, %v207
      %v406 = vcombine.high %v208, %v208
      %v407 = vcombine.high %v209, %v209
      %v408 = vcombine.high %v210, %v210
      %v409 = vcombine.high %v211, %v211
      %vm415 = vcmask 261120
      %v416 = vsel %vm415, %v409, 0
      %418 = vmatprep.subr.mxu0 0.0
      %419 = vmatpush1.msra.mxu0 %v227
      %420 = vmatprep.subr.mxu0 0.0
      %421 = vmatpush1.msra.mxu0 %v226
      %422 = vmatprep.subr.mxu0 0.0
      %423 = vmatpush1.msra.mxu0 %v225
      %424 = vmatprep.subr.mxu0 0.0
      %425 = vmatpush1.msra.mxu0 %v224
      %426 = vmatprep.subr.mxu0 0.0
      %427 = vmatpush1.msra.mxu0 %v223
      %428 = vmatprep.subr.mxu0 0.0
      %429 = vmatpush1.msra.mxu0 %v222
      %430 = vmatprep.subr.mxu0 0.0
      %431 = vmatpush1.msra.mxu0 %v221
      %432 = vmatprep.subr.mxu0 0.0
      %433 = vmatpush1.msra.mxu0 %v220
      %434 = vmatprep.subr.mxu0 0.0
      %435 = vmatpush1.msra.mxu0 %v219
      %436 = vmatprep.subr.mxu0 0.0
      %437 = vmatpush1.msra.mxu0 %v218
      %438 = vmatprep.subr.mxu0 0.0
      %439 = vmatpush1.msra.mxu0 %v217
      %440 = vmatprep.subr.mxu0 0.0
      %441 = vmatpush1.msra.mxu0 %v216
      %442 = vmatprep.subr.mxu0 0.0
      %443 = vmatpush1.msra.mxu0 %v215
      %444 = vmatprep.subr.mxu0 0.0
      %445 = vmatpush1.msra.mxu0 %v214
      %446 = vmatprep.subr.mxu0 0.0
      %447 = vmatpush1.msra.mxu0 %v213
      %448 = vmatprep.subr.mxu0 0.0
      %449 = vmatpush1.msra.mxu0 %v212
      %450 = vmatprep.subr.mxu0 0.0
      %451 = vmatpush2.msra.mxu0 %v243
      %452 = vmatprep.subr.mxu0 0.0
      %453 = vmatpush2.msra.mxu0 %v242
      %454 = vmatprep.subr.mxu0 0.0
      %455 = vmatpush2.msra.mxu0 %v241
      %456 = vmatprep.subr.mxu0 0.0
      %457 = vmatpush2.msra.mxu0 %v240
      %458 = vmatprep.subr.mxu0 0.0
      %459 = vmatpush2.msra.mxu0 %v239
      %460 = vmatprep.subr.mxu0 0.0
      %461 = vmatpush2.msra.mxu0 %v238
      %462 = vmatprep.subr.mxu0 0.0
      %463 = vmatpush2.msra.mxu0 %v237
      %464 = vmatprep.subr.mxu0 0.0
      %465 = vmatpush2.msra.mxu0 %v236
      %466 = vmatprep.subr.mxu0 0.0
      %467 = vmatpush2.msra.mxu0 %v235
      %468 = vmatprep.subr.mxu0 0.0
      %469 = vmatpush2.msra.mxu0 %v234
      %470 = vmatprep.subr.mxu0 0.0
      %471 = vmatpush2.msra.mxu0 %v233
      %472 = vmatprep.subr.mxu0 0.0
      %473 = vmatpush2.msra.mxu0 %v232
      %474 = vmatprep.subr.mxu0 0.0
      %475 = vmatpush2.msra.mxu0 %v231
      %476 = vmatprep.subr.mxu0 0.0
      %477 = vmatpush2.msra.mxu0 %v230
      %478 = vmatprep.subr.mxu0 0.0
      %479 = vmatpush2.msra.mxu0 %v229
      %480 = vmatprep.subr.mxu0 0.0
      %481 = vmatpush2.msra.mxu0 %v228
      %482 = vmatprep.mubr.f32.mxu0 %v404
      %483 = vmatmul.mubr.f32.gmra.mxu0 %v206
      %v484 = vpop.f32.mrf.mxu0
      %v485 = vadd.f32 %v396, %v484
      %v486 = vpop.f32.mrf.mxu0
      %487 = vdwg.mxu0
      %488 = vmatprep.subr.mxu0 0.0
      %489 = vmatpush1.msra.mxu0 %v259
      %490 = vmatprep.subr.mxu0 0.0
      %491 = vmatpush1.msra.mxu0 %v258
      %492 = vmatprep.subr.mxu0 0.0
      %493 = vmatpush1.msra.mxu0 %v257
      %494 = vmatprep.subr.mxu0 0.0
      %495 = vmatpush1.msra.mxu0 %v256
      %496 = vmatprep.subr.mxu0 0.0
      %497 = vmatpush1.msra.mxu0 %v255
      %498 = vmatprep.subr.mxu0 0.0
      %499 = vmatpush1.msra.mxu0 %v254
      %500 = vmatprep.subr.mxu0 0.0
      %501 = vmatpush1.msra.mxu0 %v253
      %502 = vmatprep.subr.mxu0 0.0
      %503 = vmatpush1.msra.mxu0 %v252
      %504 = vmatprep.subr.mxu0 0.0
      %505 = vmatpush1.msra.mxu0 %v251
      %506 = vmatprep.subr.mxu0 0.0
      %507 = vmatpush1.msra.mxu0 %v250
      %508 = vmatprep.subr.mxu0 0.0
      %509 = vmatpush1.msra.mxu0 %v249
      %510 = vmatprep.subr.mxu0 0.0
      %511 = vmatpush1.msra.mxu0 %v248
      %512 = vmatprep.subr.mxu0 0.0
      %513 = vmatpush1.msra.mxu0 %v247
      %514 = vmatprep.subr.mxu0 0.0
      %515 = vmatpush1.msra.mxu0 %v246
      %516 = vmatprep.subr.mxu0 0.0
      %517 = vmatpush1.msra.mxu0 %v245
      %518 = vmatprep.subr.mxu0 0.0
      %519 = vmatpush1.msra.mxu0 %v244
      %520 = vmatprep.subr.mxu0 0.0
      %521 = vmatpush2.msra.mxu0 %v275
      %522 = vmatprep.subr.mxu0 0.0
      %523 = vmatpush2.msra.mxu0 %v274
      %524 = vmatprep.subr.mxu0 0.0
      %525 = vmatpush2.msra.mxu0 %v273
      %526 = vmatprep.subr.mxu0 0.0
      %527 = vmatpush2.msra.mxu0 %v272
      %528 = vmatprep.subr.mxu0 0.0
      %529 = vmatpush2.msra.mxu0 %v271
      %530 = vmatprep.subr.mxu0 0.0
      %531 = vmatpush2.msra.mxu0 %v270
      %532 = vmatprep.subr.mxu0 0.0
      %533 = vmatpush2.msra.mxu0 %v269
      %534 = vmatprep.subr.mxu0 0.0
      %535 = vmatpush2.msra.mxu0 %v268
      %536 = vmatprep.subr.mxu0 0.0
      %537 = vmatpush2.msra.mxu0 %v267
      %538 = vmatprep.subr.mxu0 0.0
      %539 = vmatpush2.msra.mxu0 %v266
      %540 = vmatprep.subr.mxu0 0.0
      %541 = vmatpush2.msra.mxu0 %v265
      %542 = vmatprep.subr.mxu0 0.0
      %543 = vmatpush2.msra.mxu0 %v264
      %544 = vmatprep.subr.mxu0 0.0
      %545 = vmatpush2.msra.mxu0 %v263
      %546 = vmatprep.subr.mxu0 0.0
      %547 = vmatpush2.msra.mxu0 %v262
      %548 = vmatprep.subr.mxu0 0.0
      %549 = vmatpush2.msra.mxu0 %v261
      %550 = vmatprep.subr.mxu0 0.0
      %551 = vmatpush2.msra.mxu0 %v260
      %552 = vmatprep.mubr.f32.mxu0 %v405
      %553 = vmatmul.mubr.f32.gmra.mxu0 %v207
      %v554 = vpop.f32.mrf.mxu0
      %v555 = vadd.f32 %v485, %v554
      %v556 = vpop.f32.mrf.mxu0
      %557 = vdwg.mxu0
      %558 = vmatprep.subr.mxu0 0.0
      %559 = vmatpush1.msra.mxu0 %v291
      %560 = vmatprep.subr.mxu0 0.0
      %561 = vmatpush1.msra.mxu0 %v290
      %562 = vmatprep.subr.mxu0 0.0
      %563 = vmatpush1.msra.mxu0 %v289
      %564 = vmatprep.subr.mxu0 0.0
      %565 = vmatpush1.msra.mxu0 %v288
      %566 = vmatprep.subr.mxu0 0.0
      %567 = vmatpush1.msra.mxu0 %v287
      %568 = vmatprep.subr.mxu0 0.0
      %569 = vmatpush1.msra.mxu0 %v286
      %570 = vmatprep.subr.mxu0 0.0
      %571 = vmatpush1.msra.mxu0 %v285
      %572 = vmatprep.subr.mxu0 0.0
      %573 = vmatpush1.msra.mxu0 %v284
      %574 = vmatprep.subr.mxu0 0.0
      %575 = vmatpush1.msra.mxu0 %v283
      %576 = vmatprep.subr.mxu0 0.0
      %577 = vmatpush1.msra.mxu0 %v282
      %578 = vmatprep.subr.mxu0 0.0
      %579 = vmatpush1.msra.mxu0 %v281
      %580 = vmatprep.subr.mxu0 0.0
      %581 = vmatpush1.msra.mxu0 %v280
      %582 = vmatprep.subr.mxu0 0.0
      %583 = vmatpush1.msra.mxu0 %v279
      %584 = vmatprep.subr.mxu0 0.0
      %585 = vmatpush1.msra.mxu0 %v278
      %586 = vmatprep.subr.mxu0 0.0
      %587 = vmatpush1.msra.mxu0 %v277
      %588 = vmatprep.subr.mxu0 0.0
      %589 = vmatpush1.msra.mxu0 %v276
      %590 = vmatprep.subr.mxu0 0.0
      %591 = vmatpush2.msra.mxu0 %v307
      %592 = vmatprep.subr.mxu0 0.0
      %593 = vmatpush2.msra.mxu0 %v306
      %594 = vmatprep.subr.mxu0 0.0
      %595 = vmatpush2.msra.mxu0 %v305
      %596 = vmatprep.subr.mxu0 0.0
      %597 = vmatpush2.msra.mxu0 %v304
      %598 = vmatprep.subr.mxu0 0.0
      %599 = vmatpush2.msra.mxu0 %v303
      %600 = vmatprep.subr.mxu0 0.0
      %601 = vmatpush2.msra.mxu0 %v302
      %602 = vmatprep.subr.mxu0 0.0
      %603 = vmatpush2.msra.mxu0 %v301
      %604 = vmatprep.subr.mxu0 0.0
      %605 = vmatpush2.msra.mxu0 %v300
      %606 = vmatprep.subr.mxu0 0.0
      %607 = vmatpush2.msra.mxu0 %v299
      %608 = vmatprep.subr.mxu0 0.0
      %609 = vmatpush2.msra.mxu0 %v298
      %610 = vmatprep.subr.mxu0 0.0
      %611 = vmatpush2.msra.mxu0 %v297
      %612 = vmatprep.subr.mxu0 0.0
      %613 = vmatpush2.msra.mxu0 %v296
      %614 = vmatprep.subr.mxu0 0.0
      %615 = vmatpush2.msra.mxu0 %v295
      %616 = vmatprep.subr.mxu0 0.0
      %617 = vmatpush2.msra.mxu0 %v294
      %618 = vmatprep.subr.mxu0 0.0
      %619 = vmatpush2.msra.mxu0 %v293
      %620 = vmatprep.subr.mxu0 0.0
      %621 = vmatpush2.msra.mxu0 %v292
      %622 = vmatprep.mubr.f32.mxu0 %v406
      %623 = vmatmul.mubr.f32.gmra.mxu0 %v208
      %v624 = vpop.f32.mrf.mxu0
      %v625 = vadd.f32 %v555, %v624
      %v626 = vpop.f32.mrf.mxu0
      %627 = vdwg.mxu0
      %628 = vmatprep.subr.mxu0 0.0
      %629 = vmatpush1.msra.mxu0 %v323
      %630 = vmatprep.subr.mxu0 0.0
      %631 = vmatpush1.msra.mxu0 %v322
      %632 = vmatprep.subr.mxu0 0.0
      %633 = vmatpush1.msra.mxu0 %v321
      %634 = vmatprep.subr.mxu0 0.0
      %635 = vmatpush1.msra.mxu0 %v320
      %636 = vmatprep.subr.mxu0 0.0
      %637 = vmatpush1.msra.mxu0 %v319
      %638 = vmatprep.subr.mxu0 0.0
      %639 = vmatpush1.msra.mxu0 %v318
      %640 = vmatprep.subr.mxu0 0.0
      %641 = vmatpush1.msra.mxu0 %v317
      %642 = vmatprep.subr.mxu0 0.0
      %643 = vmatpush1.msra.mxu0 %v316
      %644 = vmatprep.subr.mxu0 0.0
      %645 = vmatpush1.msra.mxu0 %v315
      %646 = vmatprep.subr.mxu0 0.0
      %647 = vmatpush1.msra.mxu0 %v314
      %648 = vmatprep.subr.mxu0 0.0
      %649 = vmatpush1.msra.mxu0 %v313
      %650 = vmatprep.subr.mxu0 0.0
      %651 = vmatpush1.msra.mxu0 %v312
      %652 = vmatprep.subr.mxu0 0.0
      %653 = vmatpush1.msra.mxu0 %v311
      %654 = vmatprep.subr.mxu0 0.0
      %655 = vmatpush1.msra.mxu0 %v310
      %656 = vmatprep.subr.mxu0 0.0
      %657 = vmatpush1.msra.mxu0 %v309
      %658 = vmatprep.subr.mxu0 0.0
      %659 = vmatpush1.msra.mxu0 %v308
      %660 = vmatprep.subr.mxu0 0.0
      %661 = vmatpush2.msra.mxu0 %v339
      %662 = vmatprep.subr.mxu0 0.0
      %663 = vmatpush2.msra.mxu0 %v338
      %664 = vmatprep.subr.mxu0 0.0
      %665 = vmatpush2.msra.mxu0 %v337
      %666 = vmatprep.subr.mxu0 0.0
      %667 = vmatpush2.msra.mxu0 %v336
      %668 = vmatprep.subr.mxu0 0.0
      %669 = vmatpush2.msra.mxu0 %v335
      %670 = vmatprep.subr.mxu0 0.0
      %671 = vmatpush2.msra.mxu0 %v334
      %672 = vmatprep.subr.mxu0 0.0
      %673 = vmatpush2.msra.mxu0 %v333
      %674 = vmatprep.subr.mxu0 0.0
      %675 = vmatpush2.msra.mxu0 %v332
      %676 = vmatprep.subr.mxu0 0.0
      %677 = vmatpush2.msra.mxu0 %v331
      %678 = vmatprep.subr.mxu0 0.0
      %679 = vmatpush2.msra.mxu0 %v330
      %680 = vmatprep.subr.mxu0 0.0
      %681 = vmatpush2.msra.mxu0 %v329
      %682 = vmatprep.subr.mxu0 0.0
      %683 = vmatpush2.msra.mxu0 %v328
      %684 = vmatprep.subr.mxu0 0.0
      %685 = vmatpush2.msra.mxu0 %v327
      %686 = vmatprep.subr.mxu0 0.0
      %687 = vmatpush2.msra.mxu0 %v326
      %688 = vmatprep.subr.mxu0 0.0
      %689 = vmatpush2.msra.mxu0 %v325
      %690 = vmatprep.subr.mxu0 0.0
      %691 = vmatpush2.msra.mxu0 %v324
      %692 = vmatprep.mubr.f32.mxu0 %v407
      %693 = vmatmul.mubr.f32.gmra.mxu0 %v209
      %v694 = vpop.f32.mrf.mxu0
      %v695 = vadd.f32 %v625, %v694
      %v696 = vpop.f32.mrf.mxu0
      %697 = vdwg.mxu0
      %698 = vmatprep.subr.mxu0 0.0
      %699 = vmatpush1.msra.mxu0 %v355
      %700 = vmatprep.subr.mxu0 0.0
      %701 = vmatpush1.msra.mxu0 %v354
      %702 = vmatprep.subr.mxu0 0.0
      %703 = vmatpush1.msra.mxu0 %v353
      %704 = vmatprep.subr.mxu0 0.0
      %705 = vmatpush1.msra.mxu0 %v352
      %706 = vmatprep.subr.mxu0 0.0
      %707 = vmatpush1.msra.mxu0 %v351
      %708 = vmatprep.subr.mxu0 0.0
      %709 = vmatpush1.msra.mxu0 %v350
      %710 = vmatprep.subr.mxu0 0.0
      %711 = vmatpush1.msra.mxu0 %v349
      %712 = vmatprep.subr.mxu0 0.0
      %713 = vmatpush1.msra.mxu0 %v348
      %714 = vmatprep.subr.mxu0 0.0
      %715 = vmatpush1.msra.mxu0 %v347
      %716 = vmatprep.subr.mxu0 0.0
      %717 = vmatpush1.msra.mxu0 %v346
      %718 = vmatprep.subr.mxu0 0.0
      %719 = vmatpush1.msra.mxu0 %v345
      %720 = vmatprep.subr.mxu0 0.0
      %721 = vmatpush1.msra.mxu0 %v344
      %722 = vmatprep.subr.mxu0 0.0
      %723 = vmatpush1.msra.mxu0 %v343
      %724 = vmatprep.subr.mxu0 0.0
      %725 = vmatpush1.msra.mxu0 %v342
      %726 = vmatprep.subr.mxu0 0.0
      %727 = vmatpush1.msra.mxu0 %v341
      %728 = vmatprep.subr.mxu0 0.0
      %729 = vmatpush1.msra.mxu0 %v340
      %730 = vmatprep.subr.mxu0 0.0
      %731 = vmatpush2.msra.mxu0 %v371
      %732 = vmatprep.subr.mxu0 0.0
      %733 = vmatpush2.msra.mxu0 %v370
      %734 = vmatprep.subr.mxu0 0.0
      %735 = vmatpush2.msra.mxu0 %v369
      %736 = vmatprep.subr.mxu0 0.0
      %737 = vmatpush2.msra.mxu0 %v368
      %738 = vmatprep.subr.mxu0 0.0
      %739 = vmatpush2.msra.mxu0 %v367
      %740 = vmatprep.subr.mxu0 0.0
      %741 = vmatpush2.msra.mxu0 %v366
      %742 = vmatprep.subr.mxu0 0.0
      %743 = vmatpush2.msra.mxu0 %v365
      %744 = vmatprep.subr.mxu0 0.0
      %745 = vmatpush2.msra.mxu0 %v364
      %746 = vmatprep.subr.mxu0 0.0
      %747 = vmatpush2.msra.mxu0 %v363
      %748 = vmatprep.subr.mxu0 0.0
      %749 = vmatpush2.msra.mxu0 %v362
      %750 = vmatprep.subr.mxu0 0.0
      %751 = vmatpush2.msra.mxu0 %v361
      %752 = vmatprep.subr.mxu0 0.0
      %753 = vmatpush2.msra.mxu0 %v360
      %754 = vmatprep.subr.mxu0 0.0
      %755 = vmatpush2.msra.mxu0 %v359
      %756 = vmatprep.subr.mxu0 0.0
      %757 = vmatpush2.msra.mxu0 %v358
      %758 = vmatprep.subr.mxu0 0.0
      %759 = vmatpush2.msra.mxu0 %v357
      %760 = vmatprep.subr.mxu0 0.0
      %761 = vmatpush2.msra.mxu0 %v356
      %762 = vmatprep.mubr.f32.mxu0 %v408
      %763 = vmatmul.mubr.f32.gmra.mxu0 %v210
      %v764 = vpop.f32.mrf.mxu0
      %v765 = vadd.f32 %v695, %v764
      %v766 = vpop.f32.mrf.mxu0
      %767 = vdwg.mxu0
      %768 = vmatprep.subr.mxu0 0.0
      %769 = vmatpush1.msra.mxu0 %v387
      %770 = vmatprep.subr.mxu0 0.0
      %771 = vmatpush1.msra.mxu0 %v386
      %772 = vmatprep.subr.mxu0 0.0
      %773 = vmatpush1.msra.mxu0 %v385
      %774 = vmatprep.subr.mxu0 0.0
      %775 = vmatpush1.msra.mxu0 %v384
      %776 = vmatprep.subr.mxu0 0.0
      %777 = vmatpush1.msra.mxu0 %v383
      %778 = vmatprep.subr.mxu0 0.0
      %779 = vmatpush1.msra.mxu0 %v382
      %780 = vmatprep.subr.mxu0 0.0
      %781 = vmatpush1.msra.mxu0 %v381
      %782 = vmatprep.subr.mxu0 0.0
      %783 = vmatpush1.msra.mxu0 %v380
      %784 = vmatprep.subr.mxu0 0.0
      %785 = vmatpush1.msra.mxu0 %v379
      %786 = vmatprep.subr.mxu0 0.0
      %787 = vmatpush1.msra.mxu0 %v378
      %788 = vmatprep.subr.mxu0 0.0
      %789 = vmatpush1.msra.mxu0 %v377
      %790 = vmatprep.subr.mxu0 0.0
      %791 = vmatpush1.msra.mxu0 %v376
      %792 = vmatprep.subr.mxu0 0.0
      %793 = vmatpush1.msra.mxu0 %v375
      %794 = vmatprep.subr.mxu0 0.0
      %795 = vmatpush1.msra.mxu0 %v374
      %796 = vmatprep.subr.mxu0 0.0
      %797 = vmatpush1.msra.mxu0 %v373
      %798 = vmatprep.subr.mxu0 0.0
      %799 = vmatpush1.msra.mxu0 %v372
      %800 = vmatprep.subr.mxu0 0.0
      %801 = vmatpush2.msra.mxu0 0.0
      %802 = vmatprep.subr.mxu0 0.0
      %803 = vmatpush2.msra.mxu0 0.0
      %804 = vmatprep.subr.mxu0 0.0
      %805 = vmatpush2.msra.mxu0 0.0
      %806 = vmatprep.subr.mxu0 0.0
      %807 = vmatpush2.msra.mxu0 0.0
      %808 = vmatprep.subr.mxu0 0.0
      %809 = vmatpush2.msra.mxu0 0.0
      %810 = vmatprep.subr.mxu0 0.0
      %811 = vmatpush2.msra.mxu0 0.0
      %812 = vmatprep.subr.mxu0 0.0
      %813 = vmatpush2.msra.mxu0 0.0
      %814 = vmatprep.subr.mxu0 0.0
      %815 = vmatpush2.msra.mxu0 0.0
      %816 = vmatprep.subr.mxu0 0.0
      %817 = vmatpush2.msra.mxu0 0.0
      %818 = vmatprep.subr.mxu0 0.0
      %819 = vmatpush2.msra.mxu0 0.0
      %820 = vmatprep.subr.mxu0 0.0
      %821 = vmatpush2.msra.mxu0 0.0
      %822 = vmatprep.subr.mxu0 0.0
      %823 = vmatpush2.msra.mxu0 0.0
      %824 = vmatprep.subr.mxu0 0.0
      %825 = vmatpush2.msra.mxu0 %v391
      %826 = vmatprep.subr.mxu0 0.0
      %827 = vmatpush2.msra.mxu0 %v390
      %828 = vmatprep.subr.mxu0 0.0
      %829 = vmatpush2.msra.mxu0 %v389
      %830 = vmatprep.subr.mxu0 0.0
      %831 = vmatpush2.msra.mxu0 %v388
      %832 = vmatprep.mubr.f32.mxu0 %v416
      %833 = vmatmul.mubr.f32.gmra.mxu0 %v211
      %v834 = vpop.f32.mrf.mxu0
      %v835 = vadd.f32 %v765, %v834
      %v836 = vpop.f32.mrf.mxu0
      %837 = vdwg.mxu0
      %838 = vst [vmem:[%s205] sm:$0xf] %v835
      %p839 = scmp.lt.s32.totalorder %s14, 4
      %s840 = scalar_select %p839, %s14, 4
      %s841 = smul.addr %s840, 4
      %s842 = scalar_lea.vmem %s3, %s841
      // Predicated region
      $region33: #{neighboring_cross_attention.5} parent=31 // pred_check
        %p843 = pneg %p110
      $region34: #{neighboring_cross_attention.5} parent=31 // pred_check_branch
        %845 = sbr.rel (%p843) target = $region36
      $region35: #{neighboring_cross_attention.5} parent=31 // pred_region
        _
      $region36: #{neighboring_cross_attention.5} parent=31 // pred_fallthru
        _
    $region32: #{neighboring_cross_attention.5} parent=5 // pred_fallthru
      _
    %p846 = scmp.le.s32.totalorder 2, %s9
    // Predicated region
    $region37: #{neighboring_cross_attention.5} parent=5 // pred_check
      %p847 = pneg %p846
    $region38: #{neighboring_cross_attention.5} parent=5 // pred_check_branch
      %849 = sbr.rel (%p847) target = $region40
    $region39: #{neighboring_cross_attention.5} parent=5 // pred_region
      %s850 = ssub.s32 %s9, 2
      // Predicated region
      $region41: #{neighboring_cross_attention.5} parent=39 // pred_check
        %p851 = pneg %p116
      $region42: #{neighboring_cross_attention.5} parent=39 // pred_check_branch
        %853 = sbr.rel (%p851) target = $region44
      $region43: #{neighboring_cross_attention.5} parent=39 // pred_region
        %p854 = scmp.lt.s32.totalorder %s15, 4
        %s855 = scalar_select %p854, %s15, 4
        %s856 = smul.addr %s855, 4
        %s857 = scalar_lea.vmem %s3, %s856
      $region44: #{neighboring_cross_attention.5} parent=39 // pred_fallthru
        _
    $region40: #{neighboring_cross_attention.5} parent=5 // pred_fallthru
      _
  $region6: #{neighboring_cross_attention.5} parent=0 // loop_footer
    %s13 = sadd.s32 1, %s9
  $region7: #{neighboring_cross_attention.5} parent=0 // loop_footer_branch
    %8 = sbr.rel target = $region3
  $region8: #{neighboring_cross_attention.5} parent=0 // loop_exit
    _

</llo_original>
